<compile_context>
chip_gen: v6e
topology: v6e:2x2x1
jax: 0.10.0
libtpu: 0.0.40
codegen_flags: <defaults>
</compile_context>

<pallas_src>
import jax
import jax.numpy as jnp
from jax.experimental import pallas as pl
from jax.experimental.pallas import tpu as pltpu

# ----------------------------- tiny BART config ------------------------------
VOCAB = 100
D_MODEL = 32
N_HEADS = 4
HEAD_DIM = D_MODEL // N_HEADS
FFN_DIM = 64
N_LAYERS = 2
MAX_POS = 64
POS_OFFSET = 2          # BartLearnedPositionalEmbedding offset
PAD_ID = 1
EPS = 1e-5              # nn.LayerNorm default

# stacked (leading axis = layer) params passed to the fused kernel, in order
FUSED_PARAM_ORDER = [
    "wqkv", "bqkv", "wo", "bo", "ln1_g", "ln1_b",
    "w1", "b1", "w2", "b2", "ln2_g", "ln2_b",
]


def _layer_norm(x, gamma, beta):
    mu = jnp.mean(x, axis=-1, keepdims=True)
    var = jnp.mean(jnp.square(x - mu), axis=-1, keepdims=True)
    return (x - mu) * jax.lax.rsqrt(var + EPS) * gamma + beta


# ------------------------------ fused Pallas kernel ---------------------------
def fused_encoder_kernel(h_ref, bias_ref, lng_ref, lnb_ref, *rest):
    """One batch row through: embedding LN + all N_LAYERS post-LN encoder layers."""
    o_ref = rest[-1]
    (wqkv_ref, bqkv_ref, wo_ref, bo_ref, ln1g_ref, ln1b_ref,
     w1_ref, b1_ref, w2_ref, b2_ref, ln2g_ref, ln2b_ref) = rest[:-1]

    bias = bias_ref[0]                                     # (1, S) additive key mask
    h = _layer_norm(h_ref[0], lng_ref[...], lnb_ref[...])  # (S, D) embedding LN

    for layer in range(N_LAYERS):                          # static unroll, weights in VMEM
        wqkv, bqkv = wqkv_ref[layer], bqkv_ref[layer]      # (D, 3D), (1, 3D)
        wo, bo = wo_ref[layer], bo_ref[layer]              # (D, D), (1, D)
        ln1g, ln1b = ln1g_ref[layer], ln1b_ref[layer]
        w1, b1 = w1_ref[layer], b1_ref[layer]              # (D, F), (1, F)
        w2, b2 = w2_ref[layer], b2_ref[layer]              # (F, D), (1, D)
        ln2g, ln2b = ln2g_ref[layer], ln2b_ref[layer]

        # --- self attention (post-LN BART block) ---
        # q scaling (1/sqrt(head_dim)) was folded into wq/bq at prep time.
        qkv = jnp.dot(h, wqkv, preferred_element_type=jnp.float32) + bqkv   # (S, 3D)
        q = qkv[:, :D_MODEL]
        k = qkv[:, D_MODEL:2 * D_MODEL]
        v = qkv[:, 2 * D_MODEL:]

        # Per-head 2D dots, accumulating the output projection directly
        # (no concat materialization). A head-batched 3D einsum would need an
        # in-kernel lane-splitting reshape/transpose; at S=8, D=32 each head's
        # matmuls are sub-vreg so 2D dots are the Mosaic-safe choice.
        attn = jnp.zeros((q.shape[0], D_MODEL), jnp.float32)
        for hi in range(N_HEADS):
            sl = slice(hi * HEAD_DIM, (hi + 1) * HEAD_DIM)
            scores = jnp.dot(q[:, sl], k[:, sl].T,
                             preferred_element_type=jnp.float32) + bias     # (S, S)
            scores = scores - jnp.max(scores, axis=-1, keepdims=True)
            p = jnp.exp(scores)
            p = p * pl.reciprocal(jnp.sum(p, axis=-1, keepdims=True), approx=True)
            ctx = jnp.dot(p, v[:, sl], preferred_element_type=jnp.float32)  # (S, hd)
            attn = attn + jnp.dot(ctx, wo[sl, :],
                                  preferred_element_type=jnp.float32)       # (S, D)
        attn = attn + bo

        h = _layer_norm(h + attn, ln1g, ln1b)

        # --- feed-forward ---
        ff = jnp.dot(h, w1, preferred_element_type=jnp.float32) + b1
        # TODO(synk): HF BART uses exact (erf) GELU; tanh-approx GELU used here for
        # Mosaic-safe lowering (difference is ~1e-3 relative).
        ff = jax.nn.gelu(ff, approximate=True)
        ff = jnp.dot(ff, w2, preferred_element_type=jnp.float32) + b2

        h = _layer_norm(h + ff, ln2g, ln2b)

    o_ref[0] = h


# ------------------------------ pallas wrapper --------------------------------
def run_text_encoder(h, bias, emb_g, emb_b, stacked):
    B, S, D = h.shape
    weights = [stacked[name] for name in FUSED_PARAM_ORDER]
    in_specs = [
        pl.BlockSpec((1, S, D), lambda b: (b, 0, 0)),     # hidden states (per batch row)
        pl.BlockSpec((1, 1, S), lambda b: (b, 0, 0)),     # additive mask bias
        pl.BlockSpec((1, D), lambda b: (0, 0)),           # embedding LN gamma
        pl.BlockSpec((1, D), lambda b: (0, 0)),           # embedding LN beta
    ] + [
        # grid-invariant stacked weights: full-array blocks, constant index_map
        # (Pallas skips the re-DMA when the block index does not change).
        pl.BlockSpec(w.shape, lambda b, n=w.ndim: (0,) * n) for w in weights
    ]
    return pl.pallas_call(
        fused_encoder_kernel,
        out_shape=jax.ShapeDtypeStruct((B, S, D), jnp.float32),
        grid=(B,),
        in_specs=in_specs,
        out_specs=pl.BlockSpec((1, S, D), lambda b: (b, 0, 0)),
        compiler_params=pltpu.CompilerParams(dimension_semantics=("parallel",)),
    )(h, bias, emb_g, emb_b, *weights)


# ------------------------------ params & prep --------------------------------
def init_params(key):
    n_keys = 2 + N_LAYERS * 12
    keys = iter(jax.random.split(key, n_keys))

    def w(shape):
        return 0.02 * jax.random.normal(next(keys), shape, jnp.float32)

    params = {}
    emb = w((VOCAB, D_MODEL))
    params["embed_tokens"] = emb.at[PAD_ID].set(0.0)       # nn.Embedding padding_idx
    params["embed_positions"] = w((MAX_POS + POS_OFFSET, D_MODEL))
    params["ln_emb_g"] = jnp.ones((1, D_MODEL), jnp.float32)
    params["ln_emb_b"] = jnp.zeros((1, D_MODEL), jnp.float32)

    layers = []
    for _ in range(N_LAYERS):
        lp = {
            "wq": w((D_MODEL, D_MODEL)), "bq": w((1, D_MODEL)),
            "wk": w((D_MODEL, D_MODEL)), "bk": w((1, D_MODEL)),
            "wv": w((D_MODEL, D_MODEL)), "bv": w((1, D_MODEL)),
            "wo": w((D_MODEL, D_MODEL)), "bo": w((1, D_MODEL)),
            "ln1_g": jnp.ones((1, D_MODEL), jnp.float32),
            "ln1_b": jnp.zeros((1, D_MODEL), jnp.float32),
            "w1": w((D_MODEL, FFN_DIM)), "b1": w((1, FFN_DIM)),
            "w2": w((FFN_DIM, D_MODEL)), "b2": w((1, D_MODEL)),
            "ln2_g": jnp.ones((1, D_MODEL), jnp.float32),
            "ln2_b": jnp.zeros((1, D_MODEL), jnp.float32),
        }
        layers.append(lp)
    params["layers"] = layers
    return params


def prepare_encoder_params(params):
    """One-time (outside the hot jit) weight prep:
       - stack per-layer weights on a leading layer axis,
       - fuse Q/K/V along the out dim into a single (D, 3D) weight,
       - fold the 1/sqrt(head_dim) attention scale into wq / bq."""
    scale = HEAD_DIM ** -0.5
    layers = params["layers"]
    stacked = {
        "wqkv": jnp.stack([jnp.concatenate(
            [lp["wq"] * scale, lp["wk"], lp["wv"]], axis=-1) for lp in layers]),   # (L, D, 3D)
        "bqkv": jnp.stack([jnp.concatenate(
            [lp["bq"] * scale, lp["bk"], lp["bv"]], axis=-1) for lp in layers]),   # (L, 1, 3D)
    }
    for name in ["wo", "bo", "ln1_g", "ln1_b", "w1", "b1", "w2", "b2", "ln2_g", "ln2_b"]:
        stacked[name] = jnp.stack([lp[name] for lp in layers])
    return {
        "embed_tokens": params["embed_tokens"],
        "embed_positions": params["embed_positions"],
        "ln_emb_g": params["ln_emb_g"],
        "ln_emb_b": params["ln_emb_b"],
        "stacked": stacked,
    }


# ------------------------------ forward ---------------------------------------
@jax.jit
def text_encoder_forward(enc_params, input_ids, attention_mask):
    """Equivalent of textEncoder.forward -> bart.encoder(...).last_hidden_state."""
    B, S = input_ids.shape
    # embedding gathers (glue, plain JAX)
    inputs_embeds = enc_params["embed_tokens"][input_ids]             # (B, S, D)
    positions = jnp.arange(S, dtype=jnp.int32) + POS_OFFSET
    pos_embeds = enc_params["embed_positions"][positions]             # (S, D)
    h = (inputs_embeds + pos_embeds[None]).astype(jnp.float32)

    # additive mask bias: 0 where attended, finfo.min where masked (HF semantics)
    bias = jnp.where(attention_mask[:, None, :] == 0,
                     jnp.finfo(jnp.float32).min, 0.0).astype(jnp.float32)  # (B,1,S)

    return run_text_encoder(h, bias, enc_params["ln_emb_g"], enc_params["ln_emb_b"],
                            enc_params["stacked"])


# ------------------------------ pure-JAX reference ------------------------------
def reference_forward(params, input_ids, attention_mask):
    B, S = input_ids.shape
    h = params["embed_tokens"][input_ids] \
        + params["embed_positions"][jnp.arange(S) + POS_OFFSET][None]
    h = _layer_norm(h, params["ln_emb_g"], params["ln_emb_b"])
    bias = jnp.where(attention_mask[:, None, :] == 0, jnp.finfo(jnp.float32).min, 0.0)
    scale = HEAD_DIM ** -0.5

    def split(x):
        return x.reshape(B, S, N_HEADS, HEAD_DIM).transpose(0, 2, 1, 3)

    for lp in params["layers"]:
        q = (h @ lp["wq"] + lp["bq"]) * scale
        k = h @ lp["wk"] + lp["bk"]
        v = h @ lp["wv"] + lp["bv"]
        scores = jnp.einsum("bhqd,bhkd->bhqk", split(q), split(k)) + bias[:, None]
        probs = jax.nn.softmax(scores, axis=-1)
        ctx = jnp.einsum("bhqk,bhkd->bhqd", probs, split(v))
        ctx = ctx.transpose(0, 2, 1, 3).reshape(B, S, D_MODEL)
        attn = ctx @ lp["wo"] + lp["bo"]
        h = _layer_norm(h + attn, lp["ln1_g"], lp["ln1_b"])
        ff = jax.nn.gelu(h @ lp["w1"] + lp["b1"], approximate=True)
        ff = ff @ lp["w2"] + lp["b2"]
        h = _layer_norm(h + ff, lp["ln2_g"], lp["ln2_b"])
    return h


# ----------------------------------- main -----------------------------------
if __name__ == "__main__":
    B, S = 2, 8
    key = jax.random.PRNGKey(0)
    pkey, ikey = jax.random.split(key)

    params = init_params(pkey)
    enc_params = prepare_encoder_params(params)   # one-time stacking / scale fold

    input_ids = jax.random.randint(ikey, (B, S), 0, VOCAB, dtype=jnp.int32)
    attention_mask = jnp.ones((B, S), jnp.int32).at[1, 5:].set(0)
    input_ids = jnp.where(attention_mask == 0, PAD_ID, input_ids)

    out = text_encoder_forward(enc_params, input_ids, attention_mask)
    out = jax.block_until_ready(out)

    assert out.shape == (B, S, D_MODEL), out.shape
    assert bool(jnp.all(jnp.isfinite(out)))

    ref = reference_forward(params, input_ids, attention_mask)
    assert bool(jnp.allclose(out, ref, atol=1e-2, rtol=1e-2)), \
        float(jnp.max(jnp.abs(out - ref)))

    print("KERNEL_OK")
</pallas_src>

<mosaic_0001>
module attributes {stable_mosaic.version = 11 : i64} {
  func.func @fused_encoder_kernel(%arg0: i32, %arg1: memref<1x8x32xf32, #tpu.memory_space<vmem>>, %arg2: memref<1x1x8xf32, #tpu.memory_space<vmem>>, %arg3: memref<1x32xf32, #tpu.memory_space<vmem>>, %arg4: memref<1x32xf32, #tpu.memory_space<vmem>>, %arg5: memref<2x32x96xf32, #tpu.memory_space<vmem>>, %arg6: memref<2x1x96xf32, #tpu.memory_space<vmem>>, %arg7: memref<2x32x32xf32, #tpu.memory_space<vmem>>, %arg8: memref<2x1x32xf32, #tpu.memory_space<vmem>>, %arg9: memref<2x1x32xf32, #tpu.memory_space<vmem>>, %arg10: memref<2x1x32xf32, #tpu.memory_space<vmem>>, %arg11: memref<2x32x64xf32, #tpu.memory_space<vmem>>, %arg12: memref<2x1x64xf32, #tpu.memory_space<vmem>>, %arg13: memref<2x64x32xf32, #tpu.memory_space<vmem>>, %arg14: memref<2x1x32xf32, #tpu.memory_space<vmem>>, %arg15: memref<2x1x32xf32, #tpu.memory_space<vmem>>, %arg16: memref<2x1x32xf32, #tpu.memory_space<vmem>>, %arg17: memref<1x8x32xf32, #tpu.memory_space<vmem>>) attributes {dimension_semantics = [#tpu.dimension_semantics<parallel>], iteration_bounds = array<i64: 2>, scalar_prefetch = 0 : i64, scratch_operands = 0 : i64, tpu.core_type = #tpu.core_type<tc>, window_params = [{transform_indices = @transform_0, window_bounds = array<i64: 1, 8, 32>}, {transform_indices = @transform_1, window_bounds = array<i64: 1, 1, 8>}, {pipeline_mode = #tpu.pipeline_mode<synchronous>, transform_indices = @transform_2, window_bounds = array<i64: 1, 32>}, {pipeline_mode = #tpu.pipeline_mode<synchronous>, transform_indices = @transform_3, window_bounds = array<i64: 1, 32>}, {pipeline_mode = #tpu.pipeline_mode<synchronous>, transform_indices = @transform_4, window_bounds = array<i64: 2, 32, 96>}, {pipeline_mode = #tpu.pipeline_mode<synchronous>, transform_indices = @transform_5, window_bounds = array<i64: 2, 1, 96>}, {pipeline_mode = #tpu.pipeline_mode<synchronous>, transform_indices = @transform_6, window_bounds = array<i64: 2, 32, 32>}, {pipeline_mode = #tpu.pipeline_mode<synchronous>, transform_indices = @transform_7, window_bounds = array<i64: 2, 1, 32>}, {pipeline_mode = #tpu.pipeline_mode<synchronous>, transform_indices = @transform_8, window_bounds = array<i64: 2, 1, 32>}, {pipeline_mode = #tpu.pipeline_mode<synchronous>, transform_indices = @transform_9, window_bounds = array<i64: 2, 1, 32>}, {pipeline_mode = #tpu.pipeline_mode<synchronous>, transform_indices = @transform_10, window_bounds = array<i64: 2, 32, 64>}, {pipeline_mode = #tpu.pipeline_mode<synchronous>, transform_indices = @transform_11, window_bounds = array<i64: 2, 1, 64>}, {pipeline_mode = #tpu.pipeline_mode<synchronous>, transform_indices = @transform_12, window_bounds = array<i64: 2, 64, 32>}, {pipeline_mode = #tpu.pipeline_mode<synchronous>, transform_indices = @transform_13, window_bounds = array<i64: 2, 1, 32>}, {pipeline_mode = #tpu.pipeline_mode<synchronous>, transform_indices = @transform_14, window_bounds = array<i64: 2, 1, 32>}, {pipeline_mode = #tpu.pipeline_mode<synchronous>, transform_indices = @transform_15, window_bounds = array<i64: 2, 1, 32>}, {transform_indices = @transform_16, window_bounds = array<i64: 1, 8, 32>}]} {
    %c0 = arith.constant 0 : index
    %c0_0 = arith.constant 0 : index
    %c0_1 = arith.constant 0 : index
    %0 = vector.load %arg2[%c0, %c0_0, %c0_1] : memref<1x1x8xf32, #tpu.memory_space<vmem>>, vector<1x1x8xf32>
    %1 = vector.shape_cast %0 : vector<1x1x8xf32> to vector<1x8xf32>
    %c0_2 = arith.constant 0 : index
    %c0_3 = arith.constant 0 : index
    %c0_4 = arith.constant 0 : index
    %2 = vector.load %arg1[%c0_2, %c0_3, %c0_4] : memref<1x8x32xf32, #tpu.memory_space<vmem>>, vector<1x8x32xf32>
    %3 = vector.shape_cast %2 : vector<1x8x32xf32> to vector<8x32xf32>
    %c0_5 = arith.constant 0 : index
    %c0_6 = arith.constant 0 : index
    %4 = vector.load %arg3[%c0_5, %c0_6] : memref<1x32xf32, #tpu.memory_space<vmem>>, vector<1x32xf32>
    %c0_7 = arith.constant 0 : index
    %c0_8 = arith.constant 0 : index
    %5 = vector.load %arg4[%c0_7, %c0_8] : memref<1x32xf32, #tpu.memory_space<vmem>>, vector<1x32xf32>
    %cst = arith.constant dense<0.000000e+00> : vector<8xf32>
    %6 = vector.multi_reduction <add>, %3, %cst [1] : vector<8x32xf32> to vector<8xf32>
    %7 = vector.shape_cast %6 : vector<8xf32> to vector<8x1xf32>
    %cst_9 = arith.constant 3.200000e+01 : f32
    %8 = vector.broadcast %cst_9 : f32 to vector<8x1xf32>
    %9 = arith.divf %7, %8 : vector<8x1xf32>
    %10 = vector.broadcast %9 : vector<8x1xf32> to vector<8x32xf32>
    %11 = arith.subf %3, %10 : vector<8x32xf32>
    %12 = arith.mulf %11, %11 : vector<8x32xf32>
    %cst_10 = arith.constant dense<0.000000e+00> : vector<8xf32>
    %13 = vector.multi_reduction <add>, %12, %cst_10 [1] : vector<8x32xf32> to vector<8xf32>
    %14 = vector.shape_cast %13 : vector<8xf32> to vector<8x1xf32>
    %cst_11 = arith.constant 3.200000e+01 : f32
    %15 = vector.broadcast %cst_11 : f32 to vector<8x1xf32>
    %16 = arith.divf %14, %15 : vector<8x1xf32>
    %17 = vector.broadcast %9 : vector<8x1xf32> to vector<8x32xf32>
    %18 = arith.subf %3, %17 : vector<8x32xf32>
    %cst_12 = arith.constant 9.99999974E-6 : f32
    %19 = vector.broadcast %cst_12 : f32 to vector<8x1xf32>
    %20 = arith.addf %16, %19 : vector<8x1xf32>
    %21 = math.rsqrt %20 : vector<8x1xf32>
    %22 = vector.broadcast %21 : vector<8x1xf32> to vector<8x32xf32>
    %23 = arith.mulf %18, %22 : vector<8x32xf32>
    %24 = vector.broadcast %4 : vector<1x32xf32> to vector<8x32xf32>
    %25 = arith.mulf %23, %24 : vector<8x32xf32>
    %26 = vector.broadcast %5 : vector<1x32xf32> to vector<8x32xf32>
    %27 = arith.addf %25, %26 : vector<8x32xf32>
    %c0_13 = arith.constant 0 : index
    %c0_14 = arith.constant 0 : index
    %c0_15 = arith.constant 0 : index
    %28 = vector.load %arg5[%c0_13, %c0_14, %c0_15] : memref<2x32x96xf32, #tpu.memory_space<vmem>>, vector<1x32x96xf32>
    %29 = vector.shape_cast %28 : vector<1x32x96xf32> to vector<32x96xf32>
    %c0_16 = arith.constant 0 : index
    %c0_17 = arith.constant 0 : index
    %c0_18 = arith.constant 0 : index
    %30 = vector.load %arg6[%c0_16, %c0_17, %c0_18] : memref<2x1x96xf32, #tpu.memory_space<vmem>>, vector<1x1x96xf32>
    %31 = vector.shape_cast %30 : vector<1x1x96xf32> to vector<1x96xf32>
    %c0_19 = arith.constant 0 : index
    %c0_20 = arith.constant 0 : index
    %c0_21 = arith.constant 0 : index
    %32 = vector.load %arg7[%c0_19, %c0_20, %c0_21] : memref<2x32x32xf32, #tpu.memory_space<vmem>>, vector<1x32x32xf32>
    %33 = vector.shape_cast %32 : vector<1x32x32xf32> to vector<32x32xf32>
    %c0_22 = arith.constant 0 : index
    %c0_23 = arith.constant 0 : index
    %c0_24 = arith.constant 0 : index
    %34 = vector.load %arg8[%c0_22, %c0_23, %c0_24] : memref<2x1x32xf32, #tpu.memory_space<vmem>>, vector<1x1x32xf32>
    %35 = vector.shape_cast %34 : vector<1x1x32xf32> to vector<1x32xf32>
    %c0_25 = arith.constant 0 : index
    %c0_26 = arith.constant 0 : index
    %c0_27 = arith.constant 0 : index
    %36 = vector.load %arg9[%c0_25, %c0_26, %c0_27] : memref<2x1x32xf32, #tpu.memory_space<vmem>>, vector<1x1x32xf32>
    %37 = vector.shape_cast %36 : vector<1x1x32xf32> to vector<1x32xf32>
    %c0_28 = arith.constant 0 : index
    %c0_29 = arith.constant 0 : index
    %c0_30 = arith.constant 0 : index
    %38 = vector.load %arg10[%c0_28, %c0_29, %c0_30] : memref<2x1x32xf32, #tpu.memory_space<vmem>>, vector<1x1x32xf32>
    %39 = vector.shape_cast %38 : vector<1x1x32xf32> to vector<1x32xf32>
    %c0_31 = arith.constant 0 : index
    %c0_32 = arith.constant 0 : index
    %c0_33 = arith.constant 0 : index
    %40 = vector.load %arg11[%c0_31, %c0_32, %c0_33] : memref<2x32x64xf32, #tpu.memory_space<vmem>>, vector<1x32x64xf32>
    %41 = vector.shape_cast %40 : vector<1x32x64xf32> to vector<32x64xf32>
    %c0_34 = arith.constant 0 : index
    %c0_35 = arith.constant 0 : index
    %c0_36 = arith.constant 0 : index
    %42 = vector.load %arg12[%c0_34, %c0_35, %c0_36] : memref<2x1x64xf32, #tpu.memory_space<vmem>>, vector<1x1x64xf32>
    %43 = vector.shape_cast %42 : vector<1x1x64xf32> to vector<1x64xf32>
    %c0_37 = arith.constant 0 : index
    %c0_38 = arith.constant 0 : index
    %c0_39 = arith.constant 0 : index
    %44 = vector.load %arg13[%c0_37, %c0_38, %c0_39] : memref<2x64x32xf32, #tpu.memory_space<vmem>>, vector<1x64x32xf32>
    %45 = vector.shape_cast %44 : vector<1x64x32xf32> to vector<64x32xf32>
    %c0_40 = arith.constant 0 : index
    %c0_41 = arith.constant 0 : index
    %c0_42 = arith.constant 0 : index
    %46 = vector.load %arg14[%c0_40, %c0_41, %c0_42] : memref<2x1x32xf32, #tpu.memory_space<vmem>>, vector<1x1x32xf32>
    %47 = vector.shape_cast %46 : vector<1x1x32xf32> to vector<1x32xf32>
    %c0_43 = arith.constant 0 : index
    %c0_44 = arith.constant 0 : index
    %c0_45 = arith.constant 0 : index
    %48 = vector.load %arg15[%c0_43, %c0_44, %c0_45] : memref<2x1x32xf32, #tpu.memory_space<vmem>>, vector<1x1x32xf32>
    %49 = vector.shape_cast %48 : vector<1x1x32xf32> to vector<1x32xf32>
    %c0_46 = arith.constant 0 : index
    %c0_47 = arith.constant 0 : index
    %c0_48 = arith.constant 0 : index
    %50 = vector.load %arg16[%c0_46, %c0_47, %c0_48] : memref<2x1x32xf32, #tpu.memory_space<vmem>>, vector<1x1x32xf32>
    %51 = vector.shape_cast %50 : vector<1x1x32xf32> to vector<1x32xf32>
    %cst_49 = arith.constant dense<0.000000e+00> : vector<8x96xf32>
    %52 = tpu.matmul %27, %29, %cst_49 {dimension_numbers = #tpu.dot_dimension_numbers<[1], [0], [0], [1], [0, 0, 1, 1], [], []>} : vector<8x32xf32>, vector<32x96xf32>, vector<8x96xf32> -> vector<8x96xf32>
    %53 = vector.broadcast %31 : vector<1x96xf32> to vector<8x96xf32>
    %54 = arith.addf %52, %53 : vector<8x96xf32>
    %55 = vector.extract_strided_slice %54 {offsets = [0, 0], sizes = [8, 32], strides = [1, 1]} : vector<8x96xf32> to vector<8x32xf32>
    %56 = vector.extract_strided_slice %54 {offsets = [0, 32], sizes = [8, 32], strides = [1, 1]} : vector<8x96xf32> to vector<8x32xf32>
    %57 = vector.extract_strided_slice %54 {offsets = [0, 64], sizes = [8, 32], strides = [1, 1]} : vector<8x96xf32> to vector<8x32xf32>
    %cst_50 = arith.constant 0.000000e+00 : f32
    %58 = vector.broadcast %cst_50 : f32 to vector<8x32xf32>
    %59 = vector.extract_strided_slice %55 {offsets = [0, 0], sizes = [8, 8], strides = [1, 1]} : vector<8x32xf32> to vector<8x8xf32>
    %60 = vector.extract_strided_slice %56 {offsets = [0, 0], sizes = [8, 8], strides = [1, 1]} : vector<8x32xf32> to vector<8x8xf32>
    %61 = tpu.transpose %60, [1, 0] : vector<8x8xf32> -> vector<8x8xf32>
    %cst_51 = arith.constant dense<0.000000e+00> : vector<8x8xf32>
    %62 = tpu.matmul %59, %61, %cst_51 {dimension_numbers = #tpu.dot_dimension_numbers<[1], [0], [0], [1], [0, 0, 1, 1], [], []>} : vector<8x8xf32>, vector<8x8xf32>, vector<8x8xf32> -> vector<8x8xf32>
    %63 = vector.broadcast %1 : vector<1x8xf32> to vector<8x8xf32>
    %64 = arith.addf %62, %63 : vector<8x8xf32>
    %cst_52 = arith.constant dense<0xFF800000> : vector<8xf32>
    %65 = vector.multi_reduction <maximumf>, %64, %cst_52 [1] : vector<8x8xf32> to vector<8xf32>
    %66 = vector.shape_cast %65 : vector<8xf32> to vector<8x1xf32>
    %67 = vector.broadcast %66 : vector<8x1xf32> to vector<8x8xf32>
    %68 = arith.subf %64, %67 : vector<8x8xf32>
    %69 = math.exp %68 : vector<8x8xf32>
    %cst_53 = arith.constant dense<0.000000e+00> : vector<8xf32>
    %70 = vector.multi_reduction <add>, %69, %cst_53 [1] : vector<8x8xf32> to vector<8xf32>
    %71 = vector.shape_cast %70 : vector<8xf32> to vector<8x1xf32>
    %72 = tpu.reciprocal %71 {approx = true} : vector<8x1xf32> -> vector<8x1xf32>
    %73 = vector.broadcast %72 : vector<8x1xf32> to vector<8x8xf32>
    %74 = arith.mulf %69, %73 : vector<8x8xf32>
    %75 = vector.extract_strided_slice %57 {offsets = [0, 0], sizes = [8, 8], strides = [1, 1]} : vector<8x32xf32> to vector<8x8xf32>
    %cst_54 = arith.constant dense<0.000000e+00> : vector<8x8xf32>
    %76 = tpu.matmul %74, %75, %cst_54 {dimension_numbers = #tpu.dot_dimension_numbers<[1], [0], [0], [1], [0, 0, 1, 1], [], []>} : vector<8x8xf32>, vector<8x8xf32>, vector<8x8xf32> -> vector<8x8xf32>
    %77 = vector.extract_strided_slice %33 {offsets = [0, 0], sizes = [8, 32], strides = [1, 1]} : vector<32x32xf32> to vector<8x32xf32>
    %cst_55 = arith.constant dense<0.000000e+00> : vector<8x32xf32>
    %78 = tpu.matmul %76, %77, %cst_55 {dimension_numbers = #tpu.dot_dimension_numbers<[1], [0], [0], [1], [0, 0, 1, 1], [], []>} : vector<8x8xf32>, vector<8x32xf32>, vector<8x32xf32> -> vector<8x32xf32>
    %79 = arith.addf %58, %78 : vector<8x32xf32>
    %80 = vector.extract_strided_slice %55 {offsets = [0, 8], sizes = [8, 8], strides = [1, 1]} : vector<8x32xf32> to vector<8x8xf32>
    %81 = vector.extract_strided_slice %56 {offsets = [0, 8], sizes = [8, 8], strides = [1, 1]} : vector<8x32xf32> to vector<8x8xf32>
    %82 = tpu.transpose %81, [1, 0] : vector<8x8xf32> -> vector<8x8xf32>
    %cst_56 = arith.constant dense<0.000000e+00> : vector<8x8xf32>
    %83 = tpu.matmul %80, %82, %cst_56 {dimension_numbers = #tpu.dot_dimension_numbers<[1], [0], [0], [1], [0, 0, 1, 1], [], []>} : vector<8x8xf32>, vector<8x8xf32>, vector<8x8xf32> -> vector<8x8xf32>
    %84 = vector.broadcast %1 : vector<1x8xf32> to vector<8x8xf32>
    %85 = arith.addf %83, %84 : vector<8x8xf32>
    %cst_57 = arith.constant dense<0xFF800000> : vector<8xf32>
    %86 = vector.multi_reduction <maximumf>, %85, %cst_57 [1] : vector<8x8xf32> to vector<8xf32>
    %87 = vector.shape_cast %86 : vector<8xf32> to vector<8x1xf32>
    %88 = vector.broadcast %87 : vector<8x1xf32> to vector<8x8xf32>
    %89 = arith.subf %85, %88 : vector<8x8xf32>
    %90 = math.exp %89 : vector<8x8xf32>
    %cst_58 = arith.constant dense<0.000000e+00> : vector<8xf32>
    %91 = vector.multi_reduction <add>, %90, %cst_58 [1] : vector<8x8xf32> to vector<8xf32>
    %92 = vector.shape_cast %91 : vector<8xf32> to vector<8x1xf32>
    %93 = tpu.reciprocal %92 {approx = true} : vector<8x1xf32> -> vector<8x1xf32>
    %94 = vector.broadcast %93 : vector<8x1xf32> to vector<8x8xf32>
    %95 = arith.mulf %90, %94 : vector<8x8xf32>
    %96 = vector.extract_strided_slice %57 {offsets = [0, 8], sizes = [8, 8], strides = [1, 1]} : vector<8x32xf32> to vector<8x8xf32>
    %cst_59 = arith.constant dense<0.000000e+00> : vector<8x8xf32>
    %97 = tpu.matmul %95, %96, %cst_59 {dimension_numbers = #tpu.dot_dimension_numbers<[1], [0], [0], [1], [0, 0, 1, 1], [], []>} : vector<8x8xf32>, vector<8x8xf32>, vector<8x8xf32> -> vector<8x8xf32>
    %98 = vector.extract_strided_slice %33 {offsets = [8, 0], sizes = [8, 32], strides = [1, 1]} : vector<32x32xf32> to vector<8x32xf32>
    %cst_60 = arith.constant dense<0.000000e+00> : vector<8x32xf32>
    %99 = tpu.matmul %97, %98, %cst_60 {dimension_numbers = #tpu.dot_dimension_numbers<[1], [0], [0], [1], [0, 0, 1, 1], [], []>} : vector<8x8xf32>, vector<8x32xf32>, vector<8x32xf32> -> vector<8x32xf32>
    %100 = arith.addf %79, %99 : vector<8x32xf32>
    %101 = vector.extract_strided_slice %55 {offsets = [0, 16], sizes = [8, 8], strides = [1, 1]} : vector<8x32xf32> to vector<8x8xf32>
    %102 = vector.extract_strided_slice %56 {offsets = [0, 16], sizes = [8, 8], strides = [1, 1]} : vector<8x32xf32> to vector<8x8xf32>
    %103 = tpu.transpose %102, [1, 0] : vector<8x8xf32> -> vector<8x8xf32>
    %cst_61 = arith.constant dense<0.000000e+00> : vector<8x8xf32>
    %104 = tpu.matmul %101, %103, %cst_61 {dimension_numbers = #tpu.dot_dimension_numbers<[1], [0], [0], [1], [0, 0, 1, 1], [], []>} : vector<8x8xf32>, vector<8x8xf32>, vector<8x8xf32> -> vector<8x8xf32>
    %105 = vector.broadcast %1 : vector<1x8xf32> to vector<8x8xf32>
    %106 = arith.addf %104, %105 : vector<8x8xf32>
    %cst_62 = arith.constant dense<0xFF800000> : vector<8xf32>
    %107 = vector.multi_reduction <maximumf>, %106, %cst_62 [1] : vector<8x8xf32> to vector<8xf32>
    %108 = vector.shape_cast %107 : vector<8xf32> to vector<8x1xf32>
    %109 = vector.broadcast %108 : vector<8x1xf32> to vector<8x8xf32>
    %110 = arith.subf %106, %109 : vector<8x8xf32>
    %111 = math.exp %110 : vector<8x8xf32>
    %cst_63 = arith.constant dense<0.000000e+00> : vector<8xf32>
    %112 = vector.multi_reduction <add>, %111, %cst_63 [1] : vector<8x8xf32> to vector<8xf32>
    %113 = vector.shape_cast %112 : vector<8xf32> to vector<8x1xf32>
    %114 = tpu.reciprocal %113 {approx = true} : vector<8x1xf32> -> vector<8x1xf32>
    %115 = vector.broadcast %114 : vector<8x1xf32> to vector<8x8xf32>
    %116 = arith.mulf %111, %115 : vector<8x8xf32>
    %117 = vector.extract_strided_slice %57 {offsets = [0, 16], sizes = [8, 8], strides = [1, 1]} : vector<8x32xf32> to vector<8x8xf32>
    %cst_64 = arith.constant dense<0.000000e+00> : vector<8x8xf32>
    %118 = tpu.matmul %116, %117, %cst_64 {dimension_numbers = #tpu.dot_dimension_numbers<[1], [0], [0], [1], [0, 0, 1, 1], [], []>} : vector<8x8xf32>, vector<8x8xf32>, vector<8x8xf32> -> vector<8x8xf32>
    %119 = vector.extract_strided_slice %33 {offsets = [16, 0], sizes = [8, 32], strides = [1, 1]} : vector<32x32xf32> to vector<8x32xf32>
    %cst_65 = arith.constant dense<0.000000e+00> : vector<8x32xf32>
    %120 = tpu.matmul %118, %119, %cst_65 {dimension_numbers = #tpu.dot_dimension_numbers<[1], [0], [0], [1], [0, 0, 1, 1], [], []>} : vector<8x8xf32>, vector<8x32xf32>, vector<8x32xf32> -> vector<8x32xf32>
    %121 = arith.addf %100, %120 : vector<8x32xf32>
    %122 = vector.extract_strided_slice %55 {offsets = [0, 24], sizes = [8, 8], strides = [1, 1]} : vector<8x32xf32> to vector<8x8xf32>
    %123 = vector.extract_strided_slice %56 {offsets = [0, 24], sizes = [8, 8], strides = [1, 1]} : vector<8x32xf32> to vector<8x8xf32>
    %124 = tpu.transpose %123, [1, 0] : vector<8x8xf32> -> vector<8x8xf32>
    %cst_66 = arith.constant dense<0.000000e+00> : vector<8x8xf32>
    %125 = tpu.matmul %122, %124, %cst_66 {dimension_numbers = #tpu.dot_dimension_numbers<[1], [0], [0], [1], [0, 0, 1, 1], [], []>} : vector<8x8xf32>, vector<8x8xf32>, vector<8x8xf32> -> vector<8x8xf32>
    %126 = vector.broadcast %1 : vector<1x8xf32> to vector<8x8xf32>
    %127 = arith.addf %125, %126 : vector<8x8xf32>
    %cst_67 = arith.constant dense<0xFF800000> : vector<8xf32>
    %128 = vector.multi_reduction <maximumf>, %127, %cst_67 [1] : vector<8x8xf32> to vector<8xf32>
    %129 = vector.shape_cast %128 : vector<8xf32> to vector<8x1xf32>
    %130 = vector.broadcast %129 : vector<8x1xf32> to vector<8x8xf32>
    %131 = arith.subf %127, %130 : vector<8x8xf32>
    %132 = math.exp %131 : vector<8x8xf32>
    %cst_68 = arith.constant dense<0.000000e+00> : vector<8xf32>
    %133 = vector.multi_reduction <add>, %132, %cst_68 [1] : vector<8x8xf32> to vector<8xf32>
    %134 = vector.shape_cast %133 : vector<8xf32> to vector<8x1xf32>
    %135 = tpu.reciprocal %134 {approx = true} : vector<8x1xf32> -> vector<8x1xf32>
    %136 = vector.broadcast %135 : vector<8x1xf32> to vector<8x8xf32>
    %137 = arith.mulf %132, %136 : vector<8x8xf32>
    %138 = vector.extract_strided_slice %57 {offsets = [0, 24], sizes = [8, 8], strides = [1, 1]} : vector<8x32xf32> to vector<8x8xf32>
    %cst_69 = arith.constant dense<0.000000e+00> : vector<8x8xf32>
    %139 = tpu.matmul %137, %138, %cst_69 {dimension_numbers = #tpu.dot_dimension_numbers<[1], [0], [0], [1], [0, 0, 1, 1], [], []>} : vector<8x8xf32>, vector<8x8xf32>, vector<8x8xf32> -> vector<8x8xf32>
    %140 = vector.extract_strided_slice %33 {offsets = [24, 0], sizes = [8, 32], strides = [1, 1]} : vector<32x32xf32> to vector<8x32xf32>
    %cst_70 = arith.constant dense<0.000000e+00> : vector<8x32xf32>
    %141 = tpu.matmul %139, %140, %cst_70 {dimension_numbers = #tpu.dot_dimension_numbers<[1], [0], [0], [1], [0, 0, 1, 1], [], []>} : vector<8x8xf32>, vector<8x32xf32>, vector<8x32xf32> -> vector<8x32xf32>
    %142 = arith.addf %121, %141 : vector<8x32xf32>
    %143 = vector.broadcast %35 : vector<1x32xf32> to vector<8x32xf32>
    %144 = arith.addf %142, %143 : vector<8x32xf32>
    %145 = arith.addf %27, %144 : vector<8x32xf32>
    %cst_71 = arith.constant dense<0.000000e+00> : vector<8xf32>
    %146 = vector.multi_reduction <add>, %145, %cst_71 [1] : vector<8x32xf32> to vector<8xf32>
    %147 = vector.shape_cast %146 : vector<8xf32> to vector<8x1xf32>
    %cst_72 = arith.constant 3.200000e+01 : f32
    %148 = vector.broadcast %cst_72 : f32 to vector<8x1xf32>
    %149 = arith.divf %147, %148 : vector<8x1xf32>
    %150 = vector.broadcast %149 : vector<8x1xf32> to vector<8x32xf32>
    %151 = arith.subf %145, %150 : vector<8x32xf32>
    %152 = arith.mulf %151, %151 : vector<8x32xf32>
    %cst_73 = arith.constant dense<0.000000e+00> : vector<8xf32>
    %153 = vector.multi_reduction <add>, %152, %cst_73 [1] : vector<8x32xf32> to vector<8xf32>
    %154 = vector.shape_cast %153 : vector<8xf32> to vector<8x1xf32>
    %cst_74 = arith.constant 3.200000e+01 : f32
    %155 = vector.broadcast %cst_74 : f32 to vector<8x1xf32>
    %156 = arith.divf %154, %155 : vector<8x1xf32>
    %157 = vector.broadcast %149 : vector<8x1xf32> to vector<8x32xf32>
    %158 = arith.subf %145, %157 : vector<8x32xf32>
    %cst_75 = arith.constant 9.99999974E-6 : f32
    %159 = vector.broadcast %cst_75 : f32 to vector<8x1xf32>
    %160 = arith.addf %156, %159 : vector<8x1xf32>
    %161 = math.rsqrt %160 : vector<8x1xf32>
    %162 = vector.broadcast %161 : vector<8x1xf32> to vector<8x32xf32>
    %163 = arith.mulf %158, %162 : vector<8x32xf32>
    %164 = vector.broadcast %37 : vector<1x32xf32> to vector<8x32xf32>
    %165 = arith.mulf %163, %164 : vector<8x32xf32>
    %166 = vector.broadcast %39 : vector<1x32xf32> to vector<8x32xf32>
    %167 = arith.addf %165, %166 : vector<8x32xf32>
    %cst_76 = arith.constant dense<0.000000e+00> : vector<8x64xf32>
    %168 = tpu.matmul %167, %41, %cst_76 {dimension_numbers = #tpu.dot_dimension_numbers<[1], [0], [0], [1], [0, 0, 1, 1], [], []>} : vector<8x32xf32>, vector<32x64xf32>, vector<8x64xf32> -> vector<8x64xf32>
    %169 = vector.broadcast %43 : vector<1x64xf32> to vector<8x64xf32>
    %170 = arith.addf %168, %169 : vector<8x64xf32>
    %171 = arith.mulf %170, %170 : vector<8x64xf32>
    %172 = arith.mulf %170, %171 : vector<8x64xf32>
    %cst_77 = arith.constant 4.471500e-02 : f32
    %173 = vector.broadcast %cst_77 : f32 to vector<8x64xf32>
    %174 = arith.mulf %173, %172 : vector<8x64xf32>
    %175 = arith.addf %170, %174 : vector<8x64xf32>
    %cst_78 = arith.constant 0.797884583 : f32
    %176 = vector.broadcast %cst_78 : f32 to vector<8x64xf32>
    %177 = arith.mulf %176, %175 : vector<8x64xf32>
    %178 = math.tanh %177 : vector<8x64xf32>
    %cst_79 = arith.constant 1.000000e+00 : f32
    %179 = vector.broadcast %cst_79 : f32 to vector<8x64xf32>
    %180 = arith.addf %179, %178 : vector<8x64xf32>
    %cst_80 = arith.constant 5.000000e-01 : f32
    %181 = vector.broadcast %cst_80 : f32 to vector<8x64xf32>
    %182 = arith.mulf %181, %180 : vector<8x64xf32>
    %183 = arith.mulf %170, %182 : vector<8x64xf32>
    %cst_81 = arith.constant dense<0.000000e+00> : vector<8x32xf32>
    %184 = tpu.matmul %183, %45, %cst_81 {dimension_numbers = #tpu.dot_dimension_numbers<[1], [0], [0], [1], [0, 0, 1, 1], [], []>} : vector<8x64xf32>, vector<64x32xf32>, vector<8x32xf32> -> vector<8x32xf32>
    %185 = vector.broadcast %47 : vector<1x32xf32> to vector<8x32xf32>
    %186 = arith.addf %184, %185 : vector<8x32xf32>
    %187 = arith.addf %167, %186 : vector<8x32xf32>
    %cst_82 = arith.constant dense<0.000000e+00> : vector<8xf32>
    %188 = vector.multi_reduction <add>, %187, %cst_82 [1] : vector<8x32xf32> to vector<8xf32>
    %189 = vector.shape_cast %188 : vector<8xf32> to vector<8x1xf32>
    %cst_83 = arith.constant 3.200000e+01 : f32
    %190 = vector.broadcast %cst_83 : f32 to vector<8x1xf32>
    %191 = arith.divf %189, %190 : vector<8x1xf32>
    %192 = vector.broadcast %191 : vector<8x1xf32> to vector<8x32xf32>
    %193 = arith.subf %187, %192 : vector<8x32xf32>
    %194 = arith.mulf %193, %193 : vector<8x32xf32>
    %cst_84 = arith.constant dense<0.000000e+00> : vector<8xf32>
    %195 = vector.multi_reduction <add>, %194, %cst_84 [1] : vector<8x32xf32> to vector<8xf32>
    %196 = vector.shape_cast %195 : vector<8xf32> to vector<8x1xf32>
    %cst_85 = arith.constant 3.200000e+01 : f32
    %197 = vector.broadcast %cst_85 : f32 to vector<8x1xf32>
    %198 = arith.divf %196, %197 : vector<8x1xf32>
    %199 = vector.broadcast %191 : vector<8x1xf32> to vector<8x32xf32>
    %200 = arith.subf %187, %199 : vector<8x32xf32>
    %cst_86 = arith.constant 9.99999974E-6 : f32
    %201 = vector.broadcast %cst_86 : f32 to vector<8x1xf32>
    %202 = arith.addf %198, %201 : vector<8x1xf32>
    %203 = math.rsqrt %202 : vector<8x1xf32>
    %204 = vector.broadcast %203 : vector<8x1xf32> to vector<8x32xf32>
    %205 = arith.mulf %200, %204 : vector<8x32xf32>
    %206 = vector.broadcast %49 : vector<1x32xf32> to vector<8x32xf32>
    %207 = arith.mulf %205, %206 : vector<8x32xf32>
    %208 = vector.broadcast %51 : vector<1x32xf32> to vector<8x32xf32>
    %209 = arith.addf %207, %208 : vector<8x32xf32>
    %c1 = arith.constant 1 : index
    %c0_87 = arith.constant 0 : index
    %c0_88 = arith.constant 0 : index
    %210 = vector.load %arg5[%c1, %c0_87, %c0_88] : memref<2x32x96xf32, #tpu.memory_space<vmem>>, vector<1x32x96xf32>
    %211 = vector.shape_cast %210 : vector<1x32x96xf32> to vector<32x96xf32>
    %c1_89 = arith.constant 1 : index
    %c0_90 = arith.constant 0 : index
    %c0_91 = arith.constant 0 : index
    %212 = vector.load %arg6[%c1_89, %c0_90, %c0_91] : memref<2x1x96xf32, #tpu.memory_space<vmem>>, vector<1x1x96xf32>
    %213 = vector.shape_cast %212 : vector<1x1x96xf32> to vector<1x96xf32>
    %c1_92 = arith.constant 1 : index
    %c0_93 = arith.constant 0 : index
    %c0_94 = arith.constant 0 : index
    %214 = vector.load %arg7[%c1_92, %c0_93, %c0_94] : memref<2x32x32xf32, #tpu.memory_space<vmem>>, vector<1x32x32xf32>
    %215 = vector.shape_cast %214 : vector<1x32x32xf32> to vector<32x32xf32>
    %c1_95 = arith.constant 1 : index
    %c0_96 = arith.constant 0 : index
    %c0_97 = arith.constant 0 : index
    %216 = vector.load %arg8[%c1_95, %c0_96, %c0_97] : memref<2x1x32xf32, #tpu.memory_space<vmem>>, vector<1x1x32xf32>
    %217 = vector.shape_cast %216 : vector<1x1x32xf32> to vector<1x32xf32>
    %c1_98 = arith.constant 1 : index
    %c0_99 = arith.constant 0 : index
    %c0_100 = arith.constant 0 : index
    %218 = vector.load %arg9[%c1_98, %c0_99, %c0_100] : memref<2x1x32xf32, #tpu.memory_space<vmem>>, vector<1x1x32xf32>
    %219 = vector.shape_cast %218 : vector<1x1x32xf32> to vector<1x32xf32>
    %c1_101 = arith.constant 1 : index
    %c0_102 = arith.constant 0 : index
    %c0_103 = arith.constant 0 : index
    %220 = vector.load %arg10[%c1_101, %c0_102, %c0_103] : memref<2x1x32xf32, #tpu.memory_space<vmem>>, vector<1x1x32xf32>
    %221 = vector.shape_cast %220 : vector<1x1x32xf32> to vector<1x32xf32>
    %c1_104 = arith.constant 1 : index
    %c0_105 = arith.constant 0 : index
    %c0_106 = arith.constant 0 : index
    %222 = vector.load %arg11[%c1_104, %c0_105, %c0_106] : memref<2x32x64xf32, #tpu.memory_space<vmem>>, vector<1x32x64xf32>
    %223 = vector.shape_cast %222 : vector<1x32x64xf32> to vector<32x64xf32>
    %c1_107 = arith.constant 1 : index
    %c0_108 = arith.constant 0 : index
    %c0_109 = arith.constant 0 : index
    %224 = vector.load %arg12[%c1_107, %c0_108, %c0_109] : memref<2x1x64xf32, #tpu.memory_space<vmem>>, vector<1x1x64xf32>
    %225 = vector.shape_cast %224 : vector<1x1x64xf32> to vector<1x64xf32>
    %c1_110 = arith.constant 1 : index
    %c0_111 = arith.constant 0 : index
    %c0_112 = arith.constant 0 : index
    %226 = vector.load %arg13[%c1_110, %c0_111, %c0_112] : memref<2x64x32xf32, #tpu.memory_space<vmem>>, vector<1x64x32xf32>
    %227 = vector.shape_cast %226 : vector<1x64x32xf32> to vector<64x32xf32>
    %c1_113 = arith.constant 1 : index
    %c0_114 = arith.constant 0 : index
    %c0_115 = arith.constant 0 : index
    %228 = vector.load %arg14[%c1_113, %c0_114, %c0_115] : memref<2x1x32xf32, #tpu.memory_space<vmem>>, vector<1x1x32xf32>
    %229 = vector.shape_cast %228 : vector<1x1x32xf32> to vector<1x32xf32>
    %c1_116 = arith.constant 1 : index
    %c0_117 = arith.constant 0 : index
    %c0_118 = arith.constant 0 : index
    %230 = vector.load %arg15[%c1_116, %c0_117, %c0_118] : memref<2x1x32xf32, #tpu.memory_space<vmem>>, vector<1x1x32xf32>
    %231 = vector.shape_cast %230 : vector<1x1x32xf32> to vector<1x32xf32>
    %c1_119 = arith.constant 1 : index
    %c0_120 = arith.constant 0 : index
    %c0_121 = arith.constant 0 : index
    %232 = vector.load %arg16[%c1_119, %c0_120, %c0_121] : memref<2x1x32xf32, #tpu.memory_space<vmem>>, vector<1x1x32xf32>
    %233 = vector.shape_cast %232 : vector<1x1x32xf32> to vector<1x32xf32>
    %cst_122 = arith.constant dense<0.000000e+00> : vector<8x96xf32>
    %234 = tpu.matmul %209, %211, %cst_122 {dimension_numbers = #tpu.dot_dimension_numbers<[1], [0], [0], [1], [0, 0, 1, 1], [], []>} : vector<8x32xf32>, vector<32x96xf32>, vector<8x96xf32> -> vector<8x96xf32>
    %235 = vector.broadcast %213 : vector<1x96xf32> to vector<8x96xf32>
    %236 = arith.addf %234, %235 : vector<8x96xf32>
    %237 = vector.extract_strided_slice %236 {offsets = [0, 0], sizes = [8, 32], strides = [1, 1]} : vector<8x96xf32> to vector<8x32xf32>
    %238 = vector.extract_strided_slice %236 {offsets = [0, 32], sizes = [8, 32], strides = [1, 1]} : vector<8x96xf32> to vector<8x32xf32>
    %239 = vector.extract_strided_slice %236 {offsets = [0, 64], sizes = [8, 32], strides = [1, 1]} : vector<8x96xf32> to vector<8x32xf32>
    %cst_123 = arith.constant 0.000000e+00 : f32
    %240 = vector.broadcast %cst_123 : f32 to vector<8x32xf32>
    %241 = vector.extract_strided_slice %237 {offsets = [0, 0], sizes = [8, 8], strides = [1, 1]} : vector<8x32xf32> to vector<8x8xf32>
    %242 = vector.extract_strided_slice %238 {offsets = [0, 0], sizes = [8, 8], strides = [1, 1]} : vector<8x32xf32> to vector<8x8xf32>
    %243 = tpu.transpose %242, [1, 0] : vector<8x8xf32> -> vector<8x8xf32>
    %cst_124 = arith.constant dense<0.000000e+00> : vector<8x8xf32>
    %244 = tpu.matmul %241, %243, %cst_124 {dimension_numbers = #tpu.dot_dimension_numbers<[1], [0], [0], [1], [0, 0, 1, 1], [], []>} : vector<8x8xf32>, vector<8x8xf32>, vector<8x8xf32> -> vector<8x8xf32>
    %245 = vector.broadcast %1 : vector<1x8xf32> to vector<8x8xf32>
    %246 = arith.addf %244, %245 : vector<8x8xf32>
    %cst_125 = arith.constant dense<0xFF800000> : vector<8xf32>
    %247 = vector.multi_reduction <maximumf>, %246, %cst_125 [1] : vector<8x8xf32> to vector<8xf32>
    %248 = vector.shape_cast %247 : vector<8xf32> to vector<8x1xf32>
    %249 = vector.broadcast %248 : vector<8x1xf32> to vector<8x8xf32>
    %250 = arith.subf %246, %249 : vector<8x8xf32>
    %251 = math.exp %250 : vector<8x8xf32>
    %cst_126 = arith.constant dense<0.000000e+00> : vector<8xf32>
    %252 = vector.multi_reduction <add>, %251, %cst_126 [1] : vector<8x8xf32> to vector<8xf32>
    %253 = vector.shape_cast %252 : vector<8xf32> to vector<8x1xf32>
    %254 = tpu.reciprocal %253 {approx = true} : vector<8x1xf32> -> vector<8x1xf32>
    %255 = vector.broadcast %254 : vector<8x1xf32> to vector<8x8xf32>
    %256 = arith.mulf %251, %255 : vector<8x8xf32>
    %257 = vector.extract_strided_slice %239 {offsets = [0, 0], sizes = [8, 8], strides = [1, 1]} : vector<8x32xf32> to vector<8x8xf32>
    %cst_127 = arith.constant dense<0.000000e+00> : vector<8x8xf32>
    %258 = tpu.matmul %256, %257, %cst_127 {dimension_numbers = #tpu.dot_dimension_numbers<[1], [0], [0], [1], [0, 0, 1, 1], [], []>} : vector<8x8xf32>, vector<8x8xf32>, vector<8x8xf32> -> vector<8x8xf32>
    %259 = vector.extract_strided_slice %215 {offsets = [0, 0], sizes = [8, 32], strides = [1, 1]} : vector<32x32xf32> to vector<8x32xf32>
    %cst_128 = arith.constant dense<0.000000e+00> : vector<8x32xf32>
    %260 = tpu.matmul %258, %259, %cst_128 {dimension_numbers = #tpu.dot_dimension_numbers<[1], [0], [0], [1], [0, 0, 1, 1], [], []>} : vector<8x8xf32>, vector<8x32xf32>, vector<8x32xf32> -> vector<8x32xf32>
    %261 = arith.addf %240, %260 : vector<8x32xf32>
    %262 = vector.extract_strided_slice %237 {offsets = [0, 8], sizes = [8, 8], strides = [1, 1]} : vector<8x32xf32> to vector<8x8xf32>
    %263 = vector.extract_strided_slice %238 {offsets = [0, 8], sizes = [8, 8], strides = [1, 1]} : vector<8x32xf32> to vector<8x8xf32>
    %264 = tpu.transpose %263, [1, 0] : vector<8x8xf32> -> vector<8x8xf32>
    %cst_129 = arith.constant dense<0.000000e+00> : vector<8x8xf32>
    %265 = tpu.matmul %262, %264, %cst_129 {dimension_numbers = #tpu.dot_dimension_numbers<[1], [0], [0], [1], [0, 0, 1, 1], [], []>} : vector<8x8xf32>, vector<8x8xf32>, vector<8x8xf32> -> vector<8x8xf32>
    %266 = vector.broadcast %1 : vector<1x8xf32> to vector<8x8xf32>
    %267 = arith.addf %265, %266 : vector<8x8xf32>
    %cst_130 = arith.constant dense<0xFF800000> : vector<8xf32>
    %268 = vector.multi_reduction <maximumf>, %267, %cst_130 [1] : vector<8x8xf32> to vector<8xf32>
    %269 = vector.shape_cast %268 : vector<8xf32> to vector<8x1xf32>
    %270 = vector.broadcast %269 : vector<8x1xf32> to vector<8x8xf32>
    %271 = arith.subf %267, %270 : vector<8x8xf32>
    %272 = math.exp %271 : vector<8x8xf32>
    %cst_131 = arith.constant dense<0.000000e+00> : vector<8xf32>
    %273 = vector.multi_reduction <add>, %272, %cst_131 [1] : vector<8x8xf32> to vector<8xf32>
    %274 = vector.shape_cast %273 : vector<8xf32> to vector<8x1xf32>
    %275 = tpu.reciprocal %274 {approx = true} : vector<8x1xf32> -> vector<8x1xf32>
    %276 = vector.broadcast %275 : vector<8x1xf32> to vector<8x8xf32>
    %277 = arith.mulf %272, %276 : vector<8x8xf32>
    %278 = vector.extract_strided_slice %239 {offsets = [0, 8], sizes = [8, 8], strides = [1, 1]} : vector<8x32xf32> to vector<8x8xf32>
    %cst_132 = arith.constant dense<0.000000e+00> : vector<8x8xf32>
    %279 = tpu.matmul %277, %278, %cst_132 {dimension_numbers = #tpu.dot_dimension_numbers<[1], [0], [0], [1], [0, 0, 1, 1], [], []>} : vector<8x8xf32>, vector<8x8xf32>, vector<8x8xf32> -> vector<8x8xf32>
    %280 = vector.extract_strided_slice %215 {offsets = [8, 0], sizes = [8, 32], strides = [1, 1]} : vector<32x32xf32> to vector<8x32xf32>
    %cst_133 = arith.constant dense<0.000000e+00> : vector<8x32xf32>
    %281 = tpu.matmul %279, %280, %cst_133 {dimension_numbers = #tpu.dot_dimension_numbers<[1], [0], [0], [1], [0, 0, 1, 1], [], []>} : vector<8x8xf32>, vector<8x32xf32>, vector<8x32xf32> -> vector<8x32xf32>
    %282 = arith.addf %261, %281 : vector<8x32xf32>
    %283 = vector.extract_strided_slice %237 {offsets = [0, 16], sizes = [8, 8], strides = [1, 1]} : vector<8x32xf32> to vector<8x8xf32>
    %284 = vector.extract_strided_slice %238 {offsets = [0, 16], sizes = [8, 8], strides = [1, 1]} : vector<8x32xf32> to vector<8x8xf32>
    %285 = tpu.transpose %284, [1, 0] : vector<8x8xf32> -> vector<8x8xf32>
    %cst_134 = arith.constant dense<0.000000e+00> : vector<8x8xf32>
    %286 = tpu.matmul %283, %285, %cst_134 {dimension_numbers = #tpu.dot_dimension_numbers<[1], [0], [0], [1], [0, 0, 1, 1], [], []>} : vector<8x8xf32>, vector<8x8xf32>, vector<8x8xf32> -> vector<8x8xf32>
    %287 = vector.broadcast %1 : vector<1x8xf32> to vector<8x8xf32>
    %288 = arith.addf %286, %287 : vector<8x8xf32>
    %cst_135 = arith.constant dense<0xFF800000> : vector<8xf32>
    %289 = vector.multi_reduction <maximumf>, %288, %cst_135 [1] : vector<8x8xf32> to vector<8xf32>
    %290 = vector.shape_cast %289 : vector<8xf32> to vector<8x1xf32>
    %291 = vector.broadcast %290 : vector<8x1xf32> to vector<8x8xf32>
    %292 = arith.subf %288, %291 : vector<8x8xf32>
    %293 = math.exp %292 : vector<8x8xf32>
    %cst_136 = arith.constant dense<0.000000e+00> : vector<8xf32>
    %294 = vector.multi_reduction <add>, %293, %cst_136 [1] : vector<8x8xf32> to vector<8xf32>
    %295 = vector.shape_cast %294 : vector<8xf32> to vector<8x1xf32>
    %296 = tpu.reciprocal %295 {approx = true} : vector<8x1xf32> -> vector<8x1xf32>
    %297 = vector.broadcast %296 : vector<8x1xf32> to vector<8x8xf32>
    %298 = arith.mulf %293, %297 : vector<8x8xf32>
    %299 = vector.extract_strided_slice %239 {offsets = [0, 16], sizes = [8, 8], strides = [1, 1]} : vector<8x32xf32> to vector<8x8xf32>
    %cst_137 = arith.constant dense<0.000000e+00> : vector<8x8xf32>
    %300 = tpu.matmul %298, %299, %cst_137 {dimension_numbers = #tpu.dot_dimension_numbers<[1], [0], [0], [1], [0, 0, 1, 1], [], []>} : vector<8x8xf32>, vector<8x8xf32>, vector<8x8xf32> -> vector<8x8xf32>
    %301 = vector.extract_strided_slice %215 {offsets = [16, 0], sizes = [8, 32], strides = [1, 1]} : vector<32x32xf32> to vector<8x32xf32>
    %cst_138 = arith.constant dense<0.000000e+00> : vector<8x32xf32>
    %302 = tpu.matmul %300, %301, %cst_138 {dimension_numbers = #tpu.dot_dimension_numbers<[1], [0], [0], [1], [0, 0, 1, 1], [], []>} : vector<8x8xf32>, vector<8x32xf32>, vector<8x32xf32> -> vector<8x32xf32>
    %303 = arith.addf %282, %302 : vector<8x32xf32>
    %304 = vector.extract_strided_slice %237 {offsets = [0, 24], sizes = [8, 8], strides = [1, 1]} : vector<8x32xf32> to vector<8x8xf32>
    %305 = vector.extract_strided_slice %238 {offsets = [0, 24], sizes = [8, 8], strides = [1, 1]} : vector<8x32xf32> to vector<8x8xf32>
    %306 = tpu.transpose %305, [1, 0] : vector<8x8xf32> -> vector<8x8xf32>
    %cst_139 = arith.constant dense<0.000000e+00> : vector<8x8xf32>
    %307 = tpu.matmul %304, %306, %cst_139 {dimension_numbers = #tpu.dot_dimension_numbers<[1], [0], [0], [1], [0, 0, 1, 1], [], []>} : vector<8x8xf32>, vector<8x8xf32>, vector<8x8xf32> -> vector<8x8xf32>
    %308 = vector.broadcast %1 : vector<1x8xf32> to vector<8x8xf32>
    %309 = arith.addf %307, %308 : vector<8x8xf32>
    %cst_140 = arith.constant dense<0xFF800000> : vector<8xf32>
    %310 = vector.multi_reduction <maximumf>, %309, %cst_140 [1] : vector<8x8xf32> to vector<8xf32>
    %311 = vector.shape_cast %310 : vector<8xf32> to vector<8x1xf32>
    %312 = vector.broadcast %311 : vector<8x1xf32> to vector<8x8xf32>
    %313 = arith.subf %309, %312 : vector<8x8xf32>
    %314 = math.exp %313 : vector<8x8xf32>
    %cst_141 = arith.constant dense<0.000000e+00> : vector<8xf32>
    %315 = vector.multi_reduction <add>, %314, %cst_141 [1] : vector<8x8xf32> to vector<8xf32>
    %316 = vector.shape_cast %315 : vector<8xf32> to vector<8x1xf32>
    %317 = tpu.reciprocal %316 {approx = true} : vector<8x1xf32> -> vector<8x1xf32>
    %318 = vector.broadcast %317 : vector<8x1xf32> to vector<8x8xf32>
    %319 = arith.mulf %314, %318 : vector<8x8xf32>
    %320 = vector.extract_strided_slice %239 {offsets = [0, 24], sizes = [8, 8], strides = [1, 1]} : vector<8x32xf32> to vector<8x8xf32>
    %cst_142 = arith.constant dense<0.000000e+00> : vector<8x8xf32>
    %321 = tpu.matmul %319, %320, %cst_142 {dimension_numbers = #tpu.dot_dimension_numbers<[1], [0], [0], [1], [0, 0, 1, 1], [], []>} : vector<8x8xf32>, vector<8x8xf32>, vector<8x8xf32> -> vector<8x8xf32>
    %322 = vector.extract_strided_slice %215 {offsets = [24, 0], sizes = [8, 32], strides = [1, 1]} : vector<32x32xf32> to vector<8x32xf32>
    %cst_143 = arith.constant dense<0.000000e+00> : vector<8x32xf32>
    %323 = tpu.matmul %321, %322, %cst_143 {dimension_numbers = #tpu.dot_dimension_numbers<[1], [0], [0], [1], [0, 0, 1, 1], [], []>} : vector<8x8xf32>, vector<8x32xf32>, vector<8x32xf32> -> vector<8x32xf32>
    %324 = arith.addf %303, %323 : vector<8x32xf32>
    %325 = vector.broadcast %217 : vector<1x32xf32> to vector<8x32xf32>
    %326 = arith.addf %324, %325 : vector<8x32xf32>
    %327 = arith.addf %209, %326 : vector<8x32xf32>
    %cst_144 = arith.constant dense<0.000000e+00> : vector<8xf32>
    %328 = vector.multi_reduction <add>, %327, %cst_144 [1] : vector<8x32xf32> to vector<8xf32>
    %329 = vector.shape_cast %328 : vector<8xf32> to vector<8x1xf32>
    %cst_145 = arith.constant 3.200000e+01 : f32
    %330 = vector.broadcast %cst_145 : f32 to vector<8x1xf32>
    %331 = arith.divf %329, %330 : vector<8x1xf32>
    %332 = vector.broadcast %331 : vector<8x1xf32> to vector<8x32xf32>
    %333 = arith.subf %327, %332 : vector<8x32xf32>
    %334 = arith.mulf %333, %333 : vector<8x32xf32>
    %cst_146 = arith.constant dense<0.000000e+00> : vector<8xf32>
    %335 = vector.multi_reduction <add>, %334, %cst_146 [1] : vector<8x32xf32> to vector<8xf32>
    %336 = vector.shape_cast %335 : vector<8xf32> to vector<8x1xf32>
    %cst_147 = arith.constant 3.200000e+01 : f32
    %337 = vector.broadcast %cst_147 : f32 to vector<8x1xf32>
    %338 = arith.divf %336, %337 : vector<8x1xf32>
    %339 = vector.broadcast %331 : vector<8x1xf32> to vector<8x32xf32>
    %340 = arith.subf %327, %339 : vector<8x32xf32>
    %cst_148 = arith.constant 9.99999974E-6 : f32
    %341 = vector.broadcast %cst_148 : f32 to vector<8x1xf32>
    %342 = arith.addf %338, %341 : vector<8x1xf32>
    %343 = math.rsqrt %342 : vector<8x1xf32>
    %344 = vector.broadcast %343 : vector<8x1xf32> to vector<8x32xf32>
    %345 = arith.mulf %340, %344 : vector<8x32xf32>
    %346 = vector.broadcast %219 : vector<1x32xf32> to vector<8x32xf32>
    %347 = arith.mulf %345, %346 : vector<8x32xf32>
    %348 = vector.broadcast %221 : vector<1x32xf32> to vector<8x32xf32>
    %349 = arith.addf %347, %348 : vector<8x32xf32>
    %cst_149 = arith.constant dense<0.000000e+00> : vector<8x64xf32>
    %350 = tpu.matmul %349, %223, %cst_149 {dimension_numbers = #tpu.dot_dimension_numbers<[1], [0], [0], [1], [0, 0, 1, 1], [], []>} : vector<8x32xf32>, vector<32x64xf32>, vector<8x64xf32> -> vector<8x64xf32>
    %351 = vector.broadcast %225 : vector<1x64xf32> to vector<8x64xf32>
    %352 = arith.addf %350, %351 : vector<8x64xf32>
    %353 = arith.mulf %352, %352 : vector<8x64xf32>
    %354 = arith.mulf %352, %353 : vector<8x64xf32>
    %cst_150 = arith.constant 4.471500e-02 : f32
    %355 = vector.broadcast %cst_150 : f32 to vector<8x64xf32>
    %356 = arith.mulf %355, %354 : vector<8x64xf32>
    %357 = arith.addf %352, %356 : vector<8x64xf32>
    %cst_151 = arith.constant 0.797884583 : f32
    %358 = vector.broadcast %cst_151 : f32 to vector<8x64xf32>
    %359 = arith.mulf %358, %357 : vector<8x64xf32>
    %360 = math.tanh %359 : vector<8x64xf32>
    %cst_152 = arith.constant 1.000000e+00 : f32
    %361 = vector.broadcast %cst_152 : f32 to vector<8x64xf32>
    %362 = arith.addf %361, %360 : vector<8x64xf32>
    %cst_153 = arith.constant 5.000000e-01 : f32
    %363 = vector.broadcast %cst_153 : f32 to vector<8x64xf32>
    %364 = arith.mulf %363, %362 : vector<8x64xf32>
    %365 = arith.mulf %352, %364 : vector<8x64xf32>
    %cst_154 = arith.constant dense<0.000000e+00> : vector<8x32xf32>
    %366 = tpu.matmul %365, %227, %cst_154 {dimension_numbers = #tpu.dot_dimension_numbers<[1], [0], [0], [1], [0, 0, 1, 1], [], []>} : vector<8x64xf32>, vector<64x32xf32>, vector<8x32xf32> -> vector<8x32xf32>
    %367 = vector.broadcast %229 : vector<1x32xf32> to vector<8x32xf32>
    %368 = arith.addf %366, %367 : vector<8x32xf32>
    %369 = arith.addf %349, %368 : vector<8x32xf32>
    %cst_155 = arith.constant dense<0.000000e+00> : vector<8xf32>
    %370 = vector.multi_reduction <add>, %369, %cst_155 [1] : vector<8x32xf32> to vector<8xf32>
    %371 = vector.shape_cast %370 : vector<8xf32> to vector<8x1xf32>
    %cst_156 = arith.constant 3.200000e+01 : f32
    %372 = vector.broadcast %cst_156 : f32 to vector<8x1xf32>
    %373 = arith.divf %371, %372 : vector<8x1xf32>
    %374 = vector.broadcast %373 : vector<8x1xf32> to vector<8x32xf32>
    %375 = arith.subf %369, %374 : vector<8x32xf32>
    %376 = arith.mulf %375, %375 : vector<8x32xf32>
    %cst_157 = arith.constant dense<0.000000e+00> : vector<8xf32>
    %377 = vector.multi_reduction <add>, %376, %cst_157 [1] : vector<8x32xf32> to vector<8xf32>
    %378 = vector.shape_cast %377 : vector<8xf32> to vector<8x1xf32>
    %cst_158 = arith.constant 3.200000e+01 : f32
    %379 = vector.broadcast %cst_158 : f32 to vector<8x1xf32>
    %380 = arith.divf %378, %379 : vector<8x1xf32>
    %381 = vector.broadcast %373 : vector<8x1xf32> to vector<8x32xf32>
    %382 = arith.subf %369, %381 : vector<8x32xf32>
    %cst_159 = arith.constant 9.99999974E-6 : f32
    %383 = vector.broadcast %cst_159 : f32 to vector<8x1xf32>
    %384 = arith.addf %380, %383 : vector<8x1xf32>
    %385 = math.rsqrt %384 : vector<8x1xf32>
    %386 = vector.broadcast %385 : vector<8x1xf32> to vector<8x32xf32>
    %387 = arith.mulf %382, %386 : vector<8x32xf32>
    %388 = vector.broadcast %231 : vector<1x32xf32> to vector<8x32xf32>
    %389 = arith.mulf %387, %388 : vector<8x32xf32>
    %390 = vector.broadcast %233 : vector<1x32xf32> to vector<8x32xf32>
    %391 = arith.addf %389, %390 : vector<8x32xf32>
    %c0_160 = arith.constant 0 : index
    %c0_161 = arith.constant 0 : index
    %c0_162 = arith.constant 0 : index
    %392 = vector.load %arg17[%c0_160, %c0_161, %c0_162] : memref<1x8x32xf32, #tpu.memory_space<vmem>>, vector<1x8x32xf32>
    %393 = vector.shape_cast %392 : vector<1x8x32xf32> to vector<8x32xf32>
    %394 = vector.shape_cast %391 : vector<8x32xf32> to vector<1x8x32xf32>
    tpu.vector_store %arg17[%c0_160, %c0_161, %c0_162], %394 {strides = array<i32>} : memref<1x8x32xf32, #tpu.memory_space<vmem>>, vector<1x8x32xf32>,
    return
  }
  func.func @transform_0(%arg0: i32) -> (i32, i32, i32) {
    %c0_i32 = arith.constant 0 : i32
    %c0_i32_0 = arith.constant 0 : i32
    %c0_i32_1 = arith.constant 0 : i32
    return %arg0, %c0_i32, %c0_i32_0 : i32, i32, i32
  }
  func.func @transform_1(%arg0: i32) -> (i32, i32, i32) {
    %c0_i32 = arith.constant 0 : i32
    %c0_i32_0 = arith.constant 0 : i32
    %c0_i32_1 = arith.constant 0 : i32
    return %arg0, %c0_i32, %c0_i32_0 : i32, i32, i32
  }
  func.func @transform_2(%arg0: i32) -> (i32, i32) {
    %c0_i32 = arith.constant 0 : i32
    %c0_i32_0 = arith.constant 0 : i32
    %c0_i32_1 = arith.constant 0 : i32
    return %c0_i32, %c0_i32_0 : i32, i32
  }
  func.func @transform_3(%arg0: i32) -> (i32, i32) {
    %c0_i32 = arith.constant 0 : i32
    %c0_i32_0 = arith.constant 0 : i32
    %c0_i32_1 = arith.constant 0 : i32
    return %c0_i32, %c0_i32_0 : i32, i32
  }
  func.func @transform_4(%arg0: i32) -> (i32, i32, i32) {
    %c0_i32 = arith.constant 0 : i32
    %c0_i32_0 = arith.constant 0 : i32
    %c0_i32_1 = arith.constant 0 : i32
    %c0_i32_2 = arith.constant 0 : i32
    return %c0_i32, %c0_i32_0, %c0_i32_1 : i32, i32, i32
  }
  func.func @transform_5(%arg0: i32) -> (i32, i32, i32) {
    %c0_i32 = arith.constant 0 : i32
    %c0_i32_0 = arith.constant 0 : i32
    %c0_i32_1 = arith.constant 0 : i32
    %c0_i32_2 = arith.constant 0 : i32
    return %c0_i32, %c0_i32_0, %c0_i32_1 : i32, i32, i32
  }
  func.func @transform_6(%arg0: i32) -> (i32, i32, i32) {
    %c0_i32 = arith.constant 0 : i32
    %c0_i32_0 = arith.constant 0 : i32
    %c0_i32_1 = arith.constant 0 : i32
    %c0_i32_2 = arith.constant 0 : i32
    return %c0_i32, %c0_i32_0, %c0_i32_1 : i32, i32, i32
  }
  func.func @transform_7(%arg0: i32) -> (i32, i32, i32) {
    %c0_i32 = arith.constant 0 : i32
    %c0_i32_0 = arith.constant 0 : i32
    %c0_i32_1 = arith.constant 0 : i32
    %c0_i32_2 = arith.constant 0 : i32
    return %c0_i32, %c0_i32_0, %c0_i32_1 : i32, i32, i32
  }
  func.func @transform_8(%arg0: i32) -> (i32, i32, i32) {
    %c0_i32 = arith.constant 0 : i32
    %c0_i32_0 = arith.constant 0 : i32
    %c0_i32_1 = arith.constant 0 : i32
    %c0_i32_2 = arith.constant 0 : i32
    return %c0_i32, %c0_i32_0, %c0_i32_1 : i32, i32, i32
  }
  func.func @transform_9(%arg0: i32) -> (i32, i32, i32) {
    %c0_i32 = arith.constant 0 : i32
    %c0_i32_0 = arith.constant 0 : i32
    %c0_i32_1 = arith.constant 0 : i32
    %c0_i32_2 = arith.constant 0 : i32
    return %c0_i32, %c0_i32_0, %c0_i32_1 : i32, i32, i32
  }
  func.func @transform_10(%arg0: i32) -> (i32, i32, i32) {
    %c0_i32 = arith.constant 0 : i32
    %c0_i32_0 = arith.constant 0 : i32
    %c0_i32_1 = arith.constant 0 : i32
    %c0_i32_2 = arith.constant 0 : i32
    return %c0_i32, %c0_i32_0, %c0_i32_1 : i32, i32, i32
  }
  func.func @transform_11(%arg0: i32) -> (i32, i32, i32) {
    %c0_i32 = arith.constant 0 : i32
    %c0_i32_0 = arith.constant 0 : i32
    %c0_i32_1 = arith.constant 0 : i32
    %c0_i32_2 = arith.constant 0 : i32
    return %c0_i32, %c0_i32_0, %c0_i32_1 : i32, i32, i32
  }
  func.func @transform_12(%arg0: i32) -> (i32, i32, i32) {
    %c0_i32 = arith.constant 0 : i32
    %c0_i32_0 = arith.constant 0 : i32
    %c0_i32_1 = arith.constant 0 : i32
    %c0_i32_2 = arith.constant 0 : i32
    return %c0_i32, %c0_i32_0, %c0_i32_1 : i32, i32, i32
  }
  func.func @transform_13(%arg0: i32) -> (i32, i32, i32) {
    %c0_i32 = arith.constant 0 : i32
    %c0_i32_0 = arith.constant 0 : i32
    %c0_i32_1 = arith.constant 0 : i32
    %c0_i32_2 = arith.constant 0 : i32
    return %c0_i32, %c0_i32_0, %c0_i32_1 : i32, i32, i32
  }
  func.func @transform_14(%arg0: i32) -> (i32, i32, i32) {
    %c0_i32 = arith.constant 0 : i32
    %c0_i32_0 = arith.constant 0 : i32
    %c0_i32_1 = arith.constant 0 : i32
    %c0_i32_2 = arith.constant 0 : i32
    return %c0_i32, %c0_i32_0, %c0_i32_1 : i32, i32, i32
  }
  func.func @transform_15(%arg0: i32) -> (i32, i32, i32) {
    %c0_i32 = arith.constant 0 : i32
    %c0_i32_0 = arith.constant 0 : i32
    %c0_i32_1 = arith.constant 0 : i32
    %c0_i32_2 = arith.constant 0 : i32
    return %c0_i32, %c0_i32_0, %c0_i32_1 : i32, i32, i32
  }
  func.func @transform_16(%arg0: i32) -> (i32, i32, i32) {
    %c0_i32 = arith.constant 0 : i32
    %c0_i32_0 = arith.constant 0 : i32
    %c0_i32_1 = arith.constant 0 : i32
    return %arg0, %c0_i32, %c0_i32_0 : i32, i32, i32
  }
}

</mosaic_0001>

<llo_original>
// kernel: text_encoder_forward.1
$region0: #{text_encoder_forward.1}
  #allocation0 [shape = 'u32[]', space=smem, size = 0x4, offset = 0x4, fixed_abs, tag = 'smem constant byte address 0x4 - core index']
  #allocation1 [shape = 'u32[144,128]{1,0:T(1,128)}', space=vmem, size = 0x12000, scoped, tag = 'internal scratch']
  %s0 = inlined_call_operand.vmem [shape: f32[2,8,32], index: 0, kind: input, shape index: {}]
  %s1 = inlined_call_operand.vmem [shape: f32[2,1,8], index: 1, kind: input, shape index: {}]
  %s2 = inlined_call_operand.vmem [shape: f32[1,32], index: 2, kind: input, shape index: {}]
  %s3 = inlined_call_operand.vmem [shape: f32[1,32], index: 3, kind: input, shape index: {}]
  %s4 = inlined_call_operand.vmem [shape: f32[2,32,96], index: 4, kind: input, shape index: {}]
  %s5 = inlined_call_operand.vmem [shape: f32[2,1,96], index: 5, kind: input, shape index: {}]
  %s6 = inlined_call_operand.vmem [shape: f32[2,32,32], index: 6, kind: input, shape index: {}]
  %s7 = inlined_call_operand.vmem [shape: f32[2,1,32], index: 7, kind: input, shape index: {}]
  %s8 = inlined_call_operand.vmem [shape: f32[2,1,32], index: 8, kind: input, shape index: {}]
  %s9 = inlined_call_operand.vmem [shape: f32[2,1,32], index: 9, kind: input, shape index: {}]
  %s10 = inlined_call_operand.vmem [shape: f32[2,32,64], index: 10, kind: input, shape index: {}]
  %s11 = inlined_call_operand.vmem [shape: f32[2,1,64], index: 11, kind: input, shape index: {}]
  %s12 = inlined_call_operand.vmem [shape: f32[2,64,32], index: 12, kind: input, shape index: {}]
  %s13 = inlined_call_operand.vmem [shape: f32[2,1,32], index: 13, kind: input, shape index: {}]
  %s14 = inlined_call_operand.vmem [shape: f32[2,1,32], index: 14, kind: input, shape index: {}]
  %s15 = inlined_call_operand.vmem [shape: f32[2,1,32], index: 15, kind: input, shape index: {}]
  %s16 = inlined_call_operand.hbm [shape: f32[2,8,32], index: 16, kind: output, shape index: {}]
  %s17 = sld [smem:[#allocation0]]
  $region97: #{text_encoder_forward.1} parent=0
    _
  %s19 = ssub.s32 1, %s17
  %s20 = scalar_select 0, %s19, %s17
  $region1: #{text_encoder_forward.1} parent=0
    #allocation2 [shape = 'u8[8192]{0}', space=vmem, size = 0x2000, scoped, tag = 'output window, operand 0']
    #allocation3 [shape = 's32[2]{0}', space=sflag, size = 0x8, scoped, tag = 'scoped memory for text_encoder_forward.1']
    %21 = vsyncpa [#allocation3], 0
    %s22 = scalar_lea.sflag [#allocation3], 1
    %23 = vsyncpa %s22, 0
    loop: start=0, step=1, limit=4
    $region2: #{text_encoder_forward.1} parent=1 // loop_pre_header
      _
    $region3: #{text_encoder_forward.1} parent=1 // loop_header
      %s25 = sphi 0, %s29
      %p26 = scmp.ge.s32.totalorder %s25, 4
      %s35 = sphi 0, %s37
      %s38 = sphi 0, %s35
      %s39 = sphi 0, %s38
      %s55 = sphi 0, %s39
      %s61 = sphi 0, %s63
      %s64 = sphi 0, %s61
      %s65 = sphi 0, %s64
      %s81 = sphi 0, %s65
      %s85 = sphi 0, %s85
      %s87 = sphi 0, %s85
      %s88 = sphi 0, %s87
      %s102 = sphi 0, %s88
      %s106 = sphi 0, %s106
      %s108 = sphi 0, %s106
      %s109 = sphi 0, %s108
      %s123 = sphi 0, %s109
      %s127 = sphi 0, %s127
      %s129 = sphi 0, %s127
      %s130 = sphi 0, %s129
      %s144 = sphi 0, %s130
      %s148 = sphi 0, %s148
      %s150 = sphi 0, %s148
      %s151 = sphi 0, %s150
      %s165 = sphi 0, %s151
      %s169 = sphi 0, %s169
      %s171 = sphi 0, %s169
      %s172 = sphi 0, %s171
      %s186 = sphi 0, %s172
      %s190 = sphi 0, %s190
      %s192 = sphi 0, %s190
      %s193 = sphi 0, %s192
      %s207 = sphi 0, %s193
      %s211 = sphi 0, %s211
      %s213 = sphi 0, %s211
      %s214 = sphi 0, %s213
      %s228 = sphi 0, %s214
      %s232 = sphi 0, %s232
      %s234 = sphi 0, %s232
      %s235 = sphi 0, %s234
      %s249 = sphi 0, %s235
      %s253 = sphi 0, %s253
      %s255 = sphi 0, %s253
      %s256 = sphi 0, %s255
      %s270 = sphi 0, %s256
      %s274 = sphi 0, %s274
      %s276 = sphi 0, %s274
      %s277 = sphi 0, %s276
      %s291 = sphi 0, %s277
      %s295 = sphi 0, %s295
      %s297 = sphi 0, %s295
      %s298 = sphi 0, %s297
      %s312 = sphi 0, %s298
      %s316 = sphi 0, %s316
      %s318 = sphi 0, %s316
      %s319 = sphi 0, %s318
      %s333 = sphi 0, %s319
      %s337 = sphi 0, %s337
      %s339 = sphi 0, %s337
      %s340 = sphi 0, %s339
      %s354 = sphi 0, %s340
      %s358 = sphi 0, %s358
      %s360 = sphi 0, %s358
      %s361 = sphi 0, %s360
      %s375 = sphi 0, %s361
      %s381 = sphi 0, %s383
      %s384 = sphi 0, %s381
      %s385 = sphi 0, %s384
      %s401 = sphi 0, %s385
    $region4: #{text_encoder_forward.1} parent=1 // loop_header_branch
      %28 = sbr.rel (%p26) target = $region8
    $region5: #{text_encoder_forward.1} parent=1 // loop_body
      %s30 = ssub.s32 %s25, 1
      %s31 = ssub.s32 %s25, 2
      %s32 = sadd.s32 %s25, 1
      %s33 = ssub.s32 %s25, %s32
      %p34 = scmp.eq.s32.totalorder %s33, 0
      %s36 = sadd.s32 %s35, 1
      %s37 = scalar_select %p34, %s35, %s36
      %p40 = pneg %p34
      %p41 = scmp.eq.s32.totalorder %s25, 1
      %p42 = por %p40, %p41
      %p43 = scmp.ne.s32.totalorder %s35, %s38
      %p44 = scmp.eq.s32.totalorder %s25, 0
      %p45 = por %p43, %p44
      %p46 = scmp.ne.s32.totalorder %s35, %s38
      %p47 = scmp.eq.s32.totalorder %s30, 1
      %p48 = por %p46, %p47
      %p49 = scmp.ne.s32.totalorder %s38, %s39
      %p50 = scmp.eq.s32.totalorder %s30, 0
      %p51 = por %p49, %p50
      %p52 = scmp.ne.s32.totalorder %s38, %s39
      %p53 = scmp.eq.s32.totalorder %s31, 1
      %p54 = por %p52, %p53
      %p56 = scmp.ne.s32.totalorder %s39, %s55
      %p57 = scmp.eq.s32.totalorder %s31, 0
      %p58 = por %p56, %p57
      %s59 = ssub.s32 %s25, %s32
      %p60 = scmp.eq.s32.totalorder %s59, 0
      %s62 = sadd.s32 %s61, 1
      %s63 = scalar_select %p60, %s61, %s62
      %p66 = pneg %p60
      %p67 = scmp.eq.s32.totalorder %s25, 1
      %p68 = por %p66, %p67
      %p69 = scmp.ne.s32.totalorder %s61, %s64
      %p70 = scmp.eq.s32.totalorder %s25, 0
      %p71 = por %p69, %p70
      %p72 = scmp.ne.s32.totalorder %s61, %s64
      %p73 = scmp.eq.s32.totalorder %s30, 1
      %p74 = por %p72, %p73
      %p75 = scmp.ne.s32.totalorder %s64, %s65
      %p76 = scmp.eq.s32.totalorder %s30, 0
      %p77 = por %p75, %p76
      %p78 = scmp.ne.s32.totalorder %s64, %s65
      %p79 = scmp.eq.s32.totalorder %s31, 1
      %p80 = por %p78, %p79
      %p82 = scmp.ne.s32.totalorder %s65, %s81
      %p83 = scmp.eq.s32.totalorder %s31, 0
      %p84 = por %p82, %p83
      %s86 = sadd.s32 %s85, 1
      %p89 = scmp.eq.s32.totalorder %s25, 1
      %p90 = scmp.ne.s32.totalorder %s85, %s87
      %p91 = scmp.eq.s32.totalorder %s25, 0
      %p92 = por %p90, %p91
      %p93 = scmp.ne.s32.totalorder %s85, %s87
      %p94 = scmp.eq.s32.totalorder %s30, 1
      %p95 = por %p93, %p94
      %p96 = scmp.ne.s32.totalorder %s87, %s88
      %p97 = scmp.eq.s32.totalorder %s30, 0
      %p98 = por %p96, %p97
      %p99 = scmp.ne.s32.totalorder %s87, %s88
      %p100 = scmp.eq.s32.totalorder %s31, 1
      %p101 = por %p99, %p100
      %p103 = scmp.ne.s32.totalorder %s88, %s102
      %p104 = scmp.eq.s32.totalorder %s31, 0
      %p105 = por %p103, %p104
      %s107 = sadd.s32 %s106, 1
      %p110 = scmp.eq.s32.totalorder %s25, 1
      %p111 = scmp.ne.s32.totalorder %s106, %s108
      %p112 = scmp.eq.s32.totalorder %s25, 0
      %p113 = por %p111, %p112
      %p114 = scmp.ne.s32.totalorder %s106, %s108
      %p115 = scmp.eq.s32.totalorder %s30, 1
      %p116 = por %p114, %p115
      %p117 = scmp.ne.s32.totalorder %s108, %s109
      %p118 = scmp.eq.s32.totalorder %s30, 0
      %p119 = por %p117, %p118
      %p120 = scmp.ne.s32.totalorder %s108, %s109
      %p121 = scmp.eq.s32.totalorder %s31, 1
      %p122 = por %p120, %p121
      %p124 = scmp.ne.s32.totalorder %s109, %s123
      %p125 = scmp.eq.s32.totalorder %s31, 0
      %p126 = por %p124, %p125
      %s128 = sadd.s32 %s127, 1
      %p131 = scmp.eq.s32.totalorder %s25, 1
      %p132 = scmp.ne.s32.totalorder %s127, %s129
      %p133 = scmp.eq.s32.totalorder %s25, 0
      %p134 = por %p132, %p133
      %p135 = scmp.ne.s32.totalorder %s127, %s129
      %p136 = scmp.eq.s32.totalorder %s30, 1
      %p137 = por %p135, %p136
      %p138 = scmp.ne.s32.totalorder %s129, %s130
      %p139 = scmp.eq.s32.totalorder %s30, 0
      %p140 = por %p138, %p139
      %p141 = scmp.ne.s32.totalorder %s129, %s130
      %p142 = scmp.eq.s32.totalorder %s31, 1
      %p143 = por %p141, %p142
      %p145 = scmp.ne.s32.totalorder %s130, %s144
      %p146 = scmp.eq.s32.totalorder %s31, 0
      %p147 = por %p145, %p146
      %s149 = sadd.s32 %s148, 1
      %p152 = scmp.eq.s32.totalorder %s25, 1
      %p153 = scmp.ne.s32.totalorder %s148, %s150
      %p154 = scmp.eq.s32.totalorder %s25, 0
      %p155 = por %p153, %p154
      %p156 = scmp.ne.s32.totalorder %s148, %s150
      %p157 = scmp.eq.s32.totalorder %s30, 1
      %p158 = por %p156, %p157
      %p159 = scmp.ne.s32.totalorder %s150, %s151
      %p160 = scmp.eq.s32.totalorder %s30, 0
      %p161 = por %p159, %p160
      %p162 = scmp.ne.s32.totalorder %s150, %s151
      %p163 = scmp.eq.s32.totalorder %s31, 1
      %p164 = por %p162, %p163
      %p166 = scmp.ne.s32.totalorder %s151, %s165
      %p167 = scmp.eq.s32.totalorder %s31, 0
      %p168 = por %p166, %p167
      %s170 = sadd.s32 %s169, 1
      %p173 = scmp.eq.s32.totalorder %s25, 1
      %p174 = scmp.ne.s32.totalorder %s169, %s171
      %p175 = scmp.eq.s32.totalorder %s25, 0
      %p176 = por %p174, %p175
      %p177 = scmp.ne.s32.totalorder %s169, %s171
      %p178 = scmp.eq.s32.totalorder %s30, 1
      %p179 = por %p177, %p178
      %p180 = scmp.ne.s32.totalorder %s171, %s172
      %p181 = scmp.eq.s32.totalorder %s30, 0
      %p182 = por %p180, %p181
      %p183 = scmp.ne.s32.totalorder %s171, %s172
      %p184 = scmp.eq.s32.totalorder %s31, 1
      %p185 = por %p183, %p184
      %p187 = scmp.ne.s32.totalorder %s172, %s186
      %p188 = scmp.eq.s32.totalorder %s31, 0
      %p189 = por %p187, %p188
      %s191 = sadd.s32 %s190, 1
      %p194 = scmp.eq.s32.totalorder %s25, 1
      %p195 = scmp.ne.s32.totalorder %s190, %s192
      %p196 = scmp.eq.s32.totalorder %s25, 0
      %p197 = por %p195, %p196
      %p198 = scmp.ne.s32.totalorder %s190, %s192
      %p199 = scmp.eq.s32.totalorder %s30, 1
      %p200 = por %p198, %p199
      %p201 = scmp.ne.s32.totalorder %s192, %s193
      %p202 = scmp.eq.s32.totalorder %s30, 0
      %p203 = por %p201, %p202
      %p204 = scmp.ne.s32.totalorder %s192, %s193
      %p205 = scmp.eq.s32.totalorder %s31, 1
      %p206 = por %p204, %p205
      %p208 = scmp.ne.s32.totalorder %s193, %s207
      %p209 = scmp.eq.s32.totalorder %s31, 0
      %p210 = por %p208, %p209
      %s212 = sadd.s32 %s211, 1
      %p215 = scmp.eq.s32.totalorder %s25, 1
      %p216 = scmp.ne.s32.totalorder %s211, %s213
      %p217 = scmp.eq.s32.totalorder %s25, 0
      %p218 = por %p216, %p217
      %p219 = scmp.ne.s32.totalorder %s211, %s213
      %p220 = scmp.eq.s32.totalorder %s30, 1
      %p221 = por %p219, %p220
      %p222 = scmp.ne.s32.totalorder %s213, %s214
      %p223 = scmp.eq.s32.totalorder %s30, 0
      %p224 = por %p222, %p223
      %p225 = scmp.ne.s32.totalorder %s213, %s214
      %p226 = scmp.eq.s32.totalorder %s31, 1
      %p227 = por %p225, %p226
      %p229 = scmp.ne.s32.totalorder %s214, %s228
      %p230 = scmp.eq.s32.totalorder %s31, 0
      %p231 = por %p229, %p230
      %s233 = sadd.s32 %s232, 1
      %p236 = scmp.eq.s32.totalorder %s25, 1
      %p237 = scmp.ne.s32.totalorder %s232, %s234
      %p238 = scmp.eq.s32.totalorder %s25, 0
      %p239 = por %p237, %p238
      %p240 = scmp.ne.s32.totalorder %s232, %s234
      %p241 = scmp.eq.s32.totalorder %s30, 1
      %p242 = por %p240, %p241
      %p243 = scmp.ne.s32.totalorder %s234, %s235
      %p244 = scmp.eq.s32.totalorder %s30, 0
      %p245 = por %p243, %p244
      %p246 = scmp.ne.s32.totalorder %s234, %s235
      %p247 = scmp.eq.s32.totalorder %s31, 1
      %p248 = por %p246, %p247
      %p250 = scmp.ne.s32.totalorder %s235, %s249
      %p251 = scmp.eq.s32.totalorder %s31, 0
      %p252 = por %p250, %p251
      %s254 = sadd.s32 %s253, 1
      %p257 = scmp.eq.s32.totalorder %s25, 1
      %p258 = scmp.ne.s32.totalorder %s253, %s255
      %p259 = scmp.eq.s32.totalorder %s25, 0
      %p260 = por %p258, %p259
      %p261 = scmp.ne.s32.totalorder %s253, %s255
      %p262 = scmp.eq.s32.totalorder %s30, 1
      %p263 = por %p261, %p262
      %p264 = scmp.ne.s32.totalorder %s255, %s256
      %p265 = scmp.eq.s32.totalorder %s30, 0
      %p266 = por %p264, %p265
      %p267 = scmp.ne.s32.totalorder %s255, %s256
      %p268 = scmp.eq.s32.totalorder %s31, 1
      %p269 = por %p267, %p268
      %p271 = scmp.ne.s32.totalorder %s256, %s270
      %p272 = scmp.eq.s32.totalorder %s31, 0
      %p273 = por %p271, %p272
      %s275 = sadd.s32 %s274, 1
      %p278 = scmp.eq.s32.totalorder %s25, 1
      %p279 = scmp.ne.s32.totalorder %s274, %s276
      %p280 = scmp.eq.s32.totalorder %s25, 0
      %p281 = por %p279, %p280
      %p282 = scmp.ne.s32.totalorder %s274, %s276
      %p283 = scmp.eq.s32.totalorder %s30, 1
      %p284 = por %p282, %p283
      %p285 = scmp.ne.s32.totalorder %s276, %s277
      %p286 = scmp.eq.s32.totalorder %s30, 0
      %p287 = por %p285, %p286
      %p288 = scmp.ne.s32.totalorder %s276, %s277
      %p289 = scmp.eq.s32.totalorder %s31, 1
      %p290 = por %p288, %p289
      %p292 = scmp.ne.s32.totalorder %s277, %s291
      %p293 = scmp.eq.s32.totalorder %s31, 0
      %p294 = por %p292, %p293
      %s296 = sadd.s32 %s295, 1
      %p299 = scmp.eq.s32.totalorder %s25, 1
      %p300 = scmp.ne.s32.totalorder %s295, %s297
      %p301 = scmp.eq.s32.totalorder %s25, 0
      %p302 = por %p300, %p301
      %p303 = scmp.ne.s32.totalorder %s295, %s297
      %p304 = scmp.eq.s32.totalorder %s30, 1
      %p305 = por %p303, %p304
      %p306 = scmp.ne.s32.totalorder %s297, %s298
      %p307 = scmp.eq.s32.totalorder %s30, 0
      %p308 = por %p306, %p307
      %p309 = scmp.ne.s32.totalorder %s297, %s298
      %p310 = scmp.eq.s32.totalorder %s31, 1
      %p311 = por %p309, %p310
      %p313 = scmp.ne.s32.totalorder %s298, %s312
      %p314 = scmp.eq.s32.totalorder %s31, 0
      %p315 = por %p313, %p314
      %s317 = sadd.s32 %s316, 1
      %p320 = scmp.eq.s32.totalorder %s25, 1
      %p321 = scmp.ne.s32.totalorder %s316, %s318
      %p322 = scmp.eq.s32.totalorder %s25, 0
      %p323 = por %p321, %p322
      %p324 = scmp.ne.s32.totalorder %s316, %s318
      %p325 = scmp.eq.s32.totalorder %s30, 1
      %p326 = por %p324, %p325
      %p327 = scmp.ne.s32.totalorder %s318, %s319
      %p328 = scmp.eq.s32.totalorder %s30, 0
      %p329 = por %p327, %p328
      %p330 = scmp.ne.s32.totalorder %s318, %s319
      %p331 = scmp.eq.s32.totalorder %s31, 1
      %p332 = por %p330, %p331
      %p334 = scmp.ne.s32.totalorder %s319, %s333
      %p335 = scmp.eq.s32.totalorder %s31, 0
      %p336 = por %p334, %p335
      %s338 = sadd.s32 %s337, 1
      %p341 = scmp.eq.s32.totalorder %s25, 1
      %p342 = scmp.ne.s32.totalorder %s337, %s339
      %p343 = scmp.eq.s32.totalorder %s25, 0
      %p344 = por %p342, %p343
      %p345 = scmp.ne.s32.totalorder %s337, %s339
      %p346 = scmp.eq.s32.totalorder %s30, 1
      %p347 = por %p345, %p346
      %p348 = scmp.ne.s32.totalorder %s339, %s340
      %p349 = scmp.eq.s32.totalorder %s30, 0
      %p350 = por %p348, %p349
      %p351 = scmp.ne.s32.totalorder %s339, %s340
      %p352 = scmp.eq.s32.totalorder %s31, 1
      %p353 = por %p351, %p352
      %p355 = scmp.ne.s32.totalorder %s340, %s354
      %p356 = scmp.eq.s32.totalorder %s31, 0
      %p357 = por %p355, %p356
      %s359 = sadd.s32 %s358, 1
      %p362 = scmp.eq.s32.totalorder %s25, 1
      %p363 = scmp.ne.s32.totalorder %s358, %s360
      %p364 = scmp.eq.s32.totalorder %s25, 0
      %p365 = por %p363, %p364
      %p366 = scmp.ne.s32.totalorder %s358, %s360
      %p367 = scmp.eq.s32.totalorder %s30, 1
      %p368 = por %p366, %p367
      %p369 = scmp.ne.s32.totalorder %s360, %s361
      %p370 = scmp.eq.s32.totalorder %s30, 0
      %p371 = por %p369, %p370
      %p372 = scmp.ne.s32.totalorder %s360, %s361
      %p373 = scmp.eq.s32.totalorder %s31, 1
      %p374 = por %p372, %p373
      %p376 = scmp.ne.s32.totalorder %s361, %s375
      %p377 = scmp.eq.s32.totalorder %s31, 0
      %p378 = por %p376, %p377
      %s379 = ssub.s32 %s25, %s32
      %p380 = scmp.eq.s32.totalorder %s379, 0
      %s382 = sadd.s32 %s381, 1
      %s383 = scalar_select %p380, %s381, %s382
      %p386 = pneg %p380
      %p387 = scmp.eq.s32.totalorder %s25, 1
      %p388 = por %p386, %p387
      %p389 = scmp.ne.s32.totalorder %s381, %s384
      %p390 = scmp.eq.s32.totalorder %s25, 0
      %p391 = por %p389, %p390
      %p392 = scmp.ne.s32.totalorder %s381, %s384
      %p393 = scmp.eq.s32.totalorder %s30, 1
      %p394 = por %p392, %p393
      %p395 = scmp.ne.s32.totalorder %s384, %s385
      %p396 = scmp.eq.s32.totalorder %s30, 0
      %p397 = por %p395, %p396
      %p398 = scmp.ne.s32.totalorder %s384, %s385
      %p399 = scmp.eq.s32.totalorder %s31, 1
      %p400 = por %p398, %p399
      %p402 = scmp.ne.s32.totalorder %s385, %s401
      %p403 = scmp.eq.s32.totalorder %s31, 0
      %p404 = por %p402, %p403
      %p405 = scmp.le.s32.totalorder 1, %s25
      %p406 = scmp.lt.s32.totalorder %s25, 3
      %p407 = pnand %p405, %p406
      %p408 = pneg %p407
      // Predicated region
      $region9: #{text_encoder_forward.1} parent=5 // pred_check
        _
      $region10: #{text_encoder_forward.1} parent=5 // pred_check_branch
        %410 = sbr.rel (%p407) target = $region12
      $region11: #{text_encoder_forward.1} parent=5 // pred_region
        %s411 = ssub.s32 %s25, 1
        // Predicated region
        $region13: #{text_encoder_forward.1} parent=11 // pred_check
          %p412 = pneg %p98
        $region14: #{text_encoder_forward.1} parent=11 // pred_check_branch
          %414 = sbr.rel (%p412) target = $region16
        $region15: #{text_encoder_forward.1} parent=11 // pred_region
          _
        $region16: #{text_encoder_forward.1} parent=11 // pred_fallthru
          _
        // Predicated region
        $region17: #{text_encoder_forward.1} parent=11 // pred_check
          %p415 = pneg %p119
        $region18: #{text_encoder_forward.1} parent=11 // pred_check_branch
          %417 = sbr.rel (%p415) target = $region20
        $region19: #{text_encoder_forward.1} parent=11 // pred_region
          _
        $region20: #{text_encoder_forward.1} parent=11 // pred_fallthru
          _
        // Predicated region
        $region21: #{text_encoder_forward.1} parent=11 // pred_check
          %p418 = pneg %p140
        $region22: #{text_encoder_forward.1} parent=11 // pred_check_branch
          %420 = sbr.rel (%p418) target = $region24
        $region23: #{text_encoder_forward.1} parent=11 // pred_region
          _
        $region24: #{text_encoder_forward.1} parent=11 // pred_fallthru
          _
        // Predicated region
        $region25: #{text_encoder_forward.1} parent=11 // pred_check
          %p421 = pneg %p161
        $region26: #{text_encoder_forward.1} parent=11 // pred_check_branch
          %423 = sbr.rel (%p421) target = $region28
        $region27: #{text_encoder_forward.1} parent=11 // pred_region
          _
        $region28: #{text_encoder_forward.1} parent=11 // pred_fallthru
          _
        // Predicated region
        $region29: #{text_encoder_forward.1} parent=11 // pred_check
          %p424 = pneg %p182
        $region30: #{text_encoder_forward.1} parent=11 // pred_check_branch
          %426 = sbr.rel (%p424) target = $region32
        $region31: #{text_encoder_forward.1} parent=11 // pred_region
          _
        $region32: #{text_encoder_forward.1} parent=11 // pred_fallthru
          _
        // Predicated region
        $region33: #{text_encoder_forward.1} parent=11 // pred_check
          %p427 = pneg %p203
        $region34: #{text_encoder_forward.1} parent=11 // pred_check_branch
          %429 = sbr.rel (%p427) target = $region36
        $region35: #{text_encoder_forward.1} parent=11 // pred_region
          _
        $region36: #{text_encoder_forward.1} parent=11 // pred_fallthru
          _
        // Predicated region
        $region37: #{text_encoder_forward.1} parent=11 // pred_check
          %p430 = pneg %p224
        $region38: #{text_encoder_forward.1} parent=11 // pred_check_branch
          %432 = sbr.rel (%p430) target = $region40
        $region39: #{text_encoder_forward.1} parent=11 // pred_region
          _
        $region40: #{text_encoder_forward.1} parent=11 // pred_fallthru
          _
        // Predicated region
        $region41: #{text_encoder_forward.1} parent=11 // pred_check
          %p433 = pneg %p245
        $region42: #{text_encoder_forward.1} parent=11 // pred_check_branch
          %435 = sbr.rel (%p433) target = $region44
        $region43: #{text_encoder_forward.1} parent=11 // pred_region
          _
        $region44: #{text_encoder_forward.1} parent=11 // pred_fallthru
          _
        // Predicated region
        $region45: #{text_encoder_forward.1} parent=11 // pred_check
          %p436 = pneg %p266
        $region46: #{text_encoder_forward.1} parent=11 // pred_check_branch
          %438 = sbr.rel (%p436) target = $region48
        $region47: #{text_encoder_forward.1} parent=11 // pred_region
          _
        $region48: #{text_encoder_forward.1} parent=11 // pred_fallthru
          _
        // Predicated region
        $region49: #{text_encoder_forward.1} parent=11 // pred_check
          %p439 = pneg %p287
        $region50: #{text_encoder_forward.1} parent=11 // pred_check_branch
          %441 = sbr.rel (%p439) target = $region52
        $region51: #{text_encoder_forward.1} parent=11 // pred_region
          _
        $region52: #{text_encoder_forward.1} parent=11 // pred_fallthru
          _
        // Predicated region
        $region53: #{text_encoder_forward.1} parent=11 // pred_check
          %p442 = pneg %p308
        $region54: #{text_encoder_forward.1} parent=11 // pred_check_branch
          %444 = sbr.rel (%p442) target = $region56
        $region55: #{text_encoder_forward.1} parent=11 // pred_region
          _
        $region56: #{text_encoder_forward.1} parent=11 // pred_fallthru
          _
        // Predicated region
        $region57: #{text_encoder_forward.1} parent=11 // pred_check
          %p445 = pneg %p329
        $region58: #{text_encoder_forward.1} parent=11 // pred_check_branch
          %447 = sbr.rel (%p445) target = $region60
        $region59: #{text_encoder_forward.1} parent=11 // pred_region
          _
        $region60: #{text_encoder_forward.1} parent=11 // pred_fallthru
          _
        // Predicated region
        $region61: #{text_encoder_forward.1} parent=11 // pred_check
          %p448 = pneg %p350
        $region62: #{text_encoder_forward.1} parent=11 // pred_check_branch
          %450 = sbr.rel (%p448) target = $region64
        $region63: #{text_encoder_forward.1} parent=11 // pred_region
          _
        $region64: #{text_encoder_forward.1} parent=11 // pred_fallthru
          _
        // Predicated region
        $region65: #{text_encoder_forward.1} parent=11 // pred_check
          %p451 = pneg %p371
        $region66: #{text_encoder_forward.1} parent=11 // pred_check_branch
          %453 = sbr.rel (%p451) target = $region68
        $region67: #{text_encoder_forward.1} parent=11 // pred_region
          _
        $region68: #{text_encoder_forward.1} parent=11 // pred_fallthru
          _
      $region12: #{text_encoder_forward.1} parent=5 // pred_fallthru
        _
      %p454 = scmp.lt.s32.totalorder %s25, 2
      // Predicated region
      $region69: #{text_encoder_forward.1} parent=5 // pred_check
        %p455 = pneg %p454
      $region70: #{text_encoder_forward.1} parent=5 // pred_check_branch
        %457 = sbr.rel (%p455) target = $region72
      $region71: #{text_encoder_forward.1} parent=5 // pred_region
        // Predicated region
        $region73: #{text_encoder_forward.1} parent=71 // pred_check
          %p458 = pneg %p45
        $region74: #{text_encoder_forward.1} parent=71 // pred_check_branch
          %460 = sbr.rel (%p458) target = $region76
        $region75: #{text_encoder_forward.1} parent=71 // pred_region
          %p461 = scmp.lt.s32.totalorder %s25, 1
          %s462 = scalar_select %p461, %s25, 1
          %s463 = smul.addr %s462, 8
          %s464 = scalar_lea.vmem %s0, %s463
        $region76: #{text_encoder_forward.1} parent=71 // pred_fallthru
          _
        // Predicated region
        $region77: #{text_encoder_forward.1} parent=71 // pred_check
          %p465 = pneg %p71
        $region78: #{text_encoder_forward.1} parent=71 // pred_check_branch
          %467 = sbr.rel (%p465) target = $region80
        $region79: #{text_encoder_forward.1} parent=71 // pred_region
          %p468 = scmp.lt.s32.totalorder %s25, 1
          %s469 = scalar_select %p468, %s25, 1
          %s470 = scalar_lea.vmem %s1, %s469
        $region80: #{text_encoder_forward.1} parent=71 // pred_fallthru
          _
      $region72: #{text_encoder_forward.1} parent=5 // pred_fallthru
        _
      %p471 = scmp.le.s32.totalorder 1, %s25
      %p472 = scmp.lt.s32.totalorder %s25, 3
      %p473 = pnand %p471, %p472
      %p474 = pneg %p473
      // Predicated region
      $region81: #{text_encoder_forward.1} parent=5 // pred_check
        _
      $region82: #{text_encoder_forward.1} parent=5 // pred_check_branch
        %476 = sbr.rel (%p473) target = $region84
      $region83: #{text_encoder_forward.1} parent=5 // pred_region
        %s477 = ssub.s32 %s25, 1
        %p478 = scmp.lt.s32.totalorder %s30, 1
        %s479 = scalar_select %p478, %s30, 1
        %s480 = smul.addr %s479, 8
        %s481 = scalar_lea.vmem %s0, %s480
        %p482 = pneg %p51
        %p483 = pneg %p48
        %p484 = scmp.lt.s32.totalorder %s30, 1
        %s485 = scalar_select %p484, %s30, 1
        %s486 = scalar_lea.vmem %s1, %s485
        %p487 = pneg %p77
        %p488 = pneg %p74
        %p489 = pneg %p98
        %p490 = pneg %p95
        %p491 = pneg %p119
        %p492 = pneg %p116
        %p493 = pneg %p140
        %p494 = pneg %p137
        %p495 = pneg %p161
        %p496 = pneg %p158
        %p497 = pneg %p182
        %p498 = pneg %p179
        %p499 = pneg %p203
        %p500 = pneg %p200
        %p501 = pneg %p224
        %p502 = pneg %p221
        %p503 = pneg %p245
        %p504 = pneg %p242
        %p505 = pneg %p266
        %p506 = pneg %p263
        %p507 = pneg %p287
        %p508 = pneg %p284
        %p509 = pneg %p308
        %p510 = pneg %p305
        %p511 = pneg %p329
        %p512 = pneg %p326
        %p513 = pneg %p350
        %p514 = pneg %p347
        %p515 = pneg %p371
        %p516 = pneg %p368
        %p517 = pneg %p397
        %p518 = pneg %p394
        %s519 = sand.u32 %s384, 1
        %s520 = scalar_lea.sflag [#allocation3], %s519
        %s521 = sand.u32 %s384, 1
        %s522 = smul.addr %s521, 8
        %s523 = scalar_lea.vmem [#allocation2], %s522
        %p524 = scmp.lt.s32.totalorder %s30, 1
        %s525 = scalar_select %p524, %s30, 1
        %s526 = smul.addr %s525, 8
        %s527 = scalar_lea.vmem %s0, %s526
        %p528 = scmp.lt.s32.totalorder %s30, 1
        %s529 = scalar_select %p528, %s30, 1
        %s530 = scalar_lea.vmem %s1, %s529
        %v531 = vld [vmem:[%s530] sm:$0x1]
        %v532 = vld [vmem:[%s527] sm:$0xff]
        %v533 = vld [vmem:[%s2] sm:$0x1]
        %v534 = vld [vmem:[%s3] sm:$0x1]
        %vm535 = vcmask 261120
        %v536 = vsel %vm535, %v532, 0.0
        %537 = vadd.xlane.f32.xlu0 %v536
        %v538 = vpop.xlane.xlu0 %537
        %v539 = vrcp.pop 32.0
        %v540 = vmul.f32 %v538, %v539
        %v541 = vsub.f32 %v532, %v540
        %v542 = vmul.f32 %v541, %v541
        %v543 = vsel %vm535, %v542, 0.0
        %544 = vadd.xlane.f32.xlu0 %v543
        %v545 = vpop.xlane.xlu0 %544
        %v546 = vmul.f32 %v545, %v539
        %v547 = vadd.f32 %v546, 1e-05
        %v548 = vrsqrt.pop %v547
        %v549 = vmul.f32 %v541, %v548
        %v551 = vlaneseq
        %v552 = vshrl.u32 %v551, 7
        %v553 = vsub.s32 0, %v552
        %v554 = vrot.slane %v533, %v553
        %v556 = vmul.f32 %v549, %v554
        %v558 = vlaneseq
        %v559 = vshrl.u32 %v558, 7
        %v560 = vsub.s32 0, %v559
        %v561 = vrot.slane %v534, %v560
        %v563 = vadd.f32 %v556, %v561
        %v564 = vld [vmem:[%s4] sm:$0xff]
        %v565 = vld [vmem:[%s4 + $0x8] sm:$0xff]
        %v566 = vld [vmem:[%s4 + $0x10] sm:$0xff]
        %v567 = vld [vmem:[%s4 + $0x18] sm:$0xff]
        %v568 = vld [vmem:[%s5] sm:$0x1]
        %v569 = vld [vmem:[%s6] sm:$0xff]
        %v570 = vld [vmem:[%s6 + $0x8] sm:$0xff]
        %v571 = vld [vmem:[%s6 + $0x10] sm:$0xff]
        %v572 = vld [vmem:[%s6 + $0x18] sm:$0xff]
        %v573 = vld [vmem:[%s7] sm:$0x1]
        %v574 = vld [vmem:[%s8] sm:$0x1]
        %v575 = vld [vmem:[%s9] sm:$0x1]
        %v576 = vld [vmem:[%s10] sm:$0xff]
        %v577 = vld [vmem:[%s10 + $0x8] sm:$0xff]
        %v578 = vld [vmem:[%s10 + $0x10] sm:$0xff]
        %v579 = vld [vmem:[%s10 + $0x18] sm:$0xff]
        %v580 = vld [vmem:[%s11] sm:$0x1]
        %v581 = vld [vmem:[%s12] sm:$0xff]
        %v582 = vld [vmem:[%s12 + $0x8] sm:$0xff]
        %v583 = vld [vmem:[%s12 + $0x10] sm:$0xff]
        %v584 = vld [vmem:[%s12 + $0x18] sm:$0xff]
        %v585 = vld [vmem:[%s12 + $0x20] sm:$0xff]
        %v586 = vld [vmem:[%s12 + $0x28] sm:$0xff]
        %v587 = vld [vmem:[%s12 + $0x30] sm:$0xff]
        %v588 = vld [vmem:[%s12 + $0x38] sm:$0xff]
        %v589 = vld [vmem:[%s13] sm:$0x1]
        %v590 = vld [vmem:[%s14] sm:$0x1]
        %v591 = vld [vmem:[%s15] sm:$0x1]
        %v593 = vlaneseq
        %v594 = vshrl.u32 %v593, 7
        %v595 = vsub.s32 0, %v594
        %v596 = vrot.slane %v568, %v595
        %v599 = vsel %vm535, %v563, 0
        %601 = vmatprep.subr.mxu0 0.0
        %602 = vmatpush1.msra.mxu0 0.0
        %603 = vmatprep.subr.mxu0 0.0
        %604 = vmatpush1.msra.mxu0 0.0
        %605 = vmatprep.subr.mxu0 0.0
        %606 = vmatpush1.msra.mxu0 0.0
        %607 = vmatprep.subr.mxu0 0.0
        %608 = vmatpush1.msra.mxu0 0.0
        %609 = vmatprep.subr.mxu0 0.0
        %610 = vmatpush1.msra.mxu0 0.0
        %611 = vmatprep.subr.mxu0 0.0
        %612 = vmatpush1.msra.mxu0 0.0
        %613 = vmatprep.subr.mxu0 0.0
        %614 = vmatpush1.msra.mxu0 0.0
        %615 = vmatprep.subr.mxu0 0.0
        %616 = vmatpush1.msra.mxu0 0.0
        %617 = vmatprep.subr.mxu0 0.0
        %618 = vmatpush1.msra.mxu0 0.0
        %619 = vmatprep.subr.mxu0 0.0
        %620 = vmatpush1.msra.mxu0 0.0
        %621 = vmatprep.subr.mxu0 0.0
        %622 = vmatpush1.msra.mxu0 0.0
        %623 = vmatprep.subr.mxu0 0.0
        %624 = vmatpush1.msra.mxu0 0.0
        %625 = vmatprep.subr.mxu0 0.0
        %626 = vmatpush1.msra.mxu0 %v567
        %627 = vmatprep.subr.mxu0 0.0
        %628 = vmatpush1.msra.mxu0 %v566
        %629 = vmatprep.subr.mxu0 0.0
        %630 = vmatpush1.msra.mxu0 %v565
        %631 = vmatprep.subr.mxu0 0.0
        %632 = vmatpush1.msra.mxu0 %v564
        %633 = vmatprep.subr.mxu0 0.0
        %634 = vmatpush2.msra.mxu0 0.0
        %635 = vmatprep.subr.mxu0 0.0
        %636 = vmatpush2.msra.mxu0 0.0
        %637 = vmatprep.subr.mxu0 0.0
        %638 = vmatpush2.msra.mxu0 0.0
        %639 = vmatprep.subr.mxu0 0.0
        %640 = vmatpush2.msra.mxu0 0.0
        %641 = vmatprep.subr.mxu0 0.0
        %642 = vmatpush2.msra.mxu0 0.0
        %643 = vmatprep.subr.mxu0 0.0
        %644 = vmatpush2.msra.mxu0 0.0
        %645 = vmatprep.subr.mxu0 0.0
        %646 = vmatpush2.msra.mxu0 0.0
        %647 = vmatprep.subr.mxu0 0.0
        %648 = vmatpush2.msra.mxu0 0.0
        %649 = vmatprep.subr.mxu0 0.0
        %650 = vmatpush2.msra.mxu0 0.0
        %651 = vmatprep.subr.mxu0 0.0
        %652 = vmatpush2.msra.mxu0 0.0
        %653 = vmatprep.subr.mxu0 0.0
        %654 = vmatpush2.msra.mxu0 0.0
        %655 = vmatprep.subr.mxu0 0.0
        %656 = vmatpush2.msra.mxu0 0.0
        %657 = vmatprep.subr.mxu0 0.0
        %658 = vmatpush2.msra.mxu0 0.0
        %659 = vmatprep.subr.mxu0 0.0
        %660 = vmatpush2.msra.mxu0 0.0
        %661 = vmatprep.subr.mxu0 0.0
        %662 = vmatpush2.msra.mxu0 0.0
        %663 = vmatprep.subr.mxu0 0.0
        %664 = vmatpush2.msra.mxu0 0.0
        %665 = vmatprep.mubr.f32.mxu0 0.0
        %666 = vmatmul.mubr.f32.gmra.mxu0 %v599
        %v667 = vpop.f32.mrf.mxu0
        %v668 = vadd.f32 %v596, %v667
        %v669 = vpop.f32.mrf.mxu0
        %670 = vdwg.mxu0
        %v672 = vlaneseq
        %v673 = vshrl.u32 %v672, 7
        %v674 = vsub.s32 0, %v673
        %v675 = vrot.slane %v531, %v674
        %678 = vrot.lane.b32.xlu0 %v668, 96
        %v679 = vpop.permute.xlu0 %678
        %vm680 = vcmask 64512
        %v681 = vsel %vm680, %v668, 0
        %v683 = vsel %vm680, %v679, 0
        %685 = vmatprep.subr.mxu0 0.0
        %686 = vmatpush1.xpose.msra.mxu0 0.0
        %687 = vmatprep.subr.mxu0 0.0
        %688 = vmatpush1.xpose.msra.mxu0 0.0
        %689 = vmatprep.subr.mxu0 0.0
        %690 = vmatpush1.xpose.msra.mxu0 0.0
        %691 = vmatprep.subr.mxu0 0.0
        %692 = vmatpush1.xpose.msra.mxu0 0.0
        %693 = vmatprep.subr.mxu0 0.0
        %694 = vmatpush1.xpose.msra.mxu0 0.0
        %695 = vmatprep.subr.mxu0 0.0
        %696 = vmatpush1.xpose.msra.mxu0 0.0
        %697 = vmatprep.subr.mxu0 0.0
        %698 = vmatpush1.xpose.msra.mxu0 0.0
        %699 = vmatprep.subr.mxu0 0.0
        %700 = vmatpush1.xpose.msra.mxu0 0.0
        %701 = vmatprep.subr.mxu0 0.0
        %702 = vmatpush1.xpose.msra.mxu0 0.0
        %703 = vmatprep.subr.mxu0 0.0
        %704 = vmatpush1.xpose.msra.mxu0 0.0
        %705 = vmatprep.subr.mxu0 0.0
        %706 = vmatpush1.xpose.msra.mxu0 0.0
        %707 = vmatprep.subr.mxu0 0.0
        %708 = vmatpush1.xpose.msra.mxu0 0.0
        %709 = vmatprep.subr.mxu0 0.0
        %710 = vmatpush1.xpose.msra.mxu0 0.0
        %711 = vmatprep.subr.mxu0 0.0
        %712 = vmatpush1.xpose.msra.mxu0 0.0
        %713 = vmatprep.subr.mxu0 0.0
        %714 = vmatpush1.xpose.msra.mxu0 0.0
        %715 = vmatprep.subr.mxu0 0.0
        %716 = vmatpush1.xpose.msra.mxu0 %v683
        %717 = vmatprep.subr.mxu0 0.0
        %718 = vmatpush2.xpose.msra.mxu0 0.0
        %719 = vmatprep.subr.mxu0 0.0
        %720 = vmatpush2.xpose.msra.mxu0 0.0
        %721 = vmatprep.subr.mxu0 0.0
        %722 = vmatpush2.xpose.msra.mxu0 0.0
        %723 = vmatprep.subr.mxu0 0.0
        %724 = vmatpush2.xpose.msra.mxu0 0.0
        %725 = vmatprep.subr.mxu0 0.0
        %726 = vmatpush2.xpose.msra.mxu0 0.0
        %727 = vmatprep.subr.mxu0 0.0
        %728 = vmatpush2.xpose.msra.mxu0 0.0
        %729 = vmatprep.subr.mxu0 0.0
        %730 = vmatpush2.xpose.msra.mxu0 0.0
        %731 = vmatprep.subr.mxu0 0.0
        %732 = vmatpush2.xpose.msra.mxu0 0.0
        %733 = vmatprep.subr.mxu0 0.0
        %734 = vmatpush2.xpose.msra.mxu0 0.0
        %735 = vmatprep.subr.mxu0 0.0
        %736 = vmatpush2.xpose.msra.mxu0 0.0
        %737 = vmatprep.subr.mxu0 0.0
        %738 = vmatpush2.xpose.msra.mxu0 0.0
        %739 = vmatprep.subr.mxu0 0.0
        %740 = vmatpush2.xpose.msra.mxu0 0.0
        %741 = vmatprep.subr.mxu0 0.0
        %742 = vmatpush2.xpose.msra.mxu0 0.0
        %743 = vmatprep.subr.mxu0 0.0
        %744 = vmatpush2.xpose.msra.mxu0 0.0
        %745 = vmatprep.subr.mxu0 0.0
        %746 = vmatpush2.xpose.msra.mxu0 0.0
        %747 = vmatprep.subr.mxu0 0.0
        %748 = vmatpush2.xpose.msra.mxu0 0.0
        %749 = vmatprep.mubr.f32.mxu0 0.0
        %750 = vmatmul.mubr.f32.gmra.mxu0 %v681
        %v751 = vpop.f32.mrf.mxu0
        %v752 = vadd.f32 %v675, %v751
        %v753 = vpop.f32.mrf.mxu0
        %754 = vdwg.mxu0
        %v755 = vsel %vm680, %v752, -inf
        %756 = vmax.xlane.f32.xlu0 %v755
        %v757 = vpop.xlane.xlu0 %756
        %v758 = vsub.f32 %v752, %v757
        %v759 = vmul.f32 %v758, 1.442695
        %v760 = vpow.pop %v759
        %v761 = vsel %vm680, %v760, 0.0
        %762 = vadd.xlane.f32.xlu0 %v761
        %v763 = vpop.xlane.xlu0 %762
        %v764 = vrcp.pop %v763
        %v765 = vmul.f32 %v760, %v764
        %766 = vrot.lane.b32.xlu0 %v668, 64
        %v767 = vpop.permute.xlu0 %766
        %v770 = vsel %vm680, %v765, 0
        %772 = vmatprep.subr.mxu0 0.0
        %773 = vmatpush1.msra.mxu0 0.0
        %774 = vmatprep.subr.mxu0 0.0
        %775 = vmatpush1.msra.mxu0 0.0
        %776 = vmatprep.subr.mxu0 0.0
        %777 = vmatpush1.msra.mxu0 0.0
        %778 = vmatprep.subr.mxu0 0.0
        %779 = vmatpush1.msra.mxu0 0.0
        %780 = vmatprep.subr.mxu0 0.0
        %781 = vmatpush1.msra.mxu0 0.0
        %782 = vmatprep.subr.mxu0 0.0
        %783 = vmatpush1.msra.mxu0 0.0
        %784 = vmatprep.subr.mxu0 0.0
        %785 = vmatpush1.msra.mxu0 0.0
        %786 = vmatprep.subr.mxu0 0.0
        %787 = vmatpush1.msra.mxu0 0.0
        %788 = vmatprep.subr.mxu0 0.0
        %789 = vmatpush1.msra.mxu0 0.0
        %790 = vmatprep.subr.mxu0 0.0
        %791 = vmatpush1.msra.mxu0 0.0
        %792 = vmatprep.subr.mxu0 0.0
        %793 = vmatpush1.msra.mxu0 0.0
        %794 = vmatprep.subr.mxu0 0.0
        %795 = vmatpush1.msra.mxu0 0.0
        %796 = vmatprep.subr.mxu0 0.0
        %797 = vmatpush1.msra.mxu0 0.0
        %798 = vmatprep.subr.mxu0 0.0
        %799 = vmatpush1.msra.mxu0 0.0
        %800 = vmatprep.subr.mxu0 0.0
        %801 = vmatpush1.msra.mxu0 0.0
        %802 = vmatprep.subr.mxu0 0.0
        %803 = vmatpush1.msra.mxu0 %v767
        %804 = vmatprep.subr.mxu0 0.0
        %805 = vmatpush2.msra.mxu0 0.0
        %806 = vmatprep.subr.mxu0 0.0
        %807 = vmatpush2.msra.mxu0 0.0
        %808 = vmatprep.subr.mxu0 0.0
        %809 = vmatpush2.msra.mxu0 0.0
        %810 = vmatprep.subr.mxu0 0.0
        %811 = vmatpush2.msra.mxu0 0.0
        %812 = vmatprep.subr.mxu0 0.0
        %813 = vmatpush2.msra.mxu0 0.0
        %814 = vmatprep.subr.mxu0 0.0
        %815 = vmatpush2.msra.mxu0 0.0
        %816 = vmatprep.subr.mxu0 0.0
        %817 = vmatpush2.msra.mxu0 0.0
        %818 = vmatprep.subr.mxu0 0.0
        %819 = vmatpush2.msra.mxu0 0.0
        %820 = vmatprep.subr.mxu0 0.0
        %821 = vmatpush2.msra.mxu0 0.0
        %822 = vmatprep.subr.mxu0 0.0
        %823 = vmatpush2.msra.mxu0 0.0
        %824 = vmatprep.subr.mxu0 0.0
        %825 = vmatpush2.msra.mxu0 0.0
        %826 = vmatprep.subr.mxu0 0.0
        %827 = vmatpush2.msra.mxu0 0.0
        %828 = vmatprep.subr.mxu0 0.0
        %829 = vmatpush2.msra.mxu0 0.0
        %830 = vmatprep.subr.mxu0 0.0
        %831 = vmatpush2.msra.mxu0 0.0
        %832 = vmatprep.subr.mxu0 0.0
        %833 = vmatpush2.msra.mxu0 0.0
        %834 = vmatprep.subr.mxu0 0.0
        %835 = vmatpush2.msra.mxu0 0.0
        %836 = vmatprep.mubr.f32.mxu0 0.0
        %837 = vmatmul.mubr.f32.gmra.mxu0 %v770
        %v838 = vpop.f32.mrf.mxu0
        %v839 = vadd.f32 0.0, %v838
        %v840 = vpop.f32.mrf.mxu0
        %841 = vdwg.mxu0
        %842 = vrot.lane.b32.xlu0 %v668, 120
        %v843 = vpop.permute.xlu0 %842
        %844 = vrot.lane.b32.xlu0 %v668, 88
        %v845 = vpop.permute.xlu0 %844
        %v846 = vsel %vm680, %v843, 0
        %v848 = vsel %vm680, %v845, 0
        %850 = vmatprep.subr.mxu0 0.0
        %851 = vmatpush1.xpose.msra.mxu0 0.0
        %852 = vmatprep.subr.mxu0 0.0
        %853 = vmatpush1.xpose.msra.mxu0 0.0
        %854 = vmatprep.subr.mxu0 0.0
        %855 = vmatpush1.xpose.msra.mxu0 0.0
        %856 = vmatprep.subr.mxu0 0.0
        %857 = vmatpush1.xpose.msra.mxu0 0.0
        %858 = vmatprep.subr.mxu0 0.0
        %859 = vmatpush1.xpose.msra.mxu0 0.0
        %860 = vmatprep.subr.mxu0 0.0
        %861 = vmatpush1.xpose.msra.mxu0 0.0
        %862 = vmatprep.subr.mxu0 0.0
        %863 = vmatpush1.xpose.msra.mxu0 0.0
        %864 = vmatprep.subr.mxu0 0.0
        %865 = vmatpush1.xpose.msra.mxu0 0.0
        %866 = vmatprep.subr.mxu0 0.0
        %867 = vmatpush1.xpose.msra.mxu0 0.0
        %868 = vmatprep.subr.mxu0 0.0
        %869 = vmatpush1.xpose.msra.mxu0 0.0
        %870 = vmatprep.subr.mxu0 0.0
        %871 = vmatpush1.xpose.msra.mxu0 0.0
        %872 = vmatprep.subr.mxu0 0.0
        %873 = vmatpush1.xpose.msra.mxu0 0.0
        %874 = vmatprep.subr.mxu0 0.0
        %875 = vmatpush1.xpose.msra.mxu0 0.0
        %876 = vmatprep.subr.mxu0 0.0
        %877 = vmatpush1.xpose.msra.mxu0 0.0
        %878 = vmatprep.subr.mxu0 0.0
        %879 = vmatpush1.xpose.msra.mxu0 0.0
        %880 = vmatprep.subr.mxu0 0.0
        %881 = vmatpush1.xpose.msra.mxu0 %v848
        %882 = vmatprep.subr.mxu0 0.0
        %883 = vmatpush2.xpose.msra.mxu0 0.0
        %884 = vmatprep.subr.mxu0 0.0
        %885 = vmatpush2.xpose.msra.mxu0 0.0
        %886 = vmatprep.subr.mxu0 0.0
        %887 = vmatpush2.xpose.msra.mxu0 0.0
        %888 = vmatprep.subr.mxu0 0.0
        %889 = vmatpush2.xpose.msra.mxu0 0.0
        %890 = vmatprep.subr.mxu0 0.0
        %891 = vmatpush2.xpose.msra.mxu0 0.0
        %892 = vmatprep.subr.mxu0 0.0
        %893 = vmatpush2.xpose.msra.mxu0 0.0
        %894 = vmatprep.subr.mxu0 0.0
        %895 = vmatpush2.xpose.msra.mxu0 0.0
        %896 = vmatprep.subr.mxu0 0.0
        %897 = vmatpush2.xpose.msra.mxu0 0.0
        %898 = vmatprep.subr.mxu0 0.0
        %899 = vmatpush2.xpose.msra.mxu0 0.0
        %900 = vmatprep.subr.mxu0 0.0
        %901 = vmatpush2.xpose.msra.mxu0 0.0
        %902 = vmatprep.subr.mxu0 0.0
        %903 = vmatpush2.xpose.msra.mxu0 0.0
        %904 = vmatprep.subr.mxu0 0.0
        %905 = vmatpush2.xpose.msra.mxu0 0.0
        %906 = vmatprep.subr.mxu0 0.0
        %907 = vmatpush2.xpose.msra.mxu0 0.0
        %908 = vmatprep.subr.mxu0 0.0
        %909 = vmatpush2.xpose.msra.mxu0 0.0
        %910 = vmatprep.subr.mxu0 0.0
        %911 = vmatpush2.xpose.msra.mxu0 0.0
        %912 = vmatprep.subr.mxu0 0.0
        %913 = vmatpush2.xpose.msra.mxu0 0.0
        %914 = vmatprep.mubr.f32.mxu0 0.0
        %915 = vmatmul.mubr.f32.gmra.mxu0 %v846
        %v916 = vpop.f32.mrf.mxu0
        %v917 = vadd.f32 %v675, %v916
        %v918 = vpop.f32.mrf.mxu0
        %919 = vdwg.mxu0
        %v920 = vsel %vm680, %v917, -inf
        %921 = vmax.xlane.f32.xlu0 %v920
        %v922 = vpop.xlane.xlu0 %921
        %v923 = vsub.f32 %v917, %v922
        %v924 = vmul.f32 %v923, 1.442695
        %v925 = vpow.pop %v924
        %v926 = vsel %vm680, %v925, 0.0
        %927 = vadd.xlane.f32.xlu0 %v926
        %v928 = vpop.xlane.xlu0 %927
        %v929 = vrcp.pop %v928
        %v930 = vmul.f32 %v925, %v929
        %931 = vrot.lane.b32.xlu0 %v668, 56
        %v932 = vpop.permute.xlu0 %931
        %v935 = vsel %vm680, %v930, 0
        %937 = vmatprep.subr.mxu0 0.0
        %938 = vmatpush1.msra.mxu0 0.0
        %939 = vmatprep.subr.mxu0 0.0
        %940 = vmatpush1.msra.mxu0 0.0
        %941 = vmatprep.subr.mxu0 0.0
        %942 = vmatpush1.msra.mxu0 0.0
        %943 = vmatprep.subr.mxu0 0.0
        %944 = vmatpush1.msra.mxu0 0.0
        %945 = vmatprep.subr.mxu0 0.0
        %946 = vmatpush1.msra.mxu0 0.0
        %947 = vmatprep.subr.mxu0 0.0
        %948 = vmatpush1.msra.mxu0 0.0
        %949 = vmatprep.subr.mxu0 0.0
        %950 = vmatpush1.msra.mxu0 0.0
        %951 = vmatprep.subr.mxu0 0.0
        %952 = vmatpush1.msra.mxu0 0.0
        %953 = vmatprep.subr.mxu0 0.0
        %954 = vmatpush1.msra.mxu0 0.0
        %955 = vmatprep.subr.mxu0 0.0
        %956 = vmatpush1.msra.mxu0 0.0
        %957 = vmatprep.subr.mxu0 0.0
        %958 = vmatpush1.msra.mxu0 0.0
        %959 = vmatprep.subr.mxu0 0.0
        %960 = vmatpush1.msra.mxu0 0.0
        %961 = vmatprep.subr.mxu0 0.0
        %962 = vmatpush1.msra.mxu0 0.0
        %963 = vmatprep.subr.mxu0 0.0
        %964 = vmatpush1.msra.mxu0 0.0
        %965 = vmatprep.subr.mxu0 0.0
        %966 = vmatpush1.msra.mxu0 0.0
        %967 = vmatprep.subr.mxu0 0.0
        %968 = vmatpush1.msra.mxu0 %v932
        %969 = vmatprep.subr.mxu0 0.0
        %970 = vmatpush2.msra.mxu0 0.0
        %971 = vmatprep.subr.mxu0 0.0
        %972 = vmatpush2.msra.mxu0 0.0
        %973 = vmatprep.subr.mxu0 0.0
        %974 = vmatpush2.msra.mxu0 0.0
        %975 = vmatprep.subr.mxu0 0.0
        %976 = vmatpush2.msra.mxu0 0.0
        %977 = vmatprep.subr.mxu0 0.0
        %978 = vmatpush2.msra.mxu0 0.0
        %979 = vmatprep.subr.mxu0 0.0
        %980 = vmatpush2.msra.mxu0 0.0
        %981 = vmatprep.subr.mxu0 0.0
        %982 = vmatpush2.msra.mxu0 0.0
        %983 = vmatprep.subr.mxu0 0.0
        %984 = vmatpush2.msra.mxu0 0.0
        %985 = vmatprep.subr.mxu0 0.0
        %986 = vmatpush2.msra.mxu0 0.0
        %987 = vmatprep.subr.mxu0 0.0
        %988 = vmatpush2.msra.mxu0 0.0
        %989 = vmatprep.subr.mxu0 0.0
        %990 = vmatpush2.msra.mxu0 0.0
        %991 = vmatprep.subr.mxu0 0.0
        %992 = vmatpush2.msra.mxu0 0.0
        %993 = vmatprep.subr.mxu0 0.0
        %994 = vmatpush2.msra.mxu0 0.0
        %995 = vmatprep.subr.mxu0 0.0
        %996 = vmatpush2.msra.mxu0 0.0
        %997 = vmatprep.subr.mxu0 0.0
        %998 = vmatpush2.msra.mxu0 0.0
        %999 = vmatprep.subr.mxu0 0.0
        %1000 = vmatpush2.msra.mxu0 0.0
        %1001 = vmatprep.mubr.f32.mxu0 0.0
        %1002 = vmatmul.mubr.f32.gmra.mxu0 %v935
        %v1003 = vpop.f32.mrf.mxu0
        %v1004 = vadd.f32 0.0, %v1003
        %v1005 = vpop.f32.mrf.mxu0
        %1006 = vdwg.mxu0
        %v1008 = vsel %vm680, %v1004, 0
        %1010 = vmatprep.subr.mxu0 0.0
        %1011 = vmatpush1.msra.mxu0 0.0
        %1012 = vmatprep.subr.mxu0 0.0
        %1013 = vmatpush1.msra.mxu0 0.0
        %1014 = vmatprep.subr.mxu0 0.0
        %1015 = vmatpush1.msra.mxu0 0.0
        %1016 = vmatprep.subr.mxu0 0.0
        %1017 = vmatpush1.msra.mxu0 0.0
        %1018 = vmatprep.subr.mxu0 0.0
        %1019 = vmatpush1.msra.mxu0 0.0
        %1020 = vmatprep.subr.mxu0 0.0
        %1021 = vmatpush1.msra.mxu0 0.0
        %1022 = vmatprep.subr.mxu0 0.0
        %1023 = vmatpush1.msra.mxu0 0.0
        %1024 = vmatprep.subr.mxu0 0.0
        %1025 = vmatpush1.msra.mxu0 0.0
        %1026 = vmatprep.subr.mxu0 0.0
        %1027 = vmatpush1.msra.mxu0 0.0
        %1028 = vmatprep.subr.mxu0 0.0
        %1029 = vmatpush1.msra.mxu0 0.0
        %1030 = vmatprep.subr.mxu0 0.0
        %1031 = vmatpush1.msra.mxu0 0.0
        %1032 = vmatprep.subr.mxu0 0.0
        %1033 = vmatpush1.msra.mxu0 0.0
        %1034 = vmatprep.subr.mxu0 0.0
        %1035 = vmatpush1.msra.mxu0 0.0
        %1036 = vmatprep.subr.mxu0 0.0
        %1037 = vmatpush1.msra.mxu0 0.0
        %1038 = vmatprep.subr.mxu0 0.0
        %1039 = vmatpush1.msra.mxu0 0.0
        %1040 = vmatprep.subr.mxu0 0.0
        %1041 = vmatpush1.msra.mxu0 %v570
        %1042 = vmatprep.subr.mxu0 0.0
        %1043 = vmatpush2.msra.mxu0 0.0
        %1044 = vmatprep.subr.mxu0 0.0
        %1045 = vmatpush2.msra.mxu0 0.0
        %1046 = vmatprep.subr.mxu0 0.0
        %1047 = vmatpush2.msra.mxu0 0.0
        %1048 = vmatprep.subr.mxu0 0.0
        %1049 = vmatpush2.msra.mxu0 0.0
        %1050 = vmatprep.subr.mxu0 0.0
        %1051 = vmatpush2.msra.mxu0 0.0
        %1052 = vmatprep.subr.mxu0 0.0
        %1053 = vmatpush2.msra.mxu0 0.0
        %1054 = vmatprep.subr.mxu0 0.0
        %1055 = vmatpush2.msra.mxu0 0.0
        %1056 = vmatprep.subr.mxu0 0.0
        %1057 = vmatpush2.msra.mxu0 0.0
        %1058 = vmatprep.subr.mxu0 0.0
        %1059 = vmatpush2.msra.mxu0 0.0
        %1060 = vmatprep.subr.mxu0 0.0
        %1061 = vmatpush2.msra.mxu0 0.0
        %1062 = vmatprep.subr.mxu0 0.0
        %1063 = vmatpush2.msra.mxu0 0.0
        %1064 = vmatprep.subr.mxu0 0.0
        %1065 = vmatpush2.msra.mxu0 0.0
        %1066 = vmatprep.subr.mxu0 0.0
        %1067 = vmatpush2.msra.mxu0 0.0
        %1068 = vmatprep.subr.mxu0 0.0
        %1069 = vmatpush2.msra.mxu0 0.0
        %1070 = vmatprep.subr.mxu0 0.0
        %1071 = vmatpush2.msra.mxu0 0.0
        %1072 = vmatprep.subr.mxu0 0.0
        %1073 = vmatpush2.msra.mxu0 0.0
        %1074 = vmatprep.mubr.f32.mxu0 0.0
        %1075 = vmatmul.mubr.f32.gmra.mxu0 %v1008
        %v1076 = vpop.f32.mrf.mxu0
        %v1077 = vadd.f32 0.0, %v1076
        %v1078 = vpop.f32.mrf.mxu0
        %1079 = vdwg.mxu0
        %v1081 = vsel %vm680, %v839, 0
        %1083 = vmatprep.subr.mxu0 0.0
        %1084 = vmatpush1.msra.mxu0 0.0
        %1085 = vmatprep.subr.mxu0 0.0
        %1086 = vmatpush1.msra.mxu0 0.0
        %1087 = vmatprep.subr.mxu0 0.0
        %1088 = vmatpush1.msra.mxu0 0.0
        %1089 = vmatprep.subr.mxu0 0.0
        %1090 = vmatpush1.msra.mxu0 0.0
        %1091 = vmatprep.subr.mxu0 0.0
        %1092 = vmatpush1.msra.mxu0 0.0
        %1093 = vmatprep.subr.mxu0 0.0
        %1094 = vmatpush1.msra.mxu0 0.0
        %1095 = vmatprep.subr.mxu0 0.0
        %1096 = vmatpush1.msra.mxu0 0.0
        %1097 = vmatprep.subr.mxu0 0.0
        %1098 = vmatpush1.msra.mxu0 0.0
        %1099 = vmatprep.subr.mxu0 0.0
        %1100 = vmatpush1.msra.mxu0 0.0
        %1101 = vmatprep.subr.mxu0 0.0
        %1102 = vmatpush1.msra.mxu0 0.0
        %1103 = vmatprep.subr.mxu0 0.0
        %1104 = vmatpush1.msra.mxu0 0.0
        %1105 = vmatprep.subr.mxu0 0.0
        %1106 = vmatpush1.msra.mxu0 0.0
        %1107 = vmatprep.subr.mxu0 0.0
        %1108 = vmatpush1.msra.mxu0 0.0
        %1109 = vmatprep.subr.mxu0 0.0
        %1110 = vmatpush1.msra.mxu0 0.0
        %1111 = vmatprep.subr.mxu0 0.0
        %1112 = vmatpush1.msra.mxu0 0.0
        %1113 = vmatprep.subr.mxu0 0.0
        %1114 = vmatpush1.msra.mxu0 %v569
        %1115 = vmatprep.subr.mxu0 0.0
        %1116 = vmatpush2.msra.mxu0 0.0
        %1117 = vmatprep.subr.mxu0 0.0
        %1118 = vmatpush2.msra.mxu0 0.0
        %1119 = vmatprep.subr.mxu0 0.0
        %1120 = vmatpush2.msra.mxu0 0.0
        %1121 = vmatprep.subr.mxu0 0.0
        %1122 = vmatpush2.msra.mxu0 0.0
        %1123 = vmatprep.subr.mxu0 0.0
        %1124 = vmatpush2.msra.mxu0 0.0
        %1125 = vmatprep.subr.mxu0 0.0
        %1126 = vmatpush2.msra.mxu0 0.0
        %1127 = vmatprep.subr.mxu0 0.0
        %1128 = vmatpush2.msra.mxu0 0.0
        %1129 = vmatprep.subr.mxu0 0.0
        %1130 = vmatpush2.msra.mxu0 0.0
        %1131 = vmatprep.subr.mxu0 0.0
        %1132 = vmatpush2.msra.mxu0 0.0
        %1133 = vmatprep.subr.mxu0 0.0
        %1134 = vmatpush2.msra.mxu0 0.0
        %1135 = vmatprep.subr.mxu0 0.0
        %1136 = vmatpush2.msra.mxu0 0.0
        %1137 = vmatprep.subr.mxu0 0.0
        %1138 = vmatpush2.msra.mxu0 0.0
        %1139 = vmatprep.subr.mxu0 0.0
        %1140 = vmatpush2.msra.mxu0 0.0
        %1141 = vmatprep.subr.mxu0 0.0
        %1142 = vmatpush2.msra.mxu0 0.0
        %1143 = vmatprep.subr.mxu0 0.0
        %1144 = vmatpush2.msra.mxu0 0.0
        %1145 = vmatprep.subr.mxu0 0.0
        %1146 = vmatpush2.msra.mxu0 0.0
        %1147 = vmatprep.mubr.f32.mxu0 0.0
        %1148 = vmatmul.mubr.f32.gmra.mxu0 %v1081
        %v1149 = vpop.f32.mrf.mxu0
        %v1150 = vadd.f32 %v1077, %v1149
        %v1151 = vpop.f32.mrf.mxu0
        %1152 = vdwg.mxu0
        %1153 = vrot.lane.b32.xlu0 %v668, 112
        %v1154 = vpop.permute.xlu0 %1153
        %1155 = vrot.lane.b32.xlu0 %v668, 80
        %v1156 = vpop.permute.xlu0 %1155
        %v1157 = vsel %vm680, %v1154, 0
        %v1159 = vsel %vm680, %v1156, 0
        %1161 = vmatprep.subr.mxu0 0.0
        %1162 = vmatpush1.xpose.msra.mxu0 0.0
        %1163 = vmatprep.subr.mxu0 0.0
        %1164 = vmatpush1.xpose.msra.mxu0 0.0
        %1165 = vmatprep.subr.mxu0 0.0
        %1166 = vmatpush1.xpose.msra.mxu0 0.0
        %1167 = vmatprep.subr.mxu0 0.0
        %1168 = vmatpush1.xpose.msra.mxu0 0.0
        %1169 = vmatprep.subr.mxu0 0.0
        %1170 = vmatpush1.xpose.msra.mxu0 0.0
        %1171 = vmatprep.subr.mxu0 0.0
        %1172 = vmatpush1.xpose.msra.mxu0 0.0
        %1173 = vmatprep.subr.mxu0 0.0
        %1174 = vmatpush1.xpose.msra.mxu0 0.0
        %1175 = vmatprep.subr.mxu0 0.0
        %1176 = vmatpush1.xpose.msra.mxu0 0.0
        %1177 = vmatprep.subr.mxu0 0.0
        %1178 = vmatpush1.xpose.msra.mxu0 0.0
        %1179 = vmatprep.subr.mxu0 0.0
        %1180 = vmatpush1.xpose.msra.mxu0 0.0
        %1181 = vmatprep.subr.mxu0 0.0
        %1182 = vmatpush1.xpose.msra.mxu0 0.0
        %1183 = vmatprep.subr.mxu0 0.0
        %1184 = vmatpush1.xpose.msra.mxu0 0.0
        %1185 = vmatprep.subr.mxu0 0.0
        %1186 = vmatpush1.xpose.msra.mxu0 0.0
        %1187 = vmatprep.subr.mxu0 0.0
        %1188 = vmatpush1.xpose.msra.mxu0 0.0
        %1189 = vmatprep.subr.mxu0 0.0
        %1190 = vmatpush1.xpose.msra.mxu0 0.0
        %1191 = vmatprep.subr.mxu0 0.0
        %1192 = vmatpush1.xpose.msra.mxu0 %v1159
        %1193 = vmatprep.subr.mxu0 0.0
        %1194 = vmatpush2.xpose.msra.mxu0 0.0
        %1195 = vmatprep.subr.mxu0 0.0
        %1196 = vmatpush2.xpose.msra.mxu0 0.0
        %1197 = vmatprep.subr.mxu0 0.0
        %1198 = vmatpush2.xpose.msra.mxu0 0.0
        %1199 = vmatprep.subr.mxu0 0.0
        %1200 = vmatpush2.xpose.msra.mxu0 0.0
        %1201 = vmatprep.subr.mxu0 0.0
        %1202 = vmatpush2.xpose.msra.mxu0 0.0
        %1203 = vmatprep.subr.mxu0 0.0
        %1204 = vmatpush2.xpose.msra.mxu0 0.0
        %1205 = vmatprep.subr.mxu0 0.0
        %1206 = vmatpush2.xpose.msra.mxu0 0.0
        %1207 = vmatprep.subr.mxu0 0.0
        %1208 = vmatpush2.xpose.msra.mxu0 0.0
        %1209 = vmatprep.subr.mxu0 0.0
        %1210 = vmatpush2.xpose.msra.mxu0 0.0
        %1211 = vmatprep.subr.mxu0 0.0
        %1212 = vmatpush2.xpose.msra.mxu0 0.0
        %1213 = vmatprep.subr.mxu0 0.0
        %1214 = vmatpush2.xpose.msra.mxu0 0.0
        %1215 = vmatprep.subr.mxu0 0.0
        %1216 = vmatpush2.xpose.msra.mxu0 0.0
        %1217 = vmatprep.subr.mxu0 0.0
        %1218 = vmatpush2.xpose.msra.mxu0 0.0
        %1219 = vmatprep.subr.mxu0 0.0
        %1220 = vmatpush2.xpose.msra.mxu0 0.0
        %1221 = vmatprep.subr.mxu0 0.0
        %1222 = vmatpush2.xpose.msra.mxu0 0.0
        %1223 = vmatprep.subr.mxu0 0.0
        %1224 = vmatpush2.xpose.msra.mxu0 0.0
        %1225 = vmatprep.mubr.f32.mxu0 0.0
        %1226 = vmatmul.mubr.f32.gmra.mxu0 %v1157
        %v1227 = vpop.f32.mrf.mxu0
        %v1228 = vadd.f32 %v675, %v1227
        %v1229 = vpop.f32.mrf.mxu0
        %1230 = vdwg.mxu0
        %v1231 = vsel %vm680, %v1228, -inf
        %1232 = vmax.xlane.f32.xlu0 %v1231
        %v1233 = vpop.xlane.xlu0 %1232
        %v1234 = vsub.f32 %v1228, %v1233
        %v1235 = vmul.f32 %v1234, 1.442695
        %v1236 = vpow.pop %v1235
        %v1237 = vsel %vm680, %v1236, 0.0
        %1238 = vadd.xlane.f32.xlu0 %v1237
        %v1239 = vpop.xlane.xlu0 %1238
        %v1240 = vrcp.pop %v1239
        %v1241 = vmul.f32 %v1236, %v1240
        %1242 = vrot.lane.b32.xlu0 %v668, 48
        %v1243 = vpop.permute.xlu0 %1242
        %v1246 = vsel %vm680, %v1241, 0
        %1248 = vmatprep.subr.mxu0 0.0
        %1249 = vmatpush1.msra.mxu0 0.0
        %1250 = vmatprep.subr.mxu0 0.0
        %1251 = vmatpush1.msra.mxu0 0.0
        %1252 = vmatprep.subr.mxu0 0.0
        %1253 = vmatpush1.msra.mxu0 0.0
        %1254 = vmatprep.subr.mxu0 0.0
        %1255 = vmatpush1.msra.mxu0 0.0
        %1256 = vmatprep.subr.mxu0 0.0
        %1257 = vmatpush1.msra.mxu0 0.0
        %1258 = vmatprep.subr.mxu0 0.0
        %1259 = vmatpush1.msra.mxu0 0.0
        %1260 = vmatprep.subr.mxu0 0.0
        %1261 = vmatpush1.msra.mxu0 0.0
        %1262 = vmatprep.subr.mxu0 0.0
        %1263 = vmatpush1.msra.mxu0 0.0
        %1264 = vmatprep.subr.mxu0 0.0
        %1265 = vmatpush1.msra.mxu0 0.0
        %1266 = vmatprep.subr.mxu0 0.0
        %1267 = vmatpush1.msra.mxu0 0.0
        %1268 = vmatprep.subr.mxu0 0.0
        %1269 = vmatpush1.msra.mxu0 0.0
        %1270 = vmatprep.subr.mxu0 0.0
        %1271 = vmatpush1.msra.mxu0 0.0
        %1272 = vmatprep.subr.mxu0 0.0
        %1273 = vmatpush1.msra.mxu0 0.0
        %1274 = vmatprep.subr.mxu0 0.0
        %1275 = vmatpush1.msra.mxu0 0.0
        %1276 = vmatprep.subr.mxu0 0.0
        %1277 = vmatpush1.msra.mxu0 0.0
        %1278 = vmatprep.subr.mxu0 0.0
        %1279 = vmatpush1.msra.mxu0 %v1243
        %1280 = vmatprep.subr.mxu0 0.0
        %1281 = vmatpush2.msra.mxu0 0.0
        %1282 = vmatprep.subr.mxu0 0.0
        %1283 = vmatpush2.msra.mxu0 0.0
        %1284 = vmatprep.subr.mxu0 0.0
        %1285 = vmatpush2.msra.mxu0 0.0
        %1286 = vmatprep.subr.mxu0 0.0
        %1287 = vmatpush2.msra.mxu0 0.0
        %1288 = vmatprep.subr.mxu0 0.0
        %1289 = vmatpush2.msra.mxu0 0.0
        %1290 = vmatprep.subr.mxu0 0.0
        %1291 = vmatpush2.msra.mxu0 0.0
        %1292 = vmatprep.subr.mxu0 0.0
        %1293 = vmatpush2.msra.mxu0 0.0
        %1294 = vmatprep.subr.mxu0 0.0
        %1295 = vmatpush2.msra.mxu0 0.0
        %1296 = vmatprep.subr.mxu0 0.0
        %1297 = vmatpush2.msra.mxu0 0.0
        %1298 = vmatprep.subr.mxu0 0.0
        %1299 = vmatpush2.msra.mxu0 0.0
        %1300 = vmatprep.subr.mxu0 0.0
        %1301 = vmatpush2.msra.mxu0 0.0
        %1302 = vmatprep.subr.mxu0 0.0
        %1303 = vmatpush2.msra.mxu0 0.0
        %1304 = vmatprep.subr.mxu0 0.0
        %1305 = vmatpush2.msra.mxu0 0.0
        %1306 = vmatprep.subr.mxu0 0.0
        %1307 = vmatpush2.msra.mxu0 0.0
        %1308 = vmatprep.subr.mxu0 0.0
        %1309 = vmatpush2.msra.mxu0 0.0
        %1310 = vmatprep.subr.mxu0 0.0
        %1311 = vmatpush2.msra.mxu0 0.0
        %1312 = vmatprep.mubr.f32.mxu0 0.0
        %1313 = vmatmul.mubr.f32.gmra.mxu0 %v1246
        %v1314 = vpop.f32.mrf.mxu0
        %v1315 = vadd.f32 0.0, %v1314
        %v1316 = vpop.f32.mrf.mxu0
        %1317 = vdwg.mxu0
        %v1319 = vsel %vm680, %v1315, 0
        %1321 = vmatprep.subr.mxu0 0.0
        %1322 = vmatpush1.msra.mxu0 0.0
        %1323 = vmatprep.subr.mxu0 0.0
        %1324 = vmatpush1.msra.mxu0 0.0
        %1325 = vmatprep.subr.mxu0 0.0
        %1326 = vmatpush1.msra.mxu0 0.0
        %1327 = vmatprep.subr.mxu0 0.0
        %1328 = vmatpush1.msra.mxu0 0.0
        %1329 = vmatprep.subr.mxu0 0.0
        %1330 = vmatpush1.msra.mxu0 0.0
        %1331 = vmatprep.subr.mxu0 0.0
        %1332 = vmatpush1.msra.mxu0 0.0
        %1333 = vmatprep.subr.mxu0 0.0
        %1334 = vmatpush1.msra.mxu0 0.0
        %1335 = vmatprep.subr.mxu0 0.0
        %1336 = vmatpush1.msra.mxu0 0.0
        %1337 = vmatprep.subr.mxu0 0.0
        %1338 = vmatpush1.msra.mxu0 0.0
        %1339 = vmatprep.subr.mxu0 0.0
        %1340 = vmatpush1.msra.mxu0 0.0
        %1341 = vmatprep.subr.mxu0 0.0
        %1342 = vmatpush1.msra.mxu0 0.0
        %1343 = vmatprep.subr.mxu0 0.0
        %1344 = vmatpush1.msra.mxu0 0.0
        %1345 = vmatprep.subr.mxu0 0.0
        %1346 = vmatpush1.msra.mxu0 0.0
        %1347 = vmatprep.subr.mxu0 0.0
        %1348 = vmatpush1.msra.mxu0 0.0
        %1349 = vmatprep.subr.mxu0 0.0
        %1350 = vmatpush1.msra.mxu0 0.0
        %1351 = vmatprep.subr.mxu0 0.0
        %1352 = vmatpush1.msra.mxu0 %v571
        %1353 = vmatprep.subr.mxu0 0.0
        %1354 = vmatpush2.msra.mxu0 0.0
        %1355 = vmatprep.subr.mxu0 0.0
        %1356 = vmatpush2.msra.mxu0 0.0
        %1357 = vmatprep.subr.mxu0 0.0
        %1358 = vmatpush2.msra.mxu0 0.0
        %1359 = vmatprep.subr.mxu0 0.0
        %1360 = vmatpush2.msra.mxu0 0.0
        %1361 = vmatprep.subr.mxu0 0.0
        %1362 = vmatpush2.msra.mxu0 0.0
        %1363 = vmatprep.subr.mxu0 0.0
        %1364 = vmatpush2.msra.mxu0 0.0
        %1365 = vmatprep.subr.mxu0 0.0
        %1366 = vmatpush2.msra.mxu0 0.0
        %1367 = vmatprep.subr.mxu0 0.0
        %1368 = vmatpush2.msra.mxu0 0.0
        %1369 = vmatprep.subr.mxu0 0.0
        %1370 = vmatpush2.msra.mxu0 0.0
        %1371 = vmatprep.subr.mxu0 0.0
        %1372 = vmatpush2.msra.mxu0 0.0
        %1373 = vmatprep.subr.mxu0 0.0
        %1374 = vmatpush2.msra.mxu0 0.0
        %1375 = vmatprep.subr.mxu0 0.0
        %1376 = vmatpush2.msra.mxu0 0.0
        %1377 = vmatprep.subr.mxu0 0.0
        %1378 = vmatpush2.msra.mxu0 0.0
        %1379 = vmatprep.subr.mxu0 0.0
        %1380 = vmatpush2.msra.mxu0 0.0
        %1381 = vmatprep.subr.mxu0 0.0
        %1382 = vmatpush2.msra.mxu0 0.0
        %1383 = vmatprep.subr.mxu0 0.0
        %1384 = vmatpush2.msra.mxu0 0.0
        %1385 = vmatprep.mubr.f32.mxu0 0.0
        %1386 = vmatmul.mubr.f32.gmra.mxu0 %v1319
        %v1387 = vpop.f32.mrf.mxu0
        %v1388 = vadd.f32 0.0, %v1387
        %v1389 = vpop.f32.mrf.mxu0
        %1390 = vdwg.mxu0
        %v1391 = vadd.f32 %v1150, %v1388
        %1392 = vrot.lane.b32.xlu0 %v668, 104
        %v1393 = vpop.permute.xlu0 %1392
        %1394 = vrot.lane.b32.xlu0 %v668, 72
        %v1395 = vpop.permute.xlu0 %1394
        %v1396 = vsel %vm680, %v1393, 0
        %v1398 = vsel %vm680, %v1395, 0
        %1400 = vmatprep.subr.mxu0 0.0
        %1401 = vmatpush1.xpose.msra.mxu0 0.0
        %1402 = vmatprep.subr.mxu0 0.0
        %1403 = vmatpush1.xpose.msra.mxu0 0.0
        %1404 = vmatprep.subr.mxu0 0.0
        %1405 = vmatpush1.xpose.msra.mxu0 0.0
        %1406 = vmatprep.subr.mxu0 0.0
        %1407 = vmatpush1.xpose.msra.mxu0 0.0
        %1408 = vmatprep.subr.mxu0 0.0
        %1409 = vmatpush1.xpose.msra.mxu0 0.0
        %1410 = vmatprep.subr.mxu0 0.0
        %1411 = vmatpush1.xpose.msra.mxu0 0.0
        %1412 = vmatprep.subr.mxu0 0.0
        %1413 = vmatpush1.xpose.msra.mxu0 0.0
        %1414 = vmatprep.subr.mxu0 0.0
        %1415 = vmatpush1.xpose.msra.mxu0 0.0
        %1416 = vmatprep.subr.mxu0 0.0
        %1417 = vmatpush1.xpose.msra.mxu0 0.0
        %1418 = vmatprep.subr.mxu0 0.0
        %1419 = vmatpush1.xpose.msra.mxu0 0.0
        %1420 = vmatprep.subr.mxu0 0.0
        %1421 = vmatpush1.xpose.msra.mxu0 0.0
        %1422 = vmatprep.subr.mxu0 0.0
        %1423 = vmatpush1.xpose.msra.mxu0 0.0
        %1424 = vmatprep.subr.mxu0 0.0
        %1425 = vmatpush1.xpose.msra.mxu0 0.0
        %1426 = vmatprep.subr.mxu0 0.0
        %1427 = vmatpush1.xpose.msra.mxu0 0.0
        %1428 = vmatprep.subr.mxu0 0.0
        %1429 = vmatpush1.xpose.msra.mxu0 0.0
        %1430 = vmatprep.subr.mxu0 0.0
        %1431 = vmatpush1.xpose.msra.mxu0 %v1398
        %1432 = vmatprep.subr.mxu0 0.0
        %1433 = vmatpush2.xpose.msra.mxu0 0.0
        %1434 = vmatprep.subr.mxu0 0.0
        %1435 = vmatpush2.xpose.msra.mxu0 0.0
        %1436 = vmatprep.subr.mxu0 0.0
        %1437 = vmatpush2.xpose.msra.mxu0 0.0
        %1438 = vmatprep.subr.mxu0 0.0
        %1439 = vmatpush2.xpose.msra.mxu0 0.0
        %1440 = vmatprep.subr.mxu0 0.0
        %1441 = vmatpush2.xpose.msra.mxu0 0.0
        %1442 = vmatprep.subr.mxu0 0.0
        %1443 = vmatpush2.xpose.msra.mxu0 0.0
        %1444 = vmatprep.subr.mxu0 0.0
        %1445 = vmatpush2.xpose.msra.mxu0 0.0
        %1446 = vmatprep.subr.mxu0 0.0
        %1447 = vmatpush2.xpose.msra.mxu0 0.0
        %1448 = vmatprep.subr.mxu0 0.0
        %1449 = vmatpush2.xpose.msra.mxu0 0.0
        %1450 = vmatprep.subr.mxu0 0.0
        %1451 = vmatpush2.xpose.msra.mxu0 0.0
        %1452 = vmatprep.subr.mxu0 0.0
        %1453 = vmatpush2.xpose.msra.mxu0 0.0
        %1454 = vmatprep.subr.mxu0 0.0
        %1455 = vmatpush2.xpose.msra.mxu0 0.0
        %1456 = vmatprep.subr.mxu0 0.0
        %1457 = vmatpush2.xpose.msra.mxu0 0.0
        %1458 = vmatprep.subr.mxu0 0.0
        %1459 = vmatpush2.xpose.msra.mxu0 0.0
        %1460 = vmatprep.subr.mxu0 0.0
        %1461 = vmatpush2.xpose.msra.mxu0 0.0
        %1462 = vmatprep.subr.mxu0 0.0
        %1463 = vmatpush2.xpose.msra.mxu0 0.0
        %1464 = vmatprep.mubr.f32.mxu0 0.0
        %1465 = vmatmul.mubr.f32.gmra.mxu0 %v1396
        %v1466 = vpop.f32.mrf.mxu0
        %v1467 = vadd.f32 %v675, %v1466
        %v1468 = vpop.f32.mrf.mxu0
        %1469 = vdwg.mxu0
        %v1470 = vsel %vm680, %v1467, -inf
        %1471 = vmax.xlane.f32.xlu0 %v1470
        %v1472 = vpop.xlane.xlu0 %1471
        %v1473 = vsub.f32 %v1467, %v1472
        %v1474 = vmul.f32 %v1473, 1.442695
        %v1475 = vpow.pop %v1474
        %v1476 = vsel %vm680, %v1475, 0.0
        %1477 = vadd.xlane.f32.xlu0 %v1476
        %v1478 = vpop.xlane.xlu0 %1477
        %v1479 = vrcp.pop %v1478
        %v1480 = vmul.f32 %v1475, %v1479
        %1481 = vrot.lane.b32.xlu0 %v668, 40
        %v1482 = vpop.permute.xlu0 %1481
        %v1485 = vsel %vm680, %v1480, 0
        %1487 = vmatprep.subr.mxu0 0.0
        %1488 = vmatpush1.msra.mxu0 0.0
        %1489 = vmatprep.subr.mxu0 0.0
        %1490 = vmatpush1.msra.mxu0 0.0
        %1491 = vmatprep.subr.mxu0 0.0
        %1492 = vmatpush1.msra.mxu0 0.0
        %1493 = vmatprep.subr.mxu0 0.0
        %1494 = vmatpush1.msra.mxu0 0.0
        %1495 = vmatprep.subr.mxu0 0.0
        %1496 = vmatpush1.msra.mxu0 0.0
        %1497 = vmatprep.subr.mxu0 0.0
        %1498 = vmatpush1.msra.mxu0 0.0
        %1499 = vmatprep.subr.mxu0 0.0
        %1500 = vmatpush1.msra.mxu0 0.0
        %1501 = vmatprep.subr.mxu0 0.0
        %1502 = vmatpush1.msra.mxu0 0.0
        %1503 = vmatprep.subr.mxu0 0.0
        %1504 = vmatpush1.msra.mxu0 0.0
        %1505 = vmatprep.subr.mxu0 0.0
        %1506 = vmatpush1.msra.mxu0 0.0
        %1507 = vmatprep.subr.mxu0 0.0
        %1508 = vmatpush1.msra.mxu0 0.0
        %1509 = vmatprep.subr.mxu0 0.0
        %1510 = vmatpush1.msra.mxu0 0.0
        %1511 = vmatprep.subr.mxu0 0.0
        %1512 = vmatpush1.msra.mxu0 0.0
        %1513 = vmatprep.subr.mxu0 0.0
        %1514 = vmatpush1.msra.mxu0 0.0
        %1515 = vmatprep.subr.mxu0 0.0
        %1516 = vmatpush1.msra.mxu0 0.0
        %1517 = vmatprep.subr.mxu0 0.0
        %1518 = vmatpush1.msra.mxu0 %v1482
        %1519 = vmatprep.subr.mxu0 0.0
        %1520 = vmatpush2.msra.mxu0 0.0
        %1521 = vmatprep.subr.mxu0 0.0
        %1522 = vmatpush2.msra.mxu0 0.0
        %1523 = vmatprep.subr.mxu0 0.0
        %1524 = vmatpush2.msra.mxu0 0.0
        %1525 = vmatprep.subr.mxu0 0.0
        %1526 = vmatpush2.msra.mxu0 0.0
        %1527 = vmatprep.subr.mxu0 0.0
        %1528 = vmatpush2.msra.mxu0 0.0
        %1529 = vmatprep.subr.mxu0 0.0
        %1530 = vmatpush2.msra.mxu0 0.0
        %1531 = vmatprep.subr.mxu0 0.0
        %1532 = vmatpush2.msra.mxu0 0.0
        %1533 = vmatprep.subr.mxu0 0.0
        %1534 = vmatpush2.msra.mxu0 0.0
        %1535 = vmatprep.subr.mxu0 0.0
        %1536 = vmatpush2.msra.mxu0 0.0
        %1537 = vmatprep.subr.mxu0 0.0
        %1538 = vmatpush2.msra.mxu0 0.0
        %1539 = vmatprep.subr.mxu0 0.0
        %1540 = vmatpush2.msra.mxu0 0.0
        %1541 = vmatprep.subr.mxu0 0.0
        %1542 = vmatpush2.msra.mxu0 0.0
        %1543 = vmatprep.subr.mxu0 0.0
        %1544 = vmatpush2.msra.mxu0 0.0
        %1545 = vmatprep.subr.mxu0 0.0
        %1546 = vmatpush2.msra.mxu0 0.0
        %1547 = vmatprep.subr.mxu0 0.0
        %1548 = vmatpush2.msra.mxu0 0.0
        %1549 = vmatprep.subr.mxu0 0.0
        %1550 = vmatpush2.msra.mxu0 0.0
        %1551 = vmatprep.mubr.f32.mxu0 0.0
        %1552 = vmatmul.mubr.f32.gmra.mxu0 %v1485
        %v1553 = vpop.f32.mrf.mxu0
        %v1554 = vadd.f32 0.0, %v1553
        %v1555 = vpop.f32.mrf.mxu0
        %1556 = vdwg.mxu0
        %v1558 = vsel %vm680, %v1554, 0
        %1560 = vmatprep.subr.mxu0 0.0
        %1561 = vmatpush1.msra.mxu0 0.0
        %1562 = vmatprep.subr.mxu0 0.0
        %1563 = vmatpush1.msra.mxu0 0.0
        %1564 = vmatprep.subr.mxu0 0.0
        %1565 = vmatpush1.msra.mxu0 0.0
        %1566 = vmatprep.subr.mxu0 0.0
        %1567 = vmatpush1.msra.mxu0 0.0
        %1568 = vmatprep.subr.mxu0 0.0
        %1569 = vmatpush1.msra.mxu0 0.0
        %1570 = vmatprep.subr.mxu0 0.0
        %1571 = vmatpush1.msra.mxu0 0.0
        %1572 = vmatprep.subr.mxu0 0.0
        %1573 = vmatpush1.msra.mxu0 0.0
        %1574 = vmatprep.subr.mxu0 0.0
        %1575 = vmatpush1.msra.mxu0 0.0
        %1576 = vmatprep.subr.mxu0 0.0
        %1577 = vmatpush1.msra.mxu0 0.0
        %1578 = vmatprep.subr.mxu0 0.0
        %1579 = vmatpush1.msra.mxu0 0.0
        %1580 = vmatprep.subr.mxu0 0.0
        %1581 = vmatpush1.msra.mxu0 0.0
        %1582 = vmatprep.subr.mxu0 0.0
        %1583 = vmatpush1.msra.mxu0 0.0
        %1584 = vmatprep.subr.mxu0 0.0
        %1585 = vmatpush1.msra.mxu0 0.0
        %1586 = vmatprep.subr.mxu0 0.0
        %1587 = vmatpush1.msra.mxu0 0.0
        %1588 = vmatprep.subr.mxu0 0.0
        %1589 = vmatpush1.msra.mxu0 0.0
        %1590 = vmatprep.subr.mxu0 0.0
        %1591 = vmatpush1.msra.mxu0 %v572
        %1592 = vmatprep.subr.mxu0 0.0
        %1593 = vmatpush2.msra.mxu0 0.0
        %1594 = vmatprep.subr.mxu0 0.0
        %1595 = vmatpush2.msra.mxu0 0.0
        %1596 = vmatprep.subr.mxu0 0.0
        %1597 = vmatpush2.msra.mxu0 0.0
        %1598 = vmatprep.subr.mxu0 0.0
        %1599 = vmatpush2.msra.mxu0 0.0
        %1600 = vmatprep.subr.mxu0 0.0
        %1601 = vmatpush2.msra.mxu0 0.0
        %1602 = vmatprep.subr.mxu0 0.0
        %1603 = vmatpush2.msra.mxu0 0.0
        %1604 = vmatprep.subr.mxu0 0.0
        %1605 = vmatpush2.msra.mxu0 0.0
        %1606 = vmatprep.subr.mxu0 0.0
        %1607 = vmatpush2.msra.mxu0 0.0
        %1608 = vmatprep.subr.mxu0 0.0
        %1609 = vmatpush2.msra.mxu0 0.0
        %1610 = vmatprep.subr.mxu0 0.0
        %1611 = vmatpush2.msra.mxu0 0.0
        %1612 = vmatprep.subr.mxu0 0.0
        %1613 = vmatpush2.msra.mxu0 0.0
        %1614 = vmatprep.subr.mxu0 0.0
        %1615 = vmatpush2.msra.mxu0 0.0
        %1616 = vmatprep.subr.mxu0 0.0
        %1617 = vmatpush2.msra.mxu0 0.0
        %1618 = vmatprep.subr.mxu0 0.0
        %1619 = vmatpush2.msra.mxu0 0.0
        %1620 = vmatprep.subr.mxu0 0.0
        %1621 = vmatpush2.msra.mxu0 0.0
        %1622 = vmatprep.subr.mxu0 0.0
        %1623 = vmatpush2.msra.mxu0 0.0
        %1624 = vmatprep.mubr.f32.mxu0 0.0
        %1625 = vmatmul.mubr.f32.gmra.mxu0 %v1558
        %v1626 = vpop.f32.mrf.mxu0
        %v1627 = vadd.f32 0.0, %v1626
        %v1628 = vpop.f32.mrf.mxu0
        %1629 = vdwg.mxu0
        %v1630 = vadd.f32 %v1391, %v1627
        %v1632 = vlaneseq
        %v1633 = vshrl.u32 %v1632, 7
        %v1634 = vsub.s32 0, %v1633
        %v1635 = vrot.slane %v573, %v1634
        %v1637 = vadd.f32 %v1630, %v1635
        %v1638 = vadd.f32 %v563, %v1637
        %v1639 = vsel %vm535, %v1638, 0.0
        %1640 = vadd.xlane.f32.xlu0 %v1639
        %v1641 = vpop.xlane.xlu0 %1640
        %v1642 = vmul.f32 %v1641, %v539
        %v1643 = vsub.f32 %v1638, %v1642
        %v1644 = vmul.f32 %v1643, %v1643
        %v1645 = vsel %vm535, %v1644, 0.0
        %1646 = vadd.xlane.f32.xlu0 %v1645
        %v1647 = vpop.xlane.xlu0 %1646
        %v1648 = vmul.f32 %v1647, %v539
        %v1649 = vadd.f32 %v1648, 1e-05
        %v1650 = vrsqrt.pop %v1649
        %v1651 = vmul.f32 %v1643, %v1650
        %v1653 = vlaneseq
        %v1654 = vshrl.u32 %v1653, 7
        %v1655 = vsub.s32 0, %v1654
        %v1656 = vrot.slane %v574, %v1655
        %v1658 = vmul.f32 %v1651, %v1656
        %v1660 = vlaneseq
        %v1661 = vshrl.u32 %v1660, 7
        %v1662 = vsub.s32 0, %v1661
        %v1663 = vrot.slane %v575, %v1662
        %v1665 = vadd.f32 %v1658, %v1663
        %v1667 = vlaneseq
        %v1668 = vshrl.u32 %v1667, 7
        %v1669 = vsub.s32 0, %v1668
        %v1670 = vrot.slane %v580, %v1669
        %v1673 = vsel %vm535, %v1665, 0
        %1675 = vmatprep.subr.mxu0 0.0
        %1676 = vmatpush1.msra.mxu0 0.0
        %1677 = vmatprep.subr.mxu0 0.0
        %1678 = vmatpush1.msra.mxu0 0.0
        %1679 = vmatprep.subr.mxu0 0.0
        %1680 = vmatpush1.msra.mxu0 0.0
        %1681 = vmatprep.subr.mxu0 0.0
        %1682 = vmatpush1.msra.mxu0 0.0
        %1683 = vmatprep.subr.mxu0 0.0
        %1684 = vmatpush1.msra.mxu0 0.0
        %1685 = vmatprep.subr.mxu0 0.0
        %1686 = vmatpush1.msra.mxu0 0.0
        %1687 = vmatprep.subr.mxu0 0.0
        %1688 = vmatpush1.msra.mxu0 0.0
        %1689 = vmatprep.subr.mxu0 0.0
        %1690 = vmatpush1.msra.mxu0 0.0
        %1691 = vmatprep.subr.mxu0 0.0
        %1692 = vmatpush1.msra.mxu0 0.0
        %1693 = vmatprep.subr.mxu0 0.0
        %1694 = vmatpush1.msra.mxu0 0.0
        %1695 = vmatprep.subr.mxu0 0.0
        %1696 = vmatpush1.msra.mxu0 0.0
        %1697 = vmatprep.subr.mxu0 0.0
        %1698 = vmatpush1.msra.mxu0 0.0
        %1699 = vmatprep.subr.mxu0 0.0
        %1700 = vmatpush1.msra.mxu0 %v579
        %1701 = vmatprep.subr.mxu0 0.0
        %1702 = vmatpush1.msra.mxu0 %v578
        %1703 = vmatprep.subr.mxu0 0.0
        %1704 = vmatpush1.msra.mxu0 %v577
        %1705 = vmatprep.subr.mxu0 0.0
        %1706 = vmatpush1.msra.mxu0 %v576
        %1707 = vmatprep.subr.mxu0 0.0
        %1708 = vmatpush2.msra.mxu0 0.0
        %1709 = vmatprep.subr.mxu0 0.0
        %1710 = vmatpush2.msra.mxu0 0.0
        %1711 = vmatprep.subr.mxu0 0.0
        %1712 = vmatpush2.msra.mxu0 0.0
        %1713 = vmatprep.subr.mxu0 0.0
        %1714 = vmatpush2.msra.mxu0 0.0
        %1715 = vmatprep.subr.mxu0 0.0
        %1716 = vmatpush2.msra.mxu0 0.0
        %1717 = vmatprep.subr.mxu0 0.0
        %1718 = vmatpush2.msra.mxu0 0.0
        %1719 = vmatprep.subr.mxu0 0.0
        %1720 = vmatpush2.msra.mxu0 0.0
        %1721 = vmatprep.subr.mxu0 0.0
        %1722 = vmatpush2.msra.mxu0 0.0
        %1723 = vmatprep.subr.mxu0 0.0
        %1724 = vmatpush2.msra.mxu0 0.0
        %1725 = vmatprep.subr.mxu0 0.0
        %1726 = vmatpush2.msra.mxu0 0.0
        %1727 = vmatprep.subr.mxu0 0.0
        %1728 = vmatpush2.msra.mxu0 0.0
        %1729 = vmatprep.subr.mxu0 0.0
        %1730 = vmatpush2.msra.mxu0 0.0
        %1731 = vmatprep.subr.mxu0 0.0
        %1732 = vmatpush2.msra.mxu0 0.0
        %1733 = vmatprep.subr.mxu0 0.0
        %1734 = vmatpush2.msra.mxu0 0.0
        %1735 = vmatprep.subr.mxu0 0.0
        %1736 = vmatpush2.msra.mxu0 0.0
        %1737 = vmatprep.subr.mxu0 0.0
        %1738 = vmatpush2.msra.mxu0 0.0
        %1739 = vmatprep.mubr.f32.mxu0 0.0
        %1740 = vmatmul.mubr.f32.gmra.mxu0 %v1673
        %v1741 = vpop.f32.mrf.mxu0
        %v1742 = vadd.f32 %v1670, %v1741
        %v1743 = vpop.f32.mrf.mxu0
        %1744 = vdwg.mxu0
        %v1745 = vmul.f32 %v1742, %v1742
        %v1746 = vmul.f32 %v1742, %v1745
        %v1747 = vmul.f32 %v1746, 0.044715
        %v1748 = vadd.f32 %v1742, %v1747
        %v1749 = vmul.f32 %v1748, 0.7978846
        %v1750 = vtanh.pop %v1749
        %v1751 = vadd.f32 %v1750, 1.0
        %v1752 = vmul.f32 %v1751, 0.5
        %v1753 = vmul.f32 %v1742, %v1752
        %v1755 = vlaneseq
        %v1756 = vshrl.u32 %v1755, 7
        %v1757 = vsub.s32 0, %v1756
        %v1758 = vrot.slane %v589, %v1757
        %vm1760 = vcmask 523264
        %v1762 = vsel %vm1760, %v1753, 0
        %1764 = vmatprep.subr.mxu0 0.0
        %1765 = vmatpush1.msra.mxu0 0.0
        %1766 = vmatprep.subr.mxu0 0.0
        %1767 = vmatpush1.msra.mxu0 0.0
        %1768 = vmatprep.subr.mxu0 0.0
        %1769 = vmatpush1.msra.mxu0 0.0
        %1770 = vmatprep.subr.mxu0 0.0
        %1771 = vmatpush1.msra.mxu0 0.0
        %1772 = vmatprep.subr.mxu0 0.0
        %1773 = vmatpush1.msra.mxu0 0.0
        %1774 = vmatprep.subr.mxu0 0.0
        %1775 = vmatpush1.msra.mxu0 0.0
        %1776 = vmatprep.subr.mxu0 0.0
        %1777 = vmatpush1.msra.mxu0 0.0
        %1778 = vmatprep.subr.mxu0 0.0
        %1779 = vmatpush1.msra.mxu0 0.0
        %1780 = vmatprep.subr.mxu0 0.0
        %1781 = vmatpush1.msra.mxu0 %v588
        %1782 = vmatprep.subr.mxu0 0.0
        %1783 = vmatpush1.msra.mxu0 %v587
        %1784 = vmatprep.subr.mxu0 0.0
        %1785 = vmatpush1.msra.mxu0 %v586
        %1786 = vmatprep.subr.mxu0 0.0
        %1787 = vmatpush1.msra.mxu0 %v585
        %1788 = vmatprep.subr.mxu0 0.0
        %1789 = vmatpush1.msra.mxu0 %v584
        %1790 = vmatprep.subr.mxu0 0.0
        %1791 = vmatpush1.msra.mxu0 %v583
        %1792 = vmatprep.subr.mxu0 0.0
        %1793 = vmatpush1.msra.mxu0 %v582
        %1794 = vmatprep.subr.mxu0 0.0
        %1795 = vmatpush1.msra.mxu0 %v581
        %1796 = vmatprep.subr.mxu0 0.0
        %1797 = vmatpush2.msra.mxu0 0.0
        %1798 = vmatprep.subr.mxu0 0.0
        %1799 = vmatpush2.msra.mxu0 0.0
        %1800 = vmatprep.subr.mxu0 0.0
        %1801 = vmatpush2.msra.mxu0 0.0
        %1802 = vmatprep.subr.mxu0 0.0
        %1803 = vmatpush2.msra.mxu0 0.0
        %1804 = vmatprep.subr.mxu0 0.0
        %1805 = vmatpush2.msra.mxu0 0.0
        %1806 = vmatprep.subr.mxu0 0.0
        %1807 = vmatpush2.msra.mxu0 0.0
        %1808 = vmatprep.subr.mxu0 0.0
        %1809 = vmatpush2.msra.mxu0 0.0
        %1810 = vmatprep.subr.mxu0 0.0
        %1811 = vmatpush2.msra.mxu0 0.0
        %1812 = vmatprep.subr.mxu0 0.0
        %1813 = vmatpush2.msra.mxu0 0.0
        %1814 = vmatprep.subr.mxu0 0.0
        %1815 = vmatpush2.msra.mxu0 0.0
        %1816 = vmatprep.subr.mxu0 0.0
        %1817 = vmatpush2.msra.mxu0 0.0
        %1818 = vmatprep.subr.mxu0 0.0
        %1819 = vmatpush2.msra.mxu0 0.0
        %1820 = vmatprep.subr.mxu0 0.0
        %1821 = vmatpush2.msra.mxu0 0.0
        %1822 = vmatprep.subr.mxu0 0.0
        %1823 = vmatpush2.msra.mxu0 0.0
        %1824 = vmatprep.subr.mxu0 0.0
        %1825 = vmatpush2.msra.mxu0 0.0
        %1826 = vmatprep.subr.mxu0 0.0
        %1827 = vmatpush2.msra.mxu0 0.0
        %1828 = vmatprep.mubr.f32.mxu0 0.0
        %1829 = vmatmul.mubr.f32.gmra.mxu0 %v1762
        %v1830 = vpop.f32.mrf.mxu0
        %v1831 = vadd.f32 %v1758, %v1830
        %v1832 = vpop.f32.mrf.mxu0
        %1833 = vdwg.mxu0
        %v1834 = vadd.f32 %v1665, %v1831
        %v1835 = vsel %vm535, %v1834, 0.0
        %1836 = vadd.xlane.f32.xlu0 %v1835
        %v1837 = vpop.xlane.xlu0 %1836
        %v1838 = vmul.f32 %v1837, %v539
        %v1839 = vsub.f32 %v1834, %v1838
        %v1840 = vmul.f32 %v1839, %v1839
        %v1841 = vsel %vm535, %v1840, 0.0
        %1842 = vadd.xlane.f32.xlu0 %v1841
        %v1843 = vpop.xlane.xlu0 %1842
        %v1844 = vmul.f32 %v1843, %v539
        %v1845 = vadd.f32 %v1844, 1e-05
        %v1846 = vrsqrt.pop %v1845
        %v1847 = vmul.f32 %v1839, %v1846
        %v1849 = vlaneseq
        %v1850 = vshrl.u32 %v1849, 7
        %v1851 = vsub.s32 0, %v1850
        %v1852 = vrot.slane %v590, %v1851
        %v1854 = vmul.f32 %v1847, %v1852
        %v1856 = vlaneseq
        %v1857 = vshrl.u32 %v1856, 7
        %v1858 = vsub.s32 0, %v1857
        %v1859 = vrot.slane %v591, %v1858
        %v1861 = vadd.f32 %v1854, %v1859
        %s1862 = scalar_lea.vmem %s4, 32
        %v1863 = vld [vmem:[%s1862] sm:$0xff]
        %v1864 = vld [vmem:[%s1862 + $0x8] sm:$0xff]
        %v1865 = vld [vmem:[%s1862 + $0x10] sm:$0xff]
        %v1866 = vld [vmem:[%s1862 + $0x18] sm:$0xff]
        %s1867 = scalar_lea.vmem %s5, 1
        %v1868 = vld [vmem:[%s1867] sm:$0x1]
        %s1869 = scalar_lea.vmem %s6, 32
        %v1870 = vld [vmem:[%s1869] sm:$0xff]
        %v1871 = vld [vmem:[%s1869 + $0x8] sm:$0xff]
        %v1872 = vld [vmem:[%s1869 + $0x10] sm:$0xff]
        %v1873 = vld [vmem:[%s1869 + $0x18] sm:$0xff]
        %s1874 = scalar_lea.vmem %s7, 1
        %v1875 = vld [vmem:[%s1874] sm:$0x1]
        %s1876 = scalar_lea.vmem %s8, 1
        %v1877 = vld [vmem:[%s1876] sm:$0x1]
        %s1878 = scalar_lea.vmem %s9, 1
        %v1879 = vld [vmem:[%s1878] sm:$0x1]
        %s1880 = scalar_lea.vmem %s10, 32
        %v1881 = vld [vmem:[%s1880] sm:$0xff]
        %v1882 = vld [vmem:[%s1880 + $0x8] sm:$0xff]
        %v1883 = vld [vmem:[%s1880 + $0x10] sm:$0xff]
        %v1884 = vld [vmem:[%s1880 + $0x18] sm:$0xff]
        %s1885 = scalar_lea.vmem %s11, 1
        %v1886 = vld [vmem:[%s1885] sm:$0x1]
        %s1887 = scalar_lea.vmem %s12, 64
        %v1888 = vld [vmem:[%s1887] sm:$0xff]
        %v1889 = vld [vmem:[%s1887 + $0x8] sm:$0xff]
        %v1890 = vld [vmem:[%s1887 + $0x10] sm:$0xff]
        %v1891 = vld [vmem:[%s1887 + $0x18] sm:$0xff]
        %v1892 = vld [vmem:[%s1887 + $0x20] sm:$0xff]
        %v1893 = vld [vmem:[%s1887 + $0x28] sm:$0xff]
        %v1894 = vld [vmem:[%s1887 + $0x30] sm:$0xff]
        %v1895 = vld [vmem:[%s1887 + $0x38] sm:$0xff]
        %s1896 = scalar_lea.vmem %s13, 1
        %v1897 = vld [vmem:[%s1896] sm:$0x1]
        %s1898 = scalar_lea.vmem %s14, 1
        %v1899 = vld [vmem:[%s1898] sm:$0x1]
        %s1900 = scalar_lea.vmem %s15, 1
        %v1901 = vld [vmem:[%s1900] sm:$0x1]
        %v1903 = vlaneseq
        %v1904 = vshrl.u32 %v1903, 7
        %v1905 = vsub.s32 0, %v1904
        %v1906 = vrot.slane %v1868, %v1905
        %v1909 = vsel %vm535, %v1861, 0
        %1911 = vmatprep.subr.mxu0 0.0
        %1912 = vmatpush1.msra.mxu0 0.0
        %1913 = vmatprep.subr.mxu0 0.0
        %1914 = vmatpush1.msra.mxu0 0.0
        %1915 = vmatprep.subr.mxu0 0.0
        %1916 = vmatpush1.msra.mxu0 0.0
        %1917 = vmatprep.subr.mxu0 0.0
        %1918 = vmatpush1.msra.mxu0 0.0
        %1919 = vmatprep.subr.mxu0 0.0
        %1920 = vmatpush1.msra.mxu0 0.0
        %1921 = vmatprep.subr.mxu0 0.0
        %1922 = vmatpush1.msra.mxu0 0.0
        %1923 = vmatprep.subr.mxu0 0.0
        %1924 = vmatpush1.msra.mxu0 0.0
        %1925 = vmatprep.subr.mxu0 0.0
        %1926 = vmatpush1.msra.mxu0 0.0
        %1927 = vmatprep.subr.mxu0 0.0
        %1928 = vmatpush1.msra.mxu0 0.0
        %1929 = vmatprep.subr.mxu0 0.0
        %1930 = vmatpush1.msra.mxu0 0.0
        %1931 = vmatprep.subr.mxu0 0.0
        %1932 = vmatpush1.msra.mxu0 0.0
        %1933 = vmatprep.subr.mxu0 0.0
        %1934 = vmatpush1.msra.mxu0 0.0
        %1935 = vmatprep.subr.mxu0 0.0
        %1936 = vmatpush1.msra.mxu0 %v1866
        %1937 = vmatprep.subr.mxu0 0.0
        %1938 = vmatpush1.msra.mxu0 %v1865
        %1939 = vmatprep.subr.mxu0 0.0
        %1940 = vmatpush1.msra.mxu0 %v1864
        %1941 = vmatprep.subr.mxu0 0.0
        %1942 = vmatpush1.msra.mxu0 %v1863
        %1943 = vmatprep.subr.mxu0 0.0
        %1944 = vmatpush2.msra.mxu0 0.0
        %1945 = vmatprep.subr.mxu0 0.0
        %1946 = vmatpush2.msra.mxu0 0.0
        %1947 = vmatprep.subr.mxu0 0.0
        %1948 = vmatpush2.msra.mxu0 0.0
        %1949 = vmatprep.subr.mxu0 0.0
        %1950 = vmatpush2.msra.mxu0 0.0
        %1951 = vmatprep.subr.mxu0 0.0
        %1952 = vmatpush2.msra.mxu0 0.0
        %1953 = vmatprep.subr.mxu0 0.0
        %1954 = vmatpush2.msra.mxu0 0.0
        %1955 = vmatprep.subr.mxu0 0.0
        %1956 = vmatpush2.msra.mxu0 0.0
        %1957 = vmatprep.subr.mxu0 0.0
        %1958 = vmatpush2.msra.mxu0 0.0
        %1959 = vmatprep.subr.mxu0 0.0
        %1960 = vmatpush2.msra.mxu0 0.0
        %1961 = vmatprep.subr.mxu0 0.0
        %1962 = vmatpush2.msra.mxu0 0.0
        %1963 = vmatprep.subr.mxu0 0.0
        %1964 = vmatpush2.msra.mxu0 0.0
        %1965 = vmatprep.subr.mxu0 0.0
        %1966 = vmatpush2.msra.mxu0 0.0
        %1967 = vmatprep.subr.mxu0 0.0
        %1968 = vmatpush2.msra.mxu0 0.0
        %1969 = vmatprep.subr.mxu0 0.0
        %1970 = vmatpush2.msra.mxu0 0.0
        %1971 = vmatprep.subr.mxu0 0.0
        %1972 = vmatpush2.msra.mxu0 0.0
        %1973 = vmatprep.subr.mxu0 0.0
        %1974 = vmatpush2.msra.mxu0 0.0
        %1975 = vmatprep.mubr.f32.mxu0 0.0
        %1976 = vmatmul.mubr.f32.gmra.mxu0 %v1909
        %v1977 = vpop.f32.mrf.mxu0
        %v1978 = vadd.f32 %v1906, %v1977
        %v1979 = vpop.f32.mrf.mxu0
        %1980 = vdwg.mxu0
        %1982 = vrot.lane.b32.xlu0 %v1978, 96
        %v1983 = vpop.permute.xlu0 %1982
        %v1984 = vsel %vm680, %v1978, 0
        %v1986 = vsel %vm680, %v1983, 0
        %1988 = vmatprep.subr.mxu0 0.0
        %1989 = vmatpush1.xpose.msra.mxu0 0.0
        %1990 = vmatprep.subr.mxu0 0.0
        %1991 = vmatpush1.xpose.msra.mxu0 0.0
        %1992 = vmatprep.subr.mxu0 0.0
        %1993 = vmatpush1.xpose.msra.mxu0 0.0
        %1994 = vmatprep.subr.mxu0 0.0
        %1995 = vmatpush1.xpose.msra.mxu0 0.0
        %1996 = vmatprep.subr.mxu0 0.0
        %1997 = vmatpush1.xpose.msra.mxu0 0.0
        %1998 = vmatprep.subr.mxu0 0.0
        %1999 = vmatpush1.xpose.msra.mxu0 0.0
        %2000 = vmatprep.subr.mxu0 0.0
        %2001 = vmatpush1.xpose.msra.mxu0 0.0
        %2002 = vmatprep.subr.mxu0 0.0
        %2003 = vmatpush1.xpose.msra.mxu0 0.0
        %2004 = vmatprep.subr.mxu0 0.0
        %2005 = vmatpush1.xpose.msra.mxu0 0.0
        %2006 = vmatprep.subr.mxu0 0.0
        %2007 = vmatpush1.xpose.msra.mxu0 0.0
        %2008 = vmatprep.subr.mxu0 0.0
        %2009 = vmatpush1.xpose.msra.mxu0 0.0
        %2010 = vmatprep.subr.mxu0 0.0
        %2011 = vmatpush1.xpose.msra.mxu0 0.0
        %2012 = vmatprep.subr.mxu0 0.0
        %2013 = vmatpush1.xpose.msra.mxu0 0.0
        %2014 = vmatprep.subr.mxu0 0.0
        %2015 = vmatpush1.xpose.msra.mxu0 0.0
        %2016 = vmatprep.subr.mxu0 0.0
        %2017 = vmatpush1.xpose.msra.mxu0 0.0
        %2018 = vmatprep.subr.mxu0 0.0
        %2019 = vmatpush1.xpose.msra.mxu0 %v1986
        %2020 = vmatprep.subr.mxu0 0.0
        %2021 = vmatpush2.xpose.msra.mxu0 0.0
        %2022 = vmatprep.subr.mxu0 0.0
        %2023 = vmatpush2.xpose.msra.mxu0 0.0
        %2024 = vmatprep.subr.mxu0 0.0
        %2025 = vmatpush2.xpose.msra.mxu0 0.0
        %2026 = vmatprep.subr.mxu0 0.0
        %2027 = vmatpush2.xpose.msra.mxu0 0.0
        %2028 = vmatprep.subr.mxu0 0.0
        %2029 = vmatpush2.xpose.msra.mxu0 0.0
        %2030 = vmatprep.subr.mxu0 0.0
        %2031 = vmatpush2.xpose.msra.mxu0 0.0
        %2032 = vmatprep.subr.mxu0 0.0
        %2033 = vmatpush2.xpose.msra.mxu0 0.0
        %2034 = vmatprep.subr.mxu0 0.0
        %2035 = vmatpush2.xpose.msra.mxu0 0.0
        %2036 = vmatprep.subr.mxu0 0.0
        %2037 = vmatpush2.xpose.msra.mxu0 0.0
        %2038 = vmatprep.subr.mxu0 0.0
        %2039 = vmatpush2.xpose.msra.mxu0 0.0
        %2040 = vmatprep.subr.mxu0 0.0
        %2041 = vmatpush2.xpose.msra.mxu0 0.0
        %2042 = vmatprep.subr.mxu0 0.0
        %2043 = vmatpush2.xpose.msra.mxu0 0.0
        %2044 = vmatprep.subr.mxu0 0.0
        %2045 = vmatpush2.xpose.msra.mxu0 0.0
        %2046 = vmatprep.subr.mxu0 0.0
        %2047 = vmatpush2.xpose.msra.mxu0 0.0
        %2048 = vmatprep.subr.mxu0 0.0
        %2049 = vmatpush2.xpose.msra.mxu0 0.0
        %2050 = vmatprep.subr.mxu0 0.0
        %2051 = vmatpush2.xpose.msra.mxu0 0.0
        %2052 = vmatprep.mubr.f32.mxu0 0.0
        %2053 = vmatmul.mubr.f32.gmra.mxu0 %v1984
        %v2054 = vpop.f32.mrf.mxu0
        %v2055 = vadd.f32 %v675, %v2054
        %v2056 = vpop.f32.mrf.mxu0
        %2057 = vdwg.mxu0
        %v2058 = vsel %vm680, %v2055, -inf
        %2059 = vmax.xlane.f32.xlu0 %v2058
        %v2060 = vpop.xlane.xlu0 %2059
        %v2061 = vsub.f32 %v2055, %v2060
        %v2062 = vmul.f32 %v2061, 1.442695
        %v2063 = vpow.pop %v2062
        %v2064 = vsel %vm680, %v2063, 0.0
        %2065 = vadd.xlane.f32.xlu0 %v2064
        %v2066 = vpop.xlane.xlu0 %2065
        %v2067 = vrcp.pop %v2066
        %v2068 = vmul.f32 %v2063, %v2067
        %2069 = vrot.lane.b32.xlu0 %v1978, 64
        %v2070 = vpop.permute.xlu0 %2069
        %v2073 = vsel %vm680, %v2068, 0
        %2075 = vmatprep.subr.mxu0 0.0
        %2076 = vmatpush1.msra.mxu0 0.0
        %2077 = vmatprep.subr.mxu0 0.0
        %2078 = vmatpush1.msra.mxu0 0.0
        %2079 = vmatprep.subr.mxu0 0.0
        %2080 = vmatpush1.msra.mxu0 0.0
        %2081 = vmatprep.subr.mxu0 0.0
        %2082 = vmatpush1.msra.mxu0 0.0
        %2083 = vmatprep.subr.mxu0 0.0
        %2084 = vmatpush1.msra.mxu0 0.0
        %2085 = vmatprep.subr.mxu0 0.0
        %2086 = vmatpush1.msra.mxu0 0.0
        %2087 = vmatprep.subr.mxu0 0.0
        %2088 = vmatpush1.msra.mxu0 0.0
        %2089 = vmatprep.subr.mxu0 0.0
        %2090 = vmatpush1.msra.mxu0 0.0
        %2091 = vmatprep.subr.mxu0 0.0
        %2092 = vmatpush1.msra.mxu0 0.0
        %2093 = vmatprep.subr.mxu0 0.0
        %2094 = vmatpush1.msra.mxu0 0.0
        %2095 = vmatprep.subr.mxu0 0.0
        %2096 = vmatpush1.msra.mxu0 0.0
        %2097 = vmatprep.subr.mxu0 0.0
        %2098 = vmatpush1.msra.mxu0 0.0
        %2099 = vmatprep.subr.mxu0 0.0
        %2100 = vmatpush1.msra.mxu0 0.0
        %2101 = vmatprep.subr.mxu0 0.0
        %2102 = vmatpush1.msra.mxu0 0.0
        %2103 = vmatprep.subr.mxu0 0.0
        %2104 = vmatpush1.msra.mxu0 0.0
        %2105 = vmatprep.subr.mxu0 0.0
        %2106 = vmatpush1.msra.mxu0 %v2070
        %2107 = vmatprep.subr.mxu0 0.0
        %2108 = vmatpush2.msra.mxu0 0.0
        %2109 = vmatprep.subr.mxu0 0.0
        %2110 = vmatpush2.msra.mxu0 0.0
        %2111 = vmatprep.subr.mxu0 0.0
        %2112 = vmatpush2.msra.mxu0 0.0
        %2113 = vmatprep.subr.mxu0 0.0
        %2114 = vmatpush2.msra.mxu0 0.0
        %2115 = vmatprep.subr.mxu0 0.0
        %2116 = vmatpush2.msra.mxu0 0.0
        %2117 = vmatprep.subr.mxu0 0.0
        %2118 = vmatpush2.msra.mxu0 0.0
        %2119 = vmatprep.subr.mxu0 0.0
        %2120 = vmatpush2.msra.mxu0 0.0
        %2121 = vmatprep.subr.mxu0 0.0
        %2122 = vmatpush2.msra.mxu0 0.0
        %2123 = vmatprep.subr.mxu0 0.0
        %2124 = vmatpush2.msra.mxu0 0.0
        %2125 = vmatprep.subr.mxu0 0.0
        %2126 = vmatpush2.msra.mxu0 0.0
        %2127 = vmatprep.subr.mxu0 0.0
        %2128 = vmatpush2.msra.mxu0 0.0
        %2129 = vmatprep.subr.mxu0 0.0
        %2130 = vmatpush2.msra.mxu0 0.0
        %2131 = vmatprep.subr.mxu0 0.0
        %2132 = vmatpush2.msra.mxu0 0.0
        %2133 = vmatprep.subr.mxu0 0.0
        %2134 = vmatpush2.msra.mxu0 0.0
        %2135 = vmatprep.subr.mxu0 0.0
        %2136 = vmatpush2.msra.mxu0 0.0
        %2137 = vmatprep.subr.mxu0 0.0
        %2138 = vmatpush2.msra.mxu0 0.0
        %2139 = vmatprep.mubr.f32.mxu0 0.0
        %2140 = vmatmul.mubr.f32.gmra.mxu0 %v2073
        %v2141 = vpop.f32.mrf.mxu0
        %v2142 = vadd.f32 0.0, %v2141
        %v2143 = vpop.f32.mrf.mxu0
        %2144 = vdwg.mxu0
        %2145 = vrot.lane.b32.xlu0 %v1978, 120
        %v2146 = vpop.permute.xlu0 %2145
        %2147 = vrot.lane.b32.xlu0 %v1978, 88
        %v2148 = vpop.permute.xlu0 %2147
        %v2149 = vsel %vm680, %v2146, 0
        %v2151 = vsel %vm680, %v2148, 0
        %2153 = vmatprep.subr.mxu0 0.0
        %2154 = vmatpush1.xpose.msra.mxu0 0.0
        %2155 = vmatprep.subr.mxu0 0.0
        %2156 = vmatpush1.xpose.msra.mxu0 0.0
        %2157 = vmatprep.subr.mxu0 0.0
        %2158 = vmatpush1.xpose.msra.mxu0 0.0
        %2159 = vmatprep.subr.mxu0 0.0
        %2160 = vmatpush1.xpose.msra.mxu0 0.0
        %2161 = vmatprep.subr.mxu0 0.0
        %2162 = vmatpush1.xpose.msra.mxu0 0.0
        %2163 = vmatprep.subr.mxu0 0.0
        %2164 = vmatpush1.xpose.msra.mxu0 0.0
        %2165 = vmatprep.subr.mxu0 0.0
        %2166 = vmatpush1.xpose.msra.mxu0 0.0
        %2167 = vmatprep.subr.mxu0 0.0
        %2168 = vmatpush1.xpose.msra.mxu0 0.0
        %2169 = vmatprep.subr.mxu0 0.0
        %2170 = vmatpush1.xpose.msra.mxu0 0.0
        %2171 = vmatprep.subr.mxu0 0.0
        %2172 = vmatpush1.xpose.msra.mxu0 0.0
        %2173 = vmatprep.subr.mxu0 0.0
        %2174 = vmatpush1.xpose.msra.mxu0 0.0
        %2175 = vmatprep.subr.mxu0 0.0
        %2176 = vmatpush1.xpose.msra.mxu0 0.0
        %2177 = vmatprep.subr.mxu0 0.0
        %2178 = vmatpush1.xpose.msra.mxu0 0.0
        %2179 = vmatprep.subr.mxu0 0.0
        %2180 = vmatpush1.xpose.msra.mxu0 0.0
        %2181 = vmatprep.subr.mxu0 0.0
        %2182 = vmatpush1.xpose.msra.mxu0 0.0
        %2183 = vmatprep.subr.mxu0 0.0
        %2184 = vmatpush1.xpose.msra.mxu0 %v2151
        %2185 = vmatprep.subr.mxu0 0.0
        %2186 = vmatpush2.xpose.msra.mxu0 0.0
        %2187 = vmatprep.subr.mxu0 0.0
        %2188 = vmatpush2.xpose.msra.mxu0 0.0
        %2189 = vmatprep.subr.mxu0 0.0
        %2190 = vmatpush2.xpose.msra.mxu0 0.0
        %2191 = vmatprep.subr.mxu0 0.0
        %2192 = vmatpush2.xpose.msra.mxu0 0.0
        %2193 = vmatprep.subr.mxu0 0.0
        %2194 = vmatpush2.xpose.msra.mxu0 0.0
        %2195 = vmatprep.subr.mxu0 0.0
        %2196 = vmatpush2.xpose.msra.mxu0 0.0
        %2197 = vmatprep.subr.mxu0 0.0
        %2198 = vmatpush2.xpose.msra.mxu0 0.0
        %2199 = vmatprep.subr.mxu0 0.0
        %2200 = vmatpush2.xpose.msra.mxu0 0.0
        %2201 = vmatprep.subr.mxu0 0.0
        %2202 = vmatpush2.xpose.msra.mxu0 0.0
        %2203 = vmatprep.subr.mxu0 0.0
        %2204 = vmatpush2.xpose.msra.mxu0 0.0
        %2205 = vmatprep.subr.mxu0 0.0
        %2206 = vmatpush2.xpose.msra.mxu0 0.0
        %2207 = vmatprep.subr.mxu0 0.0
        %2208 = vmatpush2.xpose.msra.mxu0 0.0
        %2209 = vmatprep.subr.mxu0 0.0
        %2210 = vmatpush2.xpose.msra.mxu0 0.0
        %2211 = vmatprep.subr.mxu0 0.0
        %2212 = vmatpush2.xpose.msra.mxu0 0.0
        %2213 = vmatprep.subr.mxu0 0.0
        %2214 = vmatpush2.xpose.msra.mxu0 0.0
        %2215 = vmatprep.subr.mxu0 0.0
        %2216 = vmatpush2.xpose.msra.mxu0 0.0
        %2217 = vmatprep.mubr.f32.mxu0 0.0
        %2218 = vmatmul.mubr.f32.gmra.mxu0 %v2149
        %v2219 = vpop.f32.mrf.mxu0
        %v2220 = vadd.f32 %v675, %v2219
        %v2221 = vpop.f32.mrf.mxu0
        %2222 = vdwg.mxu0
        %v2223 = vsel %vm680, %v2220, -inf
        %2224 = vmax.xlane.f32.xlu0 %v2223
        %v2225 = vpop.xlane.xlu0 %2224
        %v2226 = vsub.f32 %v2220, %v2225
        %v2227 = vmul.f32 %v2226, 1.442695
        %v2228 = vpow.pop %v2227
        %v2229 = vsel %vm680, %v2228, 0.0
        %2230 = vadd.xlane.f32.xlu0 %v2229
        %v2231 = vpop.xlane.xlu0 %2230
        %v2232 = vrcp.pop %v2231
        %v2233 = vmul.f32 %v2228, %v2232
        %2234 = vrot.lane.b32.xlu0 %v1978, 56
        %v2235 = vpop.permute.xlu0 %2234
        %v2238 = vsel %vm680, %v2233, 0
        %2240 = vmatprep.subr.mxu0 0.0
        %2241 = vmatpush1.msra.mxu0 0.0
        %2242 = vmatprep.subr.mxu0 0.0
        %2243 = vmatpush1.msra.mxu0 0.0
        %2244 = vmatprep.subr.mxu0 0.0
        %2245 = vmatpush1.msra.mxu0 0.0
        %2246 = vmatprep.subr.mxu0 0.0
        %2247 = vmatpush1.msra.mxu0 0.0
        %2248 = vmatprep.subr.mxu0 0.0
        %2249 = vmatpush1.msra.mxu0 0.0
        %2250 = vmatprep.subr.mxu0 0.0
        %2251 = vmatpush1.msra.mxu0 0.0
        %2252 = vmatprep.subr.mxu0 0.0
        %2253 = vmatpush1.msra.mxu0 0.0
        %2254 = vmatprep.subr.mxu0 0.0
        %2255 = vmatpush1.msra.mxu0 0.0
        %2256 = vmatprep.subr.mxu0 0.0
        %2257 = vmatpush1.msra.mxu0 0.0
        %2258 = vmatprep.subr.mxu0 0.0
        %2259 = vmatpush1.msra.mxu0 0.0
        %2260 = vmatprep.subr.mxu0 0.0
        %2261 = vmatpush1.msra.mxu0 0.0
        %2262 = vmatprep.subr.mxu0 0.0
        %2263 = vmatpush1.msra.mxu0 0.0
        %2264 = vmatprep.subr.mxu0 0.0
        %2265 = vmatpush1.msra.mxu0 0.0
        %2266 = vmatprep.subr.mxu0 0.0
        %2267 = vmatpush1.msra.mxu0 0.0
        %2268 = vmatprep.subr.mxu0 0.0
        %2269 = vmatpush1.msra.mxu0 0.0
        %2270 = vmatprep.subr.mxu0 0.0
        %2271 = vmatpush1.msra.mxu0 %v2235
        %2272 = vmatprep.subr.mxu0 0.0
        %2273 = vmatpush2.msra.mxu0 0.0
        %2274 = vmatprep.subr.mxu0 0.0
        %2275 = vmatpush2.msra.mxu0 0.0
        %2276 = vmatprep.subr.mxu0 0.0
        %2277 = vmatpush2.msra.mxu0 0.0
        %2278 = vmatprep.subr.mxu0 0.0
        %2279 = vmatpush2.msra.mxu0 0.0
        %2280 = vmatprep.subr.mxu0 0.0
        %2281 = vmatpush2.msra.mxu0 0.0
        %2282 = vmatprep.subr.mxu0 0.0
        %2283 = vmatpush2.msra.mxu0 0.0
        %2284 = vmatprep.subr.mxu0 0.0
        %2285 = vmatpush2.msra.mxu0 0.0
        %2286 = vmatprep.subr.mxu0 0.0
        %2287 = vmatpush2.msra.mxu0 0.0
        %2288 = vmatprep.subr.mxu0 0.0
        %2289 = vmatpush2.msra.mxu0 0.0
        %2290 = vmatprep.subr.mxu0 0.0
        %2291 = vmatpush2.msra.mxu0 0.0
        %2292 = vmatprep.subr.mxu0 0.0
        %2293 = vmatpush2.msra.mxu0 0.0
        %2294 = vmatprep.subr.mxu0 0.0
        %2295 = vmatpush2.msra.mxu0 0.0
        %2296 = vmatprep.subr.mxu0 0.0
        %2297 = vmatpush2.msra.mxu0 0.0
        %2298 = vmatprep.subr.mxu0 0.0
        %2299 = vmatpush2.msra.mxu0 0.0
        %2300 = vmatprep.subr.mxu0 0.0
        %2301 = vmatpush2.msra.mxu0 0.0
        %2302 = vmatprep.subr.mxu0 0.0
        %2303 = vmatpush2.msra.mxu0 0.0
        %2304 = vmatprep.mubr.f32.mxu0 0.0
        %2305 = vmatmul.mubr.f32.gmra.mxu0 %v2238
        %v2306 = vpop.f32.mrf.mxu0
        %v2307 = vadd.f32 0.0, %v2306
        %v2308 = vpop.f32.mrf.mxu0
        %2309 = vdwg.mxu0
        %v2311 = vsel %vm680, %v2307, 0
        %2313 = vmatprep.subr.mxu0 0.0
        %2314 = vmatpush1.msra.mxu0 0.0
        %2315 = vmatprep.subr.mxu0 0.0
        %2316 = vmatpush1.msra.mxu0 0.0
        %2317 = vmatprep.subr.mxu0 0.0
        %2318 = vmatpush1.msra.mxu0 0.0
        %2319 = vmatprep.subr.mxu0 0.0
        %2320 = vmatpush1.msra.mxu0 0.0
        %2321 = vmatprep.subr.mxu0 0.0
        %2322 = vmatpush1.msra.mxu0 0.0
        %2323 = vmatprep.subr.mxu0 0.0
        %2324 = vmatpush1.msra.mxu0 0.0
        %2325 = vmatprep.subr.mxu0 0.0
        %2326 = vmatpush1.msra.mxu0 0.0
        %2327 = vmatprep.subr.mxu0 0.0
        %2328 = vmatpush1.msra.mxu0 0.0
        %2329 = vmatprep.subr.mxu0 0.0
        %2330 = vmatpush1.msra.mxu0 0.0
        %2331 = vmatprep.subr.mxu0 0.0
        %2332 = vmatpush1.msra.mxu0 0.0
        %2333 = vmatprep.subr.mxu0 0.0
        %2334 = vmatpush1.msra.mxu0 0.0
        %2335 = vmatprep.subr.mxu0 0.0
        %2336 = vmatpush1.msra.mxu0 0.0
        %2337 = vmatprep.subr.mxu0 0.0
        %2338 = vmatpush1.msra.mxu0 0.0
        %2339 = vmatprep.subr.mxu0 0.0
        %2340 = vmatpush1.msra.mxu0 0.0
        %2341 = vmatprep.subr.mxu0 0.0
        %2342 = vmatpush1.msra.mxu0 0.0
        %2343 = vmatprep.subr.mxu0 0.0
        %2344 = vmatpush1.msra.mxu0 %v1871
        %2345 = vmatprep.subr.mxu0 0.0
        %2346 = vmatpush2.msra.mxu0 0.0
        %2347 = vmatprep.subr.mxu0 0.0
        %2348 = vmatpush2.msra.mxu0 0.0
        %2349 = vmatprep.subr.mxu0 0.0
        %2350 = vmatpush2.msra.mxu0 0.0
        %2351 = vmatprep.subr.mxu0 0.0
        %2352 = vmatpush2.msra.mxu0 0.0
        %2353 = vmatprep.subr.mxu0 0.0
        %2354 = vmatpush2.msra.mxu0 0.0
        %2355 = vmatprep.subr.mxu0 0.0
        %2356 = vmatpush2.msra.mxu0 0.0
        %2357 = vmatprep.subr.mxu0 0.0
        %2358 = vmatpush2.msra.mxu0 0.0
        %2359 = vmatprep.subr.mxu0 0.0
        %2360 = vmatpush2.msra.mxu0 0.0
        %2361 = vmatprep.subr.mxu0 0.0
        %2362 = vmatpush2.msra.mxu0 0.0
        %2363 = vmatprep.subr.mxu0 0.0
        %2364 = vmatpush2.msra.mxu0 0.0
        %2365 = vmatprep.subr.mxu0 0.0
        %2366 = vmatpush2.msra.mxu0 0.0
        %2367 = vmatprep.subr.mxu0 0.0
        %2368 = vmatpush2.msra.mxu0 0.0
        %2369 = vmatprep.subr.mxu0 0.0
        %2370 = vmatpush2.msra.mxu0 0.0
        %2371 = vmatprep.subr.mxu0 0.0
        %2372 = vmatpush2.msra.mxu0 0.0
        %2373 = vmatprep.subr.mxu0 0.0
        %2374 = vmatpush2.msra.mxu0 0.0
        %2375 = vmatprep.subr.mxu0 0.0
        %2376 = vmatpush2.msra.mxu0 0.0
        %2377 = vmatprep.mubr.f32.mxu0 0.0
        %2378 = vmatmul.mubr.f32.gmra.mxu0 %v2311
        %v2379 = vpop.f32.mrf.mxu0
        %v2380 = vadd.f32 0.0, %v2379
        %v2381 = vpop.f32.mrf.mxu0
        %2382 = vdwg.mxu0
        %v2384 = vsel %vm680, %v2142, 0
        %2386 = vmatprep.subr.mxu0 0.0
        %2387 = vmatpush1.msra.mxu0 0.0
        %2388 = vmatprep.subr.mxu0 0.0
        %2389 = vmatpush1.msra.mxu0 0.0
        %2390 = vmatprep.subr.mxu0 0.0
        %2391 = vmatpush1.msra.mxu0 0.0
        %2392 = vmatprep.subr.mxu0 0.0
        %2393 = vmatpush1.msra.mxu0 0.0
        %2394 = vmatprep.subr.mxu0 0.0
        %2395 = vmatpush1.msra.mxu0 0.0
        %2396 = vmatprep.subr.mxu0 0.0
        %2397 = vmatpush1.msra.mxu0 0.0
        %2398 = vmatprep.subr.mxu0 0.0
        %2399 = vmatpush1.msra.mxu0 0.0
        %2400 = vmatprep.subr.mxu0 0.0
        %2401 = vmatpush1.msra.mxu0 0.0
        %2402 = vmatprep.subr.mxu0 0.0
        %2403 = vmatpush1.msra.mxu0 0.0
        %2404 = vmatprep.subr.mxu0 0.0
        %2405 = vmatpush1.msra.mxu0 0.0
        %2406 = vmatprep.subr.mxu0 0.0
        %2407 = vmatpush1.msra.mxu0 0.0
        %2408 = vmatprep.subr.mxu0 0.0
        %2409 = vmatpush1.msra.mxu0 0.0
        %2410 = vmatprep.subr.mxu0 0.0
        %2411 = vmatpush1.msra.mxu0 0.0
        %2412 = vmatprep.subr.mxu0 0.0
        %2413 = vmatpush1.msra.mxu0 0.0
        %2414 = vmatprep.subr.mxu0 0.0
        %2415 = vmatpush1.msra.mxu0 0.0
        %2416 = vmatprep.subr.mxu0 0.0
        %2417 = vmatpush1.msra.mxu0 %v1870
        %2418 = vmatprep.subr.mxu0 0.0
        %2419 = vmatpush2.msra.mxu0 0.0
        %2420 = vmatprep.subr.mxu0 0.0
        %2421 = vmatpush2.msra.mxu0 0.0
        %2422 = vmatprep.subr.mxu0 0.0
        %2423 = vmatpush2.msra.mxu0 0.0
        %2424 = vmatprep.subr.mxu0 0.0
        %2425 = vmatpush2.msra.mxu0 0.0
        %2426 = vmatprep.subr.mxu0 0.0
        %2427 = vmatpush2.msra.mxu0 0.0
        %2428 = vmatprep.subr.mxu0 0.0
        %2429 = vmatpush2.msra.mxu0 0.0
        %2430 = vmatprep.subr.mxu0 0.0
        %2431 = vmatpush2.msra.mxu0 0.0
        %2432 = vmatprep.subr.mxu0 0.0
        %2433 = vmatpush2.msra.mxu0 0.0
        %2434 = vmatprep.subr.mxu0 0.0
        %2435 = vmatpush2.msra.mxu0 0.0
        %2436 = vmatprep.subr.mxu0 0.0
        %2437 = vmatpush2.msra.mxu0 0.0
        %2438 = vmatprep.subr.mxu0 0.0
        %2439 = vmatpush2.msra.mxu0 0.0
        %2440 = vmatprep.subr.mxu0 0.0
        %2441 = vmatpush2.msra.mxu0 0.0
        %2442 = vmatprep.subr.mxu0 0.0
        %2443 = vmatpush2.msra.mxu0 0.0
        %2444 = vmatprep.subr.mxu0 0.0
        %2445 = vmatpush2.msra.mxu0 0.0
        %2446 = vmatprep.subr.mxu0 0.0
        %2447 = vmatpush2.msra.mxu0 0.0
        %2448 = vmatprep.subr.mxu0 0.0
        %2449 = vmatpush2.msra.mxu0 0.0
        %2450 = vmatprep.mubr.f32.mxu0 0.0
        %2451 = vmatmul.mubr.f32.gmra.mxu0 %v2384
        %v2452 = vpop.f32.mrf.mxu0
        %v2453 = vadd.f32 %v2380, %v2452
        %v2454 = vpop.f32.mrf.mxu0
        %2455 = vdwg.mxu0
        %2456 = vrot.lane.b32.xlu0 %v1978, 112
        %v2457 = vpop.permute.xlu0 %2456
        %2458 = vrot.lane.b32.xlu0 %v1978, 80
        %v2459 = vpop.permute.xlu0 %2458
        %v2460 = vsel %vm680, %v2457, 0
        %v2462 = vsel %vm680, %v2459, 0
        %2464 = vmatprep.subr.mxu0 0.0
        %2465 = vmatpush1.xpose.msra.mxu0 0.0
        %2466 = vmatprep.subr.mxu0 0.0
        %2467 = vmatpush1.xpose.msra.mxu0 0.0
        %2468 = vmatprep.subr.mxu0 0.0
        %2469 = vmatpush1.xpose.msra.mxu0 0.0
        %2470 = vmatprep.subr.mxu0 0.0
        %2471 = vmatpush1.xpose.msra.mxu0 0.0
        %2472 = vmatprep.subr.mxu0 0.0
        %2473 = vmatpush1.xpose.msra.mxu0 0.0
        %2474 = vmatprep.subr.mxu0 0.0
        %2475 = vmatpush1.xpose.msra.mxu0 0.0
        %2476 = vmatprep.subr.mxu0 0.0
        %2477 = vmatpush1.xpose.msra.mxu0 0.0
        %2478 = vmatprep.subr.mxu0 0.0
        %2479 = vmatpush1.xpose.msra.mxu0 0.0
        %2480 = vmatprep.subr.mxu0 0.0
        %2481 = vmatpush1.xpose.msra.mxu0 0.0
        %2482 = vmatprep.subr.mxu0 0.0
        %2483 = vmatpush1.xpose.msra.mxu0 0.0
        %2484 = vmatprep.subr.mxu0 0.0
        %2485 = vmatpush1.xpose.msra.mxu0 0.0
        %2486 = vmatprep.subr.mxu0 0.0
        %2487 = vmatpush1.xpose.msra.mxu0 0.0
        %2488 = vmatprep.subr.mxu0 0.0
        %2489 = vmatpush1.xpose.msra.mxu0 0.0
        %2490 = vmatprep.subr.mxu0 0.0
        %2491 = vmatpush1.xpose.msra.mxu0 0.0
        %2492 = vmatprep.subr.mxu0 0.0
        %2493 = vmatpush1.xpose.msra.mxu0 0.0
        %2494 = vmatprep.subr.mxu0 0.0
        %2495 = vmatpush1.xpose.msra.mxu0 %v2462
        %2496 = vmatprep.subr.mxu0 0.0
        %2497 = vmatpush2.xpose.msra.mxu0 0.0
        %2498 = vmatprep.subr.mxu0 0.0
        %2499 = vmatpush2.xpose.msra.mxu0 0.0
        %2500 = vmatprep.subr.mxu0 0.0
        %2501 = vmatpush2.xpose.msra.mxu0 0.0
        %2502 = vmatprep.subr.mxu0 0.0
        %2503 = vmatpush2.xpose.msra.mxu0 0.0
        %2504 = vmatprep.subr.mxu0 0.0
        %2505 = vmatpush2.xpose.msra.mxu0 0.0
        %2506 = vmatprep.subr.mxu0 0.0
        %2507 = vmatpush2.xpose.msra.mxu0 0.0
        %2508 = vmatprep.subr.mxu0 0.0
        %2509 = vmatpush2.xpose.msra.mxu0 0.0
        %2510 = vmatprep.subr.mxu0 0.0
        %2511 = vmatpush2.xpose.msra.mxu0 0.0
        %2512 = vmatprep.subr.mxu0 0.0
        %2513 = vmatpush2.xpose.msra.mxu0 0.0
        %2514 = vmatprep.subr.mxu0 0.0
        %2515 = vmatpush2.xpose.msra.mxu0 0.0
        %2516 = vmatprep.subr.mxu0 0.0
        %2517 = vmatpush2.xpose.msra.mxu0 0.0
        %2518 = vmatprep.subr.mxu0 0.0
        %2519 = vmatpush2.xpose.msra.mxu0 0.0
        %2520 = vmatprep.subr.mxu0 0.0
        %2521 = vmatpush2.xpose.msra.mxu0 0.0
        %2522 = vmatprep.subr.mxu0 0.0
        %2523 = vmatpush2.xpose.msra.mxu0 0.0
        %2524 = vmatprep.subr.mxu0 0.0
        %2525 = vmatpush2.xpose.msra.mxu0 0.0
        %2526 = vmatprep.subr.mxu0 0.0
        %2527 = vmatpush2.xpose.msra.mxu0 0.0
        %2528 = vmatprep.mubr.f32.mxu0 0.0
        %2529 = vmatmul.mubr.f32.gmra.mxu0 %v2460
        %v2530 = vpop.f32.mrf.mxu0
        %v2531 = vadd.f32 %v675, %v2530
        %v2532 = vpop.f32.mrf.mxu0
        %2533 = vdwg.mxu0
        %v2534 = vsel %vm680, %v2531, -inf
        %2535 = vmax.xlane.f32.xlu0 %v2534
        %v2536 = vpop.xlane.xlu0 %2535
        %v2537 = vsub.f32 %v2531, %v2536
        %v2538 = vmul.f32 %v2537, 1.442695
        %v2539 = vpow.pop %v2538
        %v2540 = vsel %vm680, %v2539, 0.0
        %2541 = vadd.xlane.f32.xlu0 %v2540
        %v2542 = vpop.xlane.xlu0 %2541
        %v2543 = vrcp.pop %v2542
        %v2544 = vmul.f32 %v2539, %v2543
        %2545 = vrot.lane.b32.xlu0 %v1978, 48
        %v2546 = vpop.permute.xlu0 %2545
        %v2549 = vsel %vm680, %v2544, 0
        %2551 = vmatprep.subr.mxu0 0.0
        %2552 = vmatpush1.msra.mxu0 0.0
        %2553 = vmatprep.subr.mxu0 0.0
        %2554 = vmatpush1.msra.mxu0 0.0
        %2555 = vmatprep.subr.mxu0 0.0
        %2556 = vmatpush1.msra.mxu0 0.0
        %2557 = vmatprep.subr.mxu0 0.0
        %2558 = vmatpush1.msra.mxu0 0.0
        %2559 = vmatprep.subr.mxu0 0.0
        %2560 = vmatpush1.msra.mxu0 0.0
        %2561 = vmatprep.subr.mxu0 0.0
        %2562 = vmatpush1.msra.mxu0 0.0
        %2563 = vmatprep.subr.mxu0 0.0
        %2564 = vmatpush1.msra.mxu0 0.0
        %2565 = vmatprep.subr.mxu0 0.0
        %2566 = vmatpush1.msra.mxu0 0.0
        %2567 = vmatprep.subr.mxu0 0.0
        %2568 = vmatpush1.msra.mxu0 0.0
        %2569 = vmatprep.subr.mxu0 0.0
        %2570 = vmatpush1.msra.mxu0 0.0
        %2571 = vmatprep.subr.mxu0 0.0
        %2572 = vmatpush1.msra.mxu0 0.0
        %2573 = vmatprep.subr.mxu0 0.0
        %2574 = vmatpush1.msra.mxu0 0.0
        %2575 = vmatprep.subr.mxu0 0.0
        %2576 = vmatpush1.msra.mxu0 0.0
        %2577 = vmatprep.subr.mxu0 0.0
        %2578 = vmatpush1.msra.mxu0 0.0
        %2579 = vmatprep.subr.mxu0 0.0
        %2580 = vmatpush1.msra.mxu0 0.0
        %2581 = vmatprep.subr.mxu0 0.0
        %2582 = vmatpush1.msra.mxu0 %v2546
        %2583 = vmatprep.subr.mxu0 0.0
        %2584 = vmatpush2.msra.mxu0 0.0
        %2585 = vmatprep.subr.mxu0 0.0
        %2586 = vmatpush2.msra.mxu0 0.0
        %2587 = vmatprep.subr.mxu0 0.0
        %2588 = vmatpush2.msra.mxu0 0.0
        %2589 = vmatprep.subr.mxu0 0.0
        %2590 = vmatpush2.msra.mxu0 0.0
        %2591 = vmatprep.subr.mxu0 0.0
        %2592 = vmatpush2.msra.mxu0 0.0
        %2593 = vmatprep.subr.mxu0 0.0
        %2594 = vmatpush2.msra.mxu0 0.0
        %2595 = vmatprep.subr.mxu0 0.0
        %2596 = vmatpush2.msra.mxu0 0.0
        %2597 = vmatprep.subr.mxu0 0.0
        %2598 = vmatpush2.msra.mxu0 0.0
        %2599 = vmatprep.subr.mxu0 0.0
        %2600 = vmatpush2.msra.mxu0 0.0
        %2601 = vmatprep.subr.mxu0 0.0
        %2602 = vmatpush2.msra.mxu0 0.0
        %2603 = vmatprep.subr.mxu0 0.0
        %2604 = vmatpush2.msra.mxu0 0.0
        %2605 = vmatprep.subr.mxu0 0.0
        %2606 = vmatpush2.msra.mxu0 0.0
        %2607 = vmatprep.subr.mxu0 0.0
        %2608 = vmatpush2.msra.mxu0 0.0
        %2609 = vmatprep.subr.mxu0 0.0
        %2610 = vmatpush2.msra.mxu0 0.0
        %2611 = vmatprep.subr.mxu0 0.0
        %2612 = vmatpush2.msra.mxu0 0.0
        %2613 = vmatprep.subr.mxu0 0.0
        %2614 = vmatpush2.msra.mxu0 0.0
        %2615 = vmatprep.mubr.f32.mxu0 0.0
        %2616 = vmatmul.mubr.f32.gmra.mxu0 %v2549
        %v2617 = vpop.f32.mrf.mxu0
        %v2618 = vadd.f32 0.0, %v2617
        %v2619 = vpop.f32.mrf.mxu0
        %2620 = vdwg.mxu0
        %v2622 = vsel %vm680, %v2618, 0
        %2624 = vmatprep.subr.mxu0 0.0
        %2625 = vmatpush1.msra.mxu0 0.0
        %2626 = vmatprep.subr.mxu0 0.0
        %2627 = vmatpush1.msra.mxu0 0.0
        %2628 = vmatprep.subr.mxu0 0.0
        %2629 = vmatpush1.msra.mxu0 0.0
        %2630 = vmatprep.subr.mxu0 0.0
        %2631 = vmatpush1.msra.mxu0 0.0
        %2632 = vmatprep.subr.mxu0 0.0
        %2633 = vmatpush1.msra.mxu0 0.0
        %2634 = vmatprep.subr.mxu0 0.0
        %2635 = vmatpush1.msra.mxu0 0.0
        %2636 = vmatprep.subr.mxu0 0.0
        %2637 = vmatpush1.msra.mxu0 0.0
        %2638 = vmatprep.subr.mxu0 0.0
        %2639 = vmatpush1.msra.mxu0 0.0
        %2640 = vmatprep.subr.mxu0 0.0
        %2641 = vmatpush1.msra.mxu0 0.0
        %2642 = vmatprep.subr.mxu0 0.0
        %2643 = vmatpush1.msra.mxu0 0.0
        %2644 = vmatprep.subr.mxu0 0.0
        %2645 = vmatpush1.msra.mxu0 0.0
        %2646 = vmatprep.subr.mxu0 0.0
        %2647 = vmatpush1.msra.mxu0 0.0
        %2648 = vmatprep.subr.mxu0 0.0
        %2649 = vmatpush1.msra.mxu0 0.0
        %2650 = vmatprep.subr.mxu0 0.0
        %2651 = vmatpush1.msra.mxu0 0.0
        %2652 = vmatprep.subr.mxu0 0.0
        %2653 = vmatpush1.msra.mxu0 0.0
        %2654 = vmatprep.subr.mxu0 0.0
        %2655 = vmatpush1.msra.mxu0 %v1872
        %2656 = vmatprep.subr.mxu0 0.0
        %2657 = vmatpush2.msra.mxu0 0.0
        %2658 = vmatprep.subr.mxu0 0.0
        %2659 = vmatpush2.msra.mxu0 0.0
        %2660 = vmatprep.subr.mxu0 0.0
        %2661 = vmatpush2.msra.mxu0 0.0
        %2662 = vmatprep.subr.mxu0 0.0
        %2663 = vmatpush2.msra.mxu0 0.0
        %2664 = vmatprep.subr.mxu0 0.0
        %2665 = vmatpush2.msra.mxu0 0.0
        %2666 = vmatprep.subr.mxu0 0.0
        %2667 = vmatpush2.msra.mxu0 0.0
        %2668 = vmatprep.subr.mxu0 0.0
        %2669 = vmatpush2.msra.mxu0 0.0
        %2670 = vmatprep.subr.mxu0 0.0
        %2671 = vmatpush2.msra.mxu0 0.0
        %2672 = vmatprep.subr.mxu0 0.0
        %2673 = vmatpush2.msra.mxu0 0.0
        %2674 = vmatprep.subr.mxu0 0.0
        %2675 = vmatpush2.msra.mxu0 0.0
        %2676 = vmatprep.subr.mxu0 0.0
        %2677 = vmatpush2.msra.mxu0 0.0
        %2678 = vmatprep.subr.mxu0 0.0
        %2679 = vmatpush2.msra.mxu0 0.0
        %2680 = vmatprep.subr.mxu0 0.0
        %2681 = vmatpush2.msra.mxu0 0.0
        %2682 = vmatprep.subr.mxu0 0.0
        %2683 = vmatpush2.msra.mxu0 0.0
        %2684 = vmatprep.subr.mxu0 0.0
        %2685 = vmatpush2.msra.mxu0 0.0
        %2686 = vmatprep.subr.mxu0 0.0
        %2687 = vmatpush2.msra.mxu0 0.0
        %2688 = vmatprep.mubr.f32.mxu0 0.0
        %2689 = vmatmul.mubr.f32.gmra.mxu0 %v2622
        %v2690 = vpop.f32.mrf.mxu0
        %v2691 = vadd.f32 0.0, %v2690
        %v2692 = vpop.f32.mrf.mxu0
        %2693 = vdwg.mxu0
        %v2694 = vadd.f32 %v2453, %v2691
        %2695 = vrot.lane.b32.xlu0 %v1978, 104
        %v2696 = vpop.permute.xlu0 %2695
        %2697 = vrot.lane.b32.xlu0 %v1978, 72
        %v2698 = vpop.permute.xlu0 %2697
        %v2699 = vsel %vm680, %v2696, 0
        %v2701 = vsel %vm680, %v2698, 0
        %2703 = vmatprep.subr.mxu0 0.0
        %2704 = vmatpush1.xpose.msra.mxu0 0.0
        %2705 = vmatprep.subr.mxu0 0.0
        %2706 = vmatpush1.xpose.msra.mxu0 0.0
        %2707 = vmatprep.subr.mxu0 0.0
        %2708 = vmatpush1.xpose.msra.mxu0 0.0
        %2709 = vmatprep.subr.mxu0 0.0
        %2710 = vmatpush1.xpose.msra.mxu0 0.0
        %2711 = vmatprep.subr.mxu0 0.0
        %2712 = vmatpush1.xpose.msra.mxu0 0.0
        %2713 = vmatprep.subr.mxu0 0.0
        %2714 = vmatpush1.xpose.msra.mxu0 0.0
        %2715 = vmatprep.subr.mxu0 0.0
        %2716 = vmatpush1.xpose.msra.mxu0 0.0
        %2717 = vmatprep.subr.mxu0 0.0
        %2718 = vmatpush1.xpose.msra.mxu0 0.0
        %2719 = vmatprep.subr.mxu0 0.0
        %2720 = vmatpush1.xpose.msra.mxu0 0.0
        %2721 = vmatprep.subr.mxu0 0.0
        %2722 = vmatpush1.xpose.msra.mxu0 0.0
        %2723 = vmatprep.subr.mxu0 0.0
        %2724 = vmatpush1.xpose.msra.mxu0 0.0
        %2725 = vmatprep.subr.mxu0 0.0
        %2726 = vmatpush1.xpose.msra.mxu0 0.0
        %2727 = vmatprep.subr.mxu0 0.0
        %2728 = vmatpush1.xpose.msra.mxu0 0.0
        %2729 = vmatprep.subr.mxu0 0.0
        %2730 = vmatpush1.xpose.msra.mxu0 0.0
        %2731 = vmatprep.subr.mxu0 0.0
        %2732 = vmatpush1.xpose.msra.mxu0 0.0
        %2733 = vmatprep.subr.mxu0 0.0
        %2734 = vmatpush1.xpose.msra.mxu0 %v2701
        %2735 = vmatprep.subr.mxu0 0.0
        %2736 = vmatpush2.xpose.msra.mxu0 0.0
        %2737 = vmatprep.subr.mxu0 0.0
        %2738 = vmatpush2.xpose.msra.mxu0 0.0
        %2739 = vmatprep.subr.mxu0 0.0
        %2740 = vmatpush2.xpose.msra.mxu0 0.0
        %2741 = vmatprep.subr.mxu0 0.0
        %2742 = vmatpush2.xpose.msra.mxu0 0.0
        %2743 = vmatprep.subr.mxu0 0.0
        %2744 = vmatpush2.xpose.msra.mxu0 0.0
        %2745 = vmatprep.subr.mxu0 0.0
        %2746 = vmatpush2.xpose.msra.mxu0 0.0
        %2747 = vmatprep.subr.mxu0 0.0
        %2748 = vmatpush2.xpose.msra.mxu0 0.0
        %2749 = vmatprep.subr.mxu0 0.0
        %2750 = vmatpush2.xpose.msra.mxu0 0.0
        %2751 = vmatprep.subr.mxu0 0.0
        %2752 = vmatpush2.xpose.msra.mxu0 0.0
        %2753 = vmatprep.subr.mxu0 0.0
        %2754 = vmatpush2.xpose.msra.mxu0 0.0
        %2755 = vmatprep.subr.mxu0 0.0
        %2756 = vmatpush2.xpose.msra.mxu0 0.0
        %2757 = vmatprep.subr.mxu0 0.0
        %2758 = vmatpush2.xpose.msra.mxu0 0.0
        %2759 = vmatprep.subr.mxu0 0.0
        %2760 = vmatpush2.xpose.msra.mxu0 0.0
        %2761 = vmatprep.subr.mxu0 0.0
        %2762 = vmatpush2.xpose.msra.mxu0 0.0
        %2763 = vmatprep.subr.mxu0 0.0
        %2764 = vmatpush2.xpose.msra.mxu0 0.0
        %2765 = vmatprep.subr.mxu0 0.0
        %2766 = vmatpush2.xpose.msra.mxu0 0.0
        %2767 = vmatprep.mubr.f32.mxu0 0.0
        %2768 = vmatmul.mubr.f32.gmra.mxu0 %v2699
        %v2769 = vpop.f32.mrf.mxu0
        %v2770 = vadd.f32 %v675, %v2769
        %v2771 = vpop.f32.mrf.mxu0
        %2772 = vdwg.mxu0
        %v2773 = vsel %vm680, %v2770, -inf
        %2774 = vmax.xlane.f32.xlu0 %v2773
        %v2775 = vpop.xlane.xlu0 %2774
        %v2776 = vsub.f32 %v2770, %v2775
        %v2777 = vmul.f32 %v2776, 1.442695
        %v2778 = vpow.pop %v2777
        %v2779 = vsel %vm680, %v2778, 0.0
        %2780 = vadd.xlane.f32.xlu0 %v2779
        %v2781 = vpop.xlane.xlu0 %2780
        %v2782 = vrcp.pop %v2781
        %v2783 = vmul.f32 %v2778, %v2782
        %2784 = vrot.lane.b32.xlu0 %v1978, 40
        %v2785 = vpop.permute.xlu0 %2784
        %v2788 = vsel %vm680, %v2783, 0
        %2790 = vmatprep.subr.mxu0 0.0
        %2791 = vmatpush1.msra.mxu0 0.0
        %2792 = vmatprep.subr.mxu0 0.0
        %2793 = vmatpush1.msra.mxu0 0.0
        %2794 = vmatprep.subr.mxu0 0.0
        %2795 = vmatpush1.msra.mxu0 0.0
        %2796 = vmatprep.subr.mxu0 0.0
        %2797 = vmatpush1.msra.mxu0 0.0
        %2798 = vmatprep.subr.mxu0 0.0
        %2799 = vmatpush1.msra.mxu0 0.0
        %2800 = vmatprep.subr.mxu0 0.0
        %2801 = vmatpush1.msra.mxu0 0.0
        %2802 = vmatprep.subr.mxu0 0.0
        %2803 = vmatpush1.msra.mxu0 0.0
        %2804 = vmatprep.subr.mxu0 0.0
        %2805 = vmatpush1.msra.mxu0 0.0
        %2806 = vmatprep.subr.mxu0 0.0
        %2807 = vmatpush1.msra.mxu0 0.0
        %2808 = vmatprep.subr.mxu0 0.0
        %2809 = vmatpush1.msra.mxu0 0.0
        %2810 = vmatprep.subr.mxu0 0.0
        %2811 = vmatpush1.msra.mxu0 0.0
        %2812 = vmatprep.subr.mxu0 0.0
        %2813 = vmatpush1.msra.mxu0 0.0
        %2814 = vmatprep.subr.mxu0 0.0
        %2815 = vmatpush1.msra.mxu0 0.0
        %2816 = vmatprep.subr.mxu0 0.0
        %2817 = vmatpush1.msra.mxu0 0.0
        %2818 = vmatprep.subr.mxu0 0.0
        %2819 = vmatpush1.msra.mxu0 0.0
        %2820 = vmatprep.subr.mxu0 0.0
        %2821 = vmatpush1.msra.mxu0 %v2785
        %2822 = vmatprep.subr.mxu0 0.0
        %2823 = vmatpush2.msra.mxu0 0.0
        %2824 = vmatprep.subr.mxu0 0.0
        %2825 = vmatpush2.msra.mxu0 0.0
        %2826 = vmatprep.subr.mxu0 0.0
        %2827 = vmatpush2.msra.mxu0 0.0
        %2828 = vmatprep.subr.mxu0 0.0
        %2829 = vmatpush2.msra.mxu0 0.0
        %2830 = vmatprep.subr.mxu0 0.0
        %2831 = vmatpush2.msra.mxu0 0.0
        %2832 = vmatprep.subr.mxu0 0.0
        %2833 = vmatpush2.msra.mxu0 0.0
        %2834 = vmatprep.subr.mxu0 0.0
        %2835 = vmatpush2.msra.mxu0 0.0
        %2836 = vmatprep.subr.mxu0 0.0
        %2837 = vmatpush2.msra.mxu0 0.0
        %2838 = vmatprep.subr.mxu0 0.0
        %2839 = vmatpush2.msra.mxu0 0.0
        %2840 = vmatprep.subr.mxu0 0.0
        %2841 = vmatpush2.msra.mxu0 0.0
        %2842 = vmatprep.subr.mxu0 0.0
        %2843 = vmatpush2.msra.mxu0 0.0
        %2844 = vmatprep.subr.mxu0 0.0
        %2845 = vmatpush2.msra.mxu0 0.0
        %2846 = vmatprep.subr.mxu0 0.0
        %2847 = vmatpush2.msra.mxu0 0.0
        %2848 = vmatprep.subr.mxu0 0.0
        %2849 = vmatpush2.msra.mxu0 0.0
        %2850 = vmatprep.subr.mxu0 0.0
        %2851 = vmatpush2.msra.mxu0 0.0
        %2852 = vmatprep.subr.mxu0 0.0
        %2853 = vmatpush2.msra.mxu0 0.0
        %2854 = vmatprep.mubr.f32.mxu0 0.0
        %2855 = vmatmul.mubr.f32.gmra.mxu0 %v2788
        %v2856 = vpop.f32.mrf.mxu0
        %v2857 = vadd.f32 0.0, %v2856
        %v2858 = vpop.f32.mrf.mxu0
        %2859 = vdwg.mxu0
        %v2861 = vsel %vm680, %v2857, 0
        %2863 = vmatprep.subr.mxu0 0.0
        %2864 = vmatpush1.msra.mxu0 0.0
        %2865 = vmatprep.subr.mxu0 0.0
        %2866 = vmatpush1.msra.mxu0 0.0
        %2867 = vmatprep.subr.mxu0 0.0
        %2868 = vmatpush1.msra.mxu0 0.0
        %2869 = vmatprep.subr.mxu0 0.0
        %2870 = vmatpush1.msra.mxu0 0.0
        %2871 = vmatprep.subr.mxu0 0.0
        %2872 = vmatpush1.msra.mxu0 0.0
        %2873 = vmatprep.subr.mxu0 0.0
        %2874 = vmatpush1.msra.mxu0 0.0
        %2875 = vmatprep.subr.mxu0 0.0
        %2876 = vmatpush1.msra.mxu0 0.0
        %2877 = vmatprep.subr.mxu0 0.0
        %2878 = vmatpush1.msra.mxu0 0.0
        %2879 = vmatprep.subr.mxu0 0.0
        %2880 = vmatpush1.msra.mxu0 0.0
        %2881 = vmatprep.subr.mxu0 0.0
        %2882 = vmatpush1.msra.mxu0 0.0
        %2883 = vmatprep.subr.mxu0 0.0
        %2884 = vmatpush1.msra.mxu0 0.0
        %2885 = vmatprep.subr.mxu0 0.0
        %2886 = vmatpush1.msra.mxu0 0.0
        %2887 = vmatprep.subr.mxu0 0.0
        %2888 = vmatpush1.msra.mxu0 0.0
        %2889 = vmatprep.subr.mxu0 0.0
        %2890 = vmatpush1.msra.mxu0 0.0
        %2891 = vmatprep.subr.mxu0 0.0
        %2892 = vmatpush1.msra.mxu0 0.0
        %2893 = vmatprep.subr.mxu0 0.0
        %2894 = vmatpush1.msra.mxu0 %v1873
        %2895 = vmatprep.subr.mxu0 0.0
        %2896 = vmatpush2.msra.mxu0 0.0
        %2897 = vmatprep.subr.mxu0 0.0
        %2898 = vmatpush2.msra.mxu0 0.0
        %2899 = vmatprep.subr.mxu0 0.0
        %2900 = vmatpush2.msra.mxu0 0.0
        %2901 = vmatprep.subr.mxu0 0.0
        %2902 = vmatpush2.msra.mxu0 0.0
        %2903 = vmatprep.subr.mxu0 0.0
        %2904 = vmatpush2.msra.mxu0 0.0
        %2905 = vmatprep.subr.mxu0 0.0
        %2906 = vmatpush2.msra.mxu0 0.0
        %2907 = vmatprep.subr.mxu0 0.0
        %2908 = vmatpush2.msra.mxu0 0.0
        %2909 = vmatprep.subr.mxu0 0.0
        %2910 = vmatpush2.msra.mxu0 0.0
        %2911 = vmatprep.subr.mxu0 0.0
        %2912 = vmatpush2.msra.mxu0 0.0
        %2913 = vmatprep.subr.mxu0 0.0
        %2914 = vmatpush2.msra.mxu0 0.0
        %2915 = vmatprep.subr.mxu0 0.0
        %2916 = vmatpush2.msra.mxu0 0.0
        %2917 = vmatprep.subr.mxu0 0.0
        %2918 = vmatpush2.msra.mxu0 0.0
        %2919 = vmatprep.subr.mxu0 0.0
        %2920 = vmatpush2.msra.mxu0 0.0
        %2921 = vmatprep.subr.mxu0 0.0
        %2922 = vmatpush2.msra.mxu0 0.0
        %2923 = vmatprep.subr.mxu0 0.0
        %2924 = vmatpush2.msra.mxu0 0.0
        %2925 = vmatprep.subr.mxu0 0.0
        %2926 = vmatpush2.msra.mxu0 0.0
        %2927 = vmatprep.mubr.f32.mxu0 0.0
        %2928 = vmatmul.mubr.f32.gmra.mxu0 %v2861
        %v2929 = vpop.f32.mrf.mxu0
        %v2930 = vadd.f32 0.0, %v2929
        %v2931 = vpop.f32.mrf.mxu0
        %2932 = vdwg.mxu0
        %v2933 = vadd.f32 %v2694, %v2930
        %v2935 = vlaneseq
        %v2936 = vshrl.u32 %v2935, 7
        %v2937 = vsub.s32 0, %v2936
        %v2938 = vrot.slane %v1875, %v2937
        %v2940 = vadd.f32 %v2933, %v2938
        %v2941 = vadd.f32 %v1861, %v2940
        %v2942 = vsel %vm535, %v2941, 0.0
        %2943 = vadd.xlane.f32.xlu0 %v2942
        %v2944 = vpop.xlane.xlu0 %2943
        %v2945 = vmul.f32 %v2944, %v539
        %v2946 = vsub.f32 %v2941, %v2945
        %v2947 = vmul.f32 %v2946, %v2946
        %v2948 = vsel %vm535, %v2947, 0.0
        %2949 = vadd.xlane.f32.xlu0 %v2948
        %v2950 = vpop.xlane.xlu0 %2949
        %v2951 = vmul.f32 %v2950, %v539
        %v2952 = vadd.f32 %v2951, 1e-05
        %v2953 = vrsqrt.pop %v2952
        %v2954 = vmul.f32 %v2946, %v2953
        %v2956 = vlaneseq
        %v2957 = vshrl.u32 %v2956, 7
        %v2958 = vsub.s32 0, %v2957
        %v2959 = vrot.slane %v1877, %v2958
        %v2961 = vmul.f32 %v2954, %v2959
        %v2963 = vlaneseq
        %v2964 = vshrl.u32 %v2963, 7
        %v2965 = vsub.s32 0, %v2964
        %v2966 = vrot.slane %v1879, %v2965
        %v2968 = vadd.f32 %v2961, %v2966
        %v2970 = vlaneseq
        %v2971 = vshrl.u32 %v2970, 7
        %v2972 = vsub.s32 0, %v2971
        %v2973 = vrot.slane %v1886, %v2972
        %v2976 = vsel %vm535, %v2968, 0
        %2978 = vmatprep.subr.mxu0 0.0
        %2979 = vmatpush1.msra.mxu0 0.0
        %2980 = vmatprep.subr.mxu0 0.0
        %2981 = vmatpush1.msra.mxu0 0.0
        %2982 = vmatprep.subr.mxu0 0.0
        %2983 = vmatpush1.msra.mxu0 0.0
        %2984 = vmatprep.subr.mxu0 0.0
        %2985 = vmatpush1.msra.mxu0 0.0
        %2986 = vmatprep.subr.mxu0 0.0
        %2987 = vmatpush1.msra.mxu0 0.0
        %2988 = vmatprep.subr.mxu0 0.0
        %2989 = vmatpush1.msra.mxu0 0.0
        %2990 = vmatprep.subr.mxu0 0.0
        %2991 = vmatpush1.msra.mxu0 0.0
        %2992 = vmatprep.subr.mxu0 0.0
        %2993 = vmatpush1.msra.mxu0 0.0
        %2994 = vmatprep.subr.mxu0 0.0
        %2995 = vmatpush1.msra.mxu0 0.0
        %2996 = vmatprep.subr.mxu0 0.0
        %2997 = vmatpush1.msra.mxu0 0.0
        %2998 = vmatprep.subr.mxu0 0.0
        %2999 = vmatpush1.msra.mxu0 0.0
        %3000 = vmatprep.subr.mxu0 0.0
        %3001 = vmatpush1.msra.mxu0 0.0
        %3002 = vmatprep.subr.mxu0 0.0
        %3003 = vmatpush1.msra.mxu0 %v1884
        %3004 = vmatprep.subr.mxu0 0.0
        %3005 = vmatpush1.msra.mxu0 %v1883
        %3006 = vmatprep.subr.mxu0 0.0
        %3007 = vmatpush1.msra.mxu0 %v1882
        %3008 = vmatprep.subr.mxu0 0.0
        %3009 = vmatpush1.msra.mxu0 %v1881
        %3010 = vmatprep.subr.mxu0 0.0
        %3011 = vmatpush2.msra.mxu0 0.0
        %3012 = vmatprep.subr.mxu0 0.0
        %3013 = vmatpush2.msra.mxu0 0.0
        %3014 = vmatprep.subr.mxu0 0.0
        %3015 = vmatpush2.msra.mxu0 0.0
        %3016 = vmatprep.subr.mxu0 0.0
        %3017 = vmatpush2.msra.mxu0 0.0
        %3018 = vmatprep.subr.mxu0 0.0
        %3019 = vmatpush2.msra.mxu0 0.0
        %3020 = vmatprep.subr.mxu0 0.0
        %3021 = vmatpush2.msra.mxu0 0.0
        %3022 = vmatprep.subr.mxu0 0.0
        %3023 = vmatpush2.msra.mxu0 0.0
        %3024 = vmatprep.subr.mxu0 0.0
        %3025 = vmatpush2.msra.mxu0 0.0
        %3026 = vmatprep.subr.mxu0 0.0
        %3027 = vmatpush2.msra.mxu0 0.0
        %3028 = vmatprep.subr.mxu0 0.0
        %3029 = vmatpush2.msra.mxu0 0.0
        %3030 = vmatprep.subr.mxu0 0.0
        %3031 = vmatpush2.msra.mxu0 0.0
        %3032 = vmatprep.subr.mxu0 0.0
        %3033 = vmatpush2.msra.mxu0 0.0
        %3034 = vmatprep.subr.mxu0 0.0
        %3035 = vmatpush2.msra.mxu0 0.0
        %3036 = vmatprep.subr.mxu0 0.0
        %3037 = vmatpush2.msra.mxu0 0.0
        %3038 = vmatprep.subr.mxu0 0.0
        %3039 = vmatpush2.msra.mxu0 0.0
        %3040 = vmatprep.subr.mxu0 0.0
        %3041 = vmatpush2.msra.mxu0 0.0
        %3042 = vmatprep.mubr.f32.mxu0 0.0
        %3043 = vmatmul.mubr.f32.gmra.mxu0 %v2976
        %v3044 = vpop.f32.mrf.mxu0
        %v3045 = vadd.f32 %v2973, %v3044
        %v3046 = vpop.f32.mrf.mxu0
        %3047 = vdwg.mxu0
        %v3048 = vmul.f32 %v3045, %v3045
        %v3049 = vmul.f32 %v3045, %v3048
        %v3050 = vmul.f32 %v3049, 0.044715
        %v3051 = vadd.f32 %v3045, %v3050
        %v3052 = vmul.f32 %v3051, 0.7978846
        %v3053 = vtanh.pop %v3052
        %v3054 = vadd.f32 %v3053, 1.0
        %v3055 = vmul.f32 %v3054, 0.5
        %v3056 = vmul.f32 %v3045, %v3055
        %v3058 = vlaneseq
        %v3059 = vshrl.u32 %v3058, 7
        %v3060 = vsub.s32 0, %v3059
        %v3061 = vrot.slane %v1897, %v3060
        %v3064 = vsel %vm1760, %v3056, 0
        %3066 = vmatprep.subr.mxu0 0.0
        %3067 = vmatpush1.msra.mxu0 0.0
        %3068 = vmatprep.subr.mxu0 0.0
        %3069 = vmatpush1.msra.mxu0 0.0
        %3070 = vmatprep.subr.mxu0 0.0
        %3071 = vmatpush1.msra.mxu0 0.0
        %3072 = vmatprep.subr.mxu0 0.0
        %3073 = vmatpush1.msra.mxu0 0.0
        %3074 = vmatprep.subr.mxu0 0.0
        %3075 = vmatpush1.msra.mxu0 0.0
        %3076 = vmatprep.subr.mxu0 0.0
        %3077 = vmatpush1.msra.mxu0 0.0
        %3078 = vmatprep.subr.mxu0 0.0
        %3079 = vmatpush1.msra.mxu0 0.0
        %3080 = vmatprep.subr.mxu0 0.0
        %3081 = vmatpush1.msra.mxu0 0.0
        %3082 = vmatprep.subr.mxu0 0.0
        %3083 = vmatpush1.msra.mxu0 %v1895
        %3084 = vmatprep.subr.mxu0 0.0
        %3085 = vmatpush1.msra.mxu0 %v1894
        %3086 = vmatprep.subr.mxu0 0.0
        %3087 = vmatpush1.msra.mxu0 %v1893
        %3088 = vmatprep.subr.mxu0 0.0
        %3089 = vmatpush1.msra.mxu0 %v1892
        %3090 = vmatprep.subr.mxu0 0.0
        %3091 = vmatpush1.msra.mxu0 %v1891
        %3092 = vmatprep.subr.mxu0 0.0
        %3093 = vmatpush1.msra.mxu0 %v1890
        %3094 = vmatprep.subr.mxu0 0.0
        %3095 = vmatpush1.msra.mxu0 %v1889
        %3096 = vmatprep.subr.mxu0 0.0
        %3097 = vmatpush1.msra.mxu0 %v1888
        %3098 = vmatprep.subr.mxu0 0.0
        %3099 = vmatpush2.msra.mxu0 0.0
        %3100 = vmatprep.subr.mxu0 0.0
        %3101 = vmatpush2.msra.mxu0 0.0
        %3102 = vmatprep.subr.mxu0 0.0
        %3103 = vmatpush2.msra.mxu0 0.0
        %3104 = vmatprep.subr.mxu0 0.0
        %3105 = vmatpush2.msra.mxu0 0.0
        %3106 = vmatprep.subr.mxu0 0.0
        %3107 = vmatpush2.msra.mxu0 0.0
        %3108 = vmatprep.subr.mxu0 0.0
        %3109 = vmatpush2.msra.mxu0 0.0
        %3110 = vmatprep.subr.mxu0 0.0
        %3111 = vmatpush2.msra.mxu0 0.0
        %3112 = vmatprep.subr.mxu0 0.0
        %3113 = vmatpush2.msra.mxu0 0.0
        %3114 = vmatprep.subr.mxu0 0.0
        %3115 = vmatpush2.msra.mxu0 0.0
        %3116 = vmatprep.subr.mxu0 0.0
        %3117 = vmatpush2.msra.mxu0 0.0
        %3118 = vmatprep.subr.mxu0 0.0
        %3119 = vmatpush2.msra.mxu0 0.0
        %3120 = vmatprep.subr.mxu0 0.0
        %3121 = vmatpush2.msra.mxu0 0.0
        %3122 = vmatprep.subr.mxu0 0.0
        %3123 = vmatpush2.msra.mxu0 0.0
        %3124 = vmatprep.subr.mxu0 0.0
        %3125 = vmatpush2.msra.mxu0 0.0
        %3126 = vmatprep.subr.mxu0 0.0
        %3127 = vmatpush2.msra.mxu0 0.0
        %3128 = vmatprep.subr.mxu0 0.0
        %3129 = vmatpush2.msra.mxu0 0.0
        %3130 = vmatprep.mubr.f32.mxu0 0.0
        %3131 = vmatmul.mubr.f32.gmra.mxu0 %v3064
        %v3132 = vpop.f32.mrf.mxu0
        %v3133 = vadd.f32 %v3061, %v3132
        %v3134 = vpop.f32.mrf.mxu0
        %3135 = vdwg.mxu0
        %v3136 = vadd.f32 %v2968, %v3133
        %v3137 = vsel %vm535, %v3136, 0.0
        %3138 = vadd.xlane.f32.xlu0 %v3137
        %v3139 = vpop.xlane.xlu0 %3138
        %v3140 = vmul.f32 %v3139, %v539
        %v3141 = vsub.f32 %v3136, %v3140
        %v3142 = vmul.f32 %v3141, %v3141
        %v3143 = vsel %vm535, %v3142, 0.0
        %3144 = vadd.xlane.f32.xlu0 %v3143
        %v3145 = vpop.xlane.xlu0 %3144
        %v3146 = vmul.f32 %v3145, %v539
        %v3147 = vadd.f32 %v3146, 1e-05
        %v3148 = vrsqrt.pop %v3147
        %v3149 = vmul.f32 %v3141, %v3148
        %v3151 = vlaneseq
        %v3152 = vshrl.u32 %v3151, 7
        %v3153 = vsub.s32 0, %v3152
        %v3154 = vrot.slane %v1899, %v3153
        %v3156 = vmul.f32 %v3149, %v3154
        %v3158 = vlaneseq
        %v3159 = vshrl.u32 %v3158, 7
        %v3160 = vsub.s32 0, %v3159
        %v3161 = vrot.slane %v1901, %v3160
        %v3163 = vadd.f32 %v3156, %v3161
        %3164 = vst.msk [vmem:[%s523] sm:$0xff] %vm535, %v3163
        %s3165 = sand.u32 %s384, 1
        %s3166 = scalar_lea.sflag [#allocation3], %s3165
        %s3167 = sand.u32 %s384, 1
        %s3168 = smul.addr %s3167, 8
        %s3169 = scalar_lea.vmem [#allocation2], %s3168
        // Predicated region
        $region85: #{text_encoder_forward.1} parent=83 // pred_check
          %p3170 = pneg %p394
        $region86: #{text_encoder_forward.1} parent=83 // pred_check_branch
          %3172 = sbr.rel (%p3170) target = $region88
        $region87: #{text_encoder_forward.1} parent=83 // pred_region
          %s3174 = ssub.s32 128, 128
          %3175 = vsyncadd %s3166, %s3174
          %s3176 = smul.addr %s30, 128
          %s3177 = scalar_lea.hbm %s16, %s3176
          %s3179 = sshll.u32 %s3169, 4
          %s3180 = int_to_ptr.vmem [resolvable:$true] %s3179
          %3182 = dma.vmem_to_hbm [thread:$0]  %s3180, 128, %s3177, %s3166
        $region88: #{text_encoder_forward.1} parent=83 // pred_fallthru
          _
      $region84: #{text_encoder_forward.1} parent=5 // pred_fallthru
        _
      %p3183 = scmp.le.s32.totalorder 2, %s25
      // Predicated region
      $region89: #{text_encoder_forward.1} parent=5 // pred_check
        %p3184 = pneg %p3183
      $region90: #{text_encoder_forward.1} parent=5 // pred_check_branch
        %3186 = sbr.rel (%p3184) target = $region92
      $region91: #{text_encoder_forward.1} parent=5 // pred_region
        %s3187 = ssub.s32 %s25, 2
        // Predicated region
        $region93: #{text_encoder_forward.1} parent=91 // pred_check
          %p3188 = pneg %p400
        $region94: #{text_encoder_forward.1} parent=91 // pred_check_branch
          %3190 = sbr.rel (%p3188) target = $region96
        $region95: #{text_encoder_forward.1} parent=91 // pred_region
          %s3191 = sand.u32 %s385, 1
          %s3192 = scalar_lea.sflag [#allocation3], %s3191
          %s3193 = sand.u32 %s385, 1
          %s3194 = smul.addr %s3193, 8
          %s3195 = scalar_lea.vmem [#allocation2], %s3194
          %3196 = dma.done %s3192, 128
        $region96: #{text_encoder_forward.1} parent=91 // pred_fallthru
          _
      $region92: #{text_encoder_forward.1} parent=5 // pred_fallthru
        _
    $region6: #{text_encoder_forward.1} parent=1 // loop_footer
      %s29 = sadd.s32 1, %s25
    $region7: #{text_encoder_forward.1} parent=1 // loop_footer_branch
      %24 = sbr.rel target = $region3
    $region8: #{text_encoder_forward.1} parent=1 // loop_exit
      _
    %3197 = vsyncpa [#allocation3], 1
    %s3198 = scalar_lea.sflag [#allocation3], 1
    %3199 = vsyncpa %s3198, 1

</llo_original>
